<compile_context>
chip_gen: v6e
topology: v6e:2x2x1
jax: 0.10.0
libtpu: 0.0.40
codegen_flags: <defaults>
</compile_context>

<pallas_src>
import math
import functools

import jax
import jax.numpy as jnp
from jax.experimental import pallas as pl
from jax.experimental.pallas import tpu as pltpu

N_HEAD = 4
EPS = 1e-5


def _layer_norm_f32(v, w):
    # F.layer_norm with bias=None (biased variance, eps inside sqrt), f32 stats.
    mu = jnp.mean(v, axis=-1, keepdims=True)
    d = v - mu
    var = jnp.mean(d * d, axis=-1, keepdims=True)
    return d * jax.lax.rsqrt(var + EPS) * w


def conditioned_block_kernel(
    x_ref, mod_ref,
    ln1_w_ref, ln2_w_ref,
    w_qkv_ref, b_qkv_ref, wo_ref,
    w1_ref, w2_ref,
    o_ref,
    *, n_head, approx_gelu,
):
    bb, t, d = x_ref.shape
    hd = d // n_head
    rows = bb * t
    inv_sqrt_hd = 1.0 / math.sqrt(hd)
    cdt = w_qkv_ref.dtype                    # MXU compute dtype (bf16)

    x = x_ref[...].astype(jnp.float32)       # (Bb, T, D) residual stream, f32
    mod = mod_ref[...]                       # (Bb, 6, D) precomputed AdaLN (f32)

    # 6 modulation chunks selected along the sublane axis (cheap).
    shift_msa = mod[:, 0:1, :]
    scale_msa = mod[:, 1:2, :]
    gate_msa = mod[:, 2:3, :]
    shift_mlp = mod[:, 3:4, :]
    scale_mlp = mod[:, 4:5, :]
    gate_mlp = mod[:, 5:6, :]

    ln1_w = ln1_w_ref[...].astype(jnp.float32)   # (1, D)
    ln2_w = ln2_w_ref[...].astype(jnp.float32)

    # ---------- MSA branch: x + gate * attn(modulate(LN1(x))) ----------
    h = _layer_norm_f32(x.reshape(rows, d), ln1_w).reshape(bb, t, d)
    xa = shift_msa + h * scale_msa                      # modulate()
    xa_lo = xa.reshape(rows, d).astype(cdt)

    # Fused QKV projection: single MXU push against the (D, 3D) weight.
    qkv = (jnp.dot(xa_lo, w_qkv_ref[...], preferred_element_type=jnp.float32)
           + b_qkv_ref[...])                            # (rows, 3D) f32

    # Hoisted casts (and softmax scale folded into q) -- done once, not per head.
    q = (qkv[:, 0 * d:1 * d] * inv_sqrt_hd).astype(cdt).reshape(bb, t, d)
    k = qkv[:, 1 * d:2 * d].astype(cdt).reshape(bb, t, d)
    v = qkv[:, 2 * d:3 * d].astype(cdt).reshape(bb, t, d)

    ys = []
    for hh in range(n_head):                            # static unroll over heads
        sl = slice(hh * hd, (hh + 1) * hd)
        # Batched over Bb; contraction on the last dim (no explicit transpose).
        s = jnp.einsum("bqd,bkd->bqk", q[:, :, sl], k[:, :, sl],
                       preferred_element_type=jnp.float32)
        s = s - jnp.max(s, axis=-1, keepdims=True)      # stable softmax, f32 stats
        p = jnp.exp(s)
        p = p * pl.reciprocal(jnp.sum(p, axis=-1, keepdims=True), approx=True)
        ys.append(jnp.einsum("bqk,bkd->bqd", p.astype(cdt), v[:, :, sl],
                             preferred_element_type=jnp.float32))  # (Bb, T, hd)

    # Lane-concat the head outputs, then ONE full-K output projection.
    y = jnp.concatenate(ys, axis=-1).reshape(rows, d)   # (rows, D) f32
    attn_out = jnp.dot(y.astype(wo_ref.dtype), wo_ref[...],
                       preferred_element_type=jnp.float32)

    x = x + gate_msa * attn_out.reshape(bb, t, d)

    # ---------- MLP branch: x + gate * MLP(modulate(LN2(x))) ----------
    h2 = _layer_norm_f32(x.reshape(rows, d), ln2_w).reshape(bb, t, d)
    xm = (shift_mlp + h2 * scale_mlp).reshape(rows, d).astype(w1_ref.dtype)

    h1 = jnp.dot(xm, w1_ref[...], preferred_element_type=jnp.float32)  # (rows, 4D)
    if approx_gelu:
        # tanh approximation -> EUP slot (otherwise idle); changes numerics.
        c0 = math.sqrt(2.0 / math.pi)
        h1 = 0.5 * h1 * (1.0 + jnp.tanh(c0 * (h1 + 0.044715 * h1 * h1 * h1)))
    else:
        # exact (erf) GELU to match torch.nn.GELU() default; f32 elementwise path
        h1 = 0.5 * h1 * (1.0 + jax.lax.erf(h1 * (1.0 / math.sqrt(2.0))))
    mlp_out = jnp.dot(h1.astype(w2_ref.dtype), w2_ref[...],
                      preferred_element_type=jnp.float32)              # (rows, D)

    o = x + gate_mlp * mlp_out.reshape(bb, t, d)
    o_ref[...] = o.astype(o_ref.dtype)


def prepare_weights(params, compute_dtype=jnp.bfloat16):
    """One-time weight preprocessing (call once at parameter-load, not per forward)."""
    f32 = jnp.float32
    return {
        "w_ada": params["w_ada"].astype(f32),
        "b_ada": params["b_ada"].astype(f32),
        "ln1_w": params["ln1_w"].astype(f32),
        "ln2_w": params["ln2_w"].astype(f32),
        "w_qkv": jnp.concatenate([params["wq"], params["wk"], params["wv"]],
                                 axis=1).astype(compute_dtype),   # (D, 3D)
        "b_qkv": jnp.concatenate([params["bq"], params["bk"], params["bv"]],
                                 axis=1).astype(f32),             # (1, 3D)
        "wo": params["wo"].astype(compute_dtype),
        "w1": params["w1"].astype(compute_dtype),
        "w2": params["w2"].astype(compute_dtype),
    }


def conditioned_block(x, c, prep, *, n_head=N_HEAD, block_b=None,
                      approx_gelu=False, single_buffer_weights=False,
                      vmem_limit_bytes=32 * 1024 * 1024):
    B, T, D = x.shape
    assert D % n_head == 0
    out_dtype = x.dtype
    f32 = jnp.float32

    # Rows per grid step: aim for >= 256 rows (fills the 2x256 MXU on v6e/v7x and
    # the 4x128 MXU on v5e, and amortizes per-step grid overhead) while keeping
    # extra grid steps available for megacore sharding when the batch is large.
    # At tiny shapes this collapses to the whole batch (grid = 1).
    if block_b is None or B % block_b != 0:
        block_b = B
        for cand in range(1, B + 1):
            if B % cand == 0 and cand * T >= 256:
                block_b = cand
                break

    # ---- AdaLN modulation hoisted out of the kernel (one batched XLA matmul;
    #      keeps the 6*D^2 weight out of VMEM and off the per-step critical path).
    c2 = c.reshape(B, D).astype(f32)
    c_act = c2 * jax.nn.sigmoid(c2)                             # SiLU
    mod = (c_act @ prep["w_ada"] + prep["b_ada"]).reshape(B, 6, D)   # chunk(6)

    weights = [
        prep["ln1_w"], prep["ln2_w"],
        prep["w_qkv"], prep["b_qkv"], prep["wo"],
        prep["w1"], prep["w2"],
    ]

    # Weights never change across grid steps (constant index_map). On v7x
    # (64 MiB VMEM) single-buffer them to halve their footprint.
    def weight_spec(w):
        if single_buffer_weights:
            return pl.BlockSpec(w.shape, lambda b: (0, 0),
                                pipeline_mode=pl.Buffered(1))
        return pl.BlockSpec(w.shape, lambda b: (0, 0))

    in_specs = [
        pl.BlockSpec((block_b, T, D), lambda b: (b, 0, 0)),      # x (f32 residual)
        pl.BlockSpec((block_b, 6, D), lambda b: (b, 0, 0)),      # precomputed AdaLN
    ]
    in_specs += [weight_spec(w) for w in weights]

    kernel = functools.partial(conditioned_block_kernel,
                               n_head=n_head, approx_gelu=approx_gelu)
    return pl.pallas_call(
        kernel,
        out_shape=jax.ShapeDtypeStruct((B, T, D), out_dtype),
        grid_spec=pltpu.PrefetchScalarGridSpec(
            num_scalar_prefetch=0,
            grid=(B // block_b,),
            in_specs=in_specs,
            out_specs=pl.BlockSpec((block_b, T, D), lambda b: (b, 0, 0)),
        ),
        compiler_params=pltpu.CompilerParams(
            dimension_semantics=("parallel",),
            vmem_limit_bytes=vmem_limit_bytes,
        ),
    )(x, mod, *weights)


# ---------------- pure-JAX reference (f32, for validation only) ----------------
def ref_forward(x, c, p):
    def ln(v, w):
        mu = v.mean(-1, keepdims=True)
        var = ((v - mu) ** 2).mean(-1, keepdims=True)
        return (v - mu) / jnp.sqrt(var + EPS) * w

    B, T, D = x.shape
    hd = D // N_HEAD
    c_act = c * jax.nn.sigmoid(c)
    mod = c_act @ p["w_ada"] + p["b_ada"]
    (shift_msa, scale_msa, gate_msa,
     shift_mlp, scale_mlp, gate_mlp) = jnp.split(mod, 6, axis=-1)

    xa = shift_msa + ln(x, p["ln1_w"]) * scale_msa
    q = (xa @ p["wq"] + p["bq"]).reshape(B, T, N_HEAD, hd).transpose(0, 2, 1, 3)
    k = (xa @ p["wk"] + p["bk"]).reshape(B, T, N_HEAD, hd).transpose(0, 2, 1, 3)
    v = (xa @ p["wv"] + p["bv"]).reshape(B, T, N_HEAD, hd).transpose(0, 2, 1, 3)
    s = jnp.einsum("bhqd,bhkd->bhqk", q, k) / math.sqrt(hd)
    pr = jax.nn.softmax(s, axis=-1)
    y = jnp.einsum("bhqk,bhkd->bhqd", pr, v).transpose(0, 2, 1, 3).reshape(B, T, D)
    y = y @ p["wo"]
    x = x + gate_msa * y

    xm = shift_mlp + ln(x, p["ln2_w"]) * scale_mlp
    h1 = xm @ p["w1"]
    h1 = 0.5 * h1 * (1.0 + jax.lax.erf(h1 / math.sqrt(2.0)))
    return x + gate_mlp * (h1 @ p["w2"])


def init_params(key, D):
    ks = jax.random.split(key, 12)
    n = lambda k, shape, s=0.02: (s * jax.random.normal(k, shape)).astype(jnp.float32)
    return {
        "w_ada": n(ks[0], (D, 6 * D)),
        "b_ada": n(ks[1], (1, 6 * D)),
        "ln1_w": jnp.ones((1, D), jnp.float32),
        "ln2_w": jnp.ones((1, D), jnp.float32),
        "wq": n(ks[2], (D, D)), "bq": n(ks[3], (1, D)),
        "wk": n(ks[4], (D, D)), "bk": n(ks[5], (1, D)),
        "wv": n(ks[6], (D, D)), "bv": n(ks[7], (1, D)),
        "wo": n(ks[8], (D, D)),
        "w1": n(ks[9], (D, 4 * D)),
        "w2": n(ks[10], (4 * D, D)),
    }


if __name__ == "__main__":
    # batch=4, seq=8, n_embd=128 (= film_cond_dim); 4 heads of dim 32.
    # D = 128 keeps the residual stream lane-dense (full-width stores).
    B, T, D = 4, 8, 128
    key = jax.random.PRNGKey(0)
    kx, kc, kp = jax.random.split(key, 3)
    x = jax.random.normal(kx, (B, T, D), dtype=jnp.float32)
    c = jax.random.normal(kc, (B, 1, D), dtype=jnp.float32)
    params = init_params(kp, D)

    # One-time weight preprocessing (QKV fuse, casts) -- cached across forwards.
    prep = prepare_weights(params)

    out = jax.block_until_ready(conditioned_block(x, c, prep))
    ref = jax.block_until_ready(ref_forward(x, c, params))

    assert out.shape == (B, T, D)
    err = float(jnp.max(jnp.abs(out - ref)))
    # f32 residual stream; only MXU operands are bf16 -> tight tolerance.
    assert jnp.allclose(out, ref, atol=1e-2, rtol=1e-2), err
    print("KERNEL_OK")
</pallas_src>

<mosaic_0001>
module attributes {stable_mosaic.version = 11 : i64} {
  func.func @conditioned_block_kernel(%arg0: i32, %arg1: memref<4x8x128xf32, #tpu.memory_space<vmem>>, %arg2: memref<4x6x128xf32, #tpu.memory_space<vmem>>, %arg3: memref<1x128xf32, #tpu.memory_space<vmem>>, %arg4: memref<1x128xf32, #tpu.memory_space<vmem>>, %arg5: memref<128x384xbf16, #tpu.memory_space<vmem>>, %arg6: memref<1x384xf32, #tpu.memory_space<vmem>>, %arg7: memref<128x128xbf16, #tpu.memory_space<vmem>>, %arg8: memref<128x512xbf16, #tpu.memory_space<vmem>>, %arg9: memref<512x128xbf16, #tpu.memory_space<vmem>>, %arg10: memref<4x8x128xf32, #tpu.memory_space<vmem>>) attributes {dimension_semantics = [#tpu.dimension_semantics<parallel>], iteration_bounds = array<i64: 1>, scalar_prefetch = 0 : i64, scratch_operands = 0 : i64, tpu.core_type = #tpu.core_type<tc>, window_params = [{transform_indices = @transform_0, window_bounds = array<i64: 4, 8, 128>}, {transform_indices = @transform_1, window_bounds = array<i64: 4, 6, 128>}, {pipeline_mode = #tpu.pipeline_mode<synchronous>, transform_indices = @transform_2, window_bounds = array<i64: 1, 128>}, {pipeline_mode = #tpu.pipeline_mode<synchronous>, transform_indices = @transform_3, window_bounds = array<i64: 1, 128>}, {pipeline_mode = #tpu.pipeline_mode<synchronous>, transform_indices = @transform_4, window_bounds = array<i64: 128, 384>}, {pipeline_mode = #tpu.pipeline_mode<synchronous>, transform_indices = @transform_5, window_bounds = array<i64: 1, 384>}, {pipeline_mode = #tpu.pipeline_mode<synchronous>, transform_indices = @transform_6, window_bounds = array<i64: 128, 128>}, {pipeline_mode = #tpu.pipeline_mode<synchronous>, transform_indices = @transform_7, window_bounds = array<i64: 128, 512>}, {pipeline_mode = #tpu.pipeline_mode<synchronous>, transform_indices = @transform_8, window_bounds = array<i64: 512, 128>}, {transform_indices = @transform_9, window_bounds = array<i64: 4, 8, 128>}]} {
    %c0 = arith.constant 0 : index
    %c0_0 = arith.constant 0 : index
    %c0_1 = arith.constant 0 : index
    %0 = vector.load %arg1[%c0, %c0_0, %c0_1] : memref<4x8x128xf32, #tpu.memory_space<vmem>>, vector<4x8x128xf32>
    %c0_2 = arith.constant 0 : index
    %c0_3 = arith.constant 0 : index
    %c0_4 = arith.constant 0 : index
    %1 = vector.load %arg2[%c0_2, %c0_3, %c0_4] : memref<4x6x128xf32, #tpu.memory_space<vmem>>, vector<4x6x128xf32>
    %2 = vector.extract_strided_slice %1 {offsets = [0, 0, 0], sizes = [4, 1, 128], strides = [1, 1, 1]} : vector<4x6x128xf32> to vector<4x1x128xf32>
    %3 = vector.extract_strided_slice %1 {offsets = [0, 1, 0], sizes = [4, 1, 128], strides = [1, 1, 1]} : vector<4x6x128xf32> to vector<4x1x128xf32>
    %4 = vector.extract_strided_slice %1 {offsets = [0, 2, 0], sizes = [4, 1, 128], strides = [1, 1, 1]} : vector<4x6x128xf32> to vector<4x1x128xf32>
    %5 = vector.extract_strided_slice %1 {offsets = [0, 3, 0], sizes = [4, 1, 128], strides = [1, 1, 1]} : vector<4x6x128xf32> to vector<4x1x128xf32>
    %6 = vector.extract_strided_slice %1 {offsets = [0, 4, 0], sizes = [4, 1, 128], strides = [1, 1, 1]} : vector<4x6x128xf32> to vector<4x1x128xf32>
    %7 = vector.extract_strided_slice %1 {offsets = [0, 5, 0], sizes = [4, 1, 128], strides = [1, 1, 1]} : vector<4x6x128xf32> to vector<4x1x128xf32>
    %c0_5 = arith.constant 0 : index
    %c0_6 = arith.constant 0 : index
    %8 = vector.load %arg3[%c0_5, %c0_6] : memref<1x128xf32, #tpu.memory_space<vmem>>, vector<1x128xf32>
    %c0_7 = arith.constant 0 : index
    %c0_8 = arith.constant 0 : index
    %9 = vector.load %arg4[%c0_7, %c0_8] : memref<1x128xf32, #tpu.memory_space<vmem>>, vector<1x128xf32>
    %10 = vector.shape_cast %0 : vector<4x8x128xf32> to vector<32x128xf32>
    %cst = arith.constant dense<0.000000e+00> : vector<32xf32>
    %11 = vector.multi_reduction <add>, %10, %cst [1] : vector<32x128xf32> to vector<32xf32>
    %12 = vector.shape_cast %11 : vector<32xf32> to vector<32x1xf32>
    %cst_9 = arith.constant 1.280000e+02 : f32
    %13 = vector.broadcast %cst_9 : f32 to vector<32x1xf32>
    %14 = arith.divf %12, %13 : vector<32x1xf32>
    %15 = vector.broadcast %14 : vector<32x1xf32> to vector<32x128xf32>
    %16 = arith.subf %10, %15 : vector<32x128xf32>
    %17 = arith.mulf %16, %16 : vector<32x128xf32>
    %cst_10 = arith.constant dense<0.000000e+00> : vector<32xf32>
    %18 = vector.multi_reduction <add>, %17, %cst_10 [1] : vector<32x128xf32> to vector<32xf32>
    %19 = vector.shape_cast %18 : vector<32xf32> to vector<32x1xf32>
    %cst_11 = arith.constant 1.280000e+02 : f32
    %20 = vector.broadcast %cst_11 : f32 to vector<32x1xf32>
    %21 = arith.divf %19, %20 : vector<32x1xf32>
    %cst_12 = arith.constant 9.99999974E-6 : f32
    %22 = vector.broadcast %cst_12 : f32 to vector<32x1xf32>
    %23 = arith.addf %21, %22 : vector<32x1xf32>
    %24 = math.rsqrt %23 : vector<32x1xf32>
    %25 = vector.broadcast %24 : vector<32x1xf32> to vector<32x128xf32>
    %26 = arith.mulf %16, %25 : vector<32x128xf32>
    %27 = vector.broadcast %8 : vector<1x128xf32> to vector<32x128xf32>
    %28 = arith.mulf %26, %27 : vector<32x128xf32>
    %29 = vector.shape_cast %28 : vector<32x128xf32> to vector<4x8x128xf32>
    %30 = vector.broadcast %3 : vector<4x1x128xf32> to vector<4x8x128xf32>
    %31 = arith.mulf %29, %30 : vector<4x8x128xf32>
    %32 = vector.broadcast %2 : vector<4x1x128xf32> to vector<4x8x128xf32>
    %33 = arith.addf %32, %31 : vector<4x8x128xf32>
    %34 = vector.shape_cast %33 : vector<4x8x128xf32> to vector<32x128xf32>
    %35 = arith.truncf %34 : vector<32x128xf32> to vector<32x128xbf16>
    %c0_13 = arith.constant 0 : index
    %c0_14 = arith.constant 0 : index
    %36 = vector.load %arg5[%c0_13, %c0_14] : memref<128x384xbf16, #tpu.memory_space<vmem>>, vector<128x384xbf16>
    %cst_15 = arith.constant dense<0.000000e+00> : vector<32x384xf32>
    %37 = tpu.matmul %35, %36, %cst_15 {dimension_numbers = #tpu.dot_dimension_numbers<[1], [0], [0], [1], [0, 0, 1, 1], [], []>} : vector<32x128xbf16>, vector<128x384xbf16>, vector<32x384xf32> -> vector<32x384xf32>
    %c0_16 = arith.constant 0 : index
    %c0_17 = arith.constant 0 : index
    %38 = vector.load %arg6[%c0_16, %c0_17] : memref<1x384xf32, #tpu.memory_space<vmem>>, vector<1x384xf32>
    %39 = vector.broadcast %38 : vector<1x384xf32> to vector<32x384xf32>
    %40 = arith.addf %37, %39 : vector<32x384xf32>
    %41 = vector.extract_strided_slice %40 {offsets = [0, 0], sizes = [32, 128], strides = [1, 1]} : vector<32x384xf32> to vector<32x128xf32>
    %cst_18 = arith.constant 0.176776692 : f32
    %42 = vector.broadcast %cst_18 : f32 to vector<32x128xf32>
    %43 = arith.mulf %41, %42 : vector<32x128xf32>
    %44 = arith.truncf %43 : vector<32x128xf32> to vector<32x128xbf16>
    %45 = vector.shape_cast %44 : vector<32x128xbf16> to vector<4x8x128xbf16>
    %46 = vector.extract_strided_slice %40 {offsets = [0, 128], sizes = [32, 128], strides = [1, 1]} : vector<32x384xf32> to vector<32x128xf32>
    %47 = arith.truncf %46 : vector<32x128xf32> to vector<32x128xbf16>
    %48 = vector.shape_cast %47 : vector<32x128xbf16> to vector<4x8x128xbf16>
    %49 = vector.extract_strided_slice %40 {offsets = [0, 256], sizes = [32, 128], strides = [1, 1]} : vector<32x384xf32> to vector<32x128xf32>
    %50 = arith.truncf %49 : vector<32x128xf32> to vector<32x128xbf16>
    %51 = vector.shape_cast %50 : vector<32x128xbf16> to vector<4x8x128xbf16>
    %52 = vector.extract_strided_slice %45 {offsets = [0, 0, 0], sizes = [4, 8, 32], strides = [1, 1, 1]} : vector<4x8x128xbf16> to vector<4x8x32xbf16>
    %53 = vector.extract_strided_slice %48 {offsets = [0, 0, 0], sizes = [4, 8, 32], strides = [1, 1, 1]} : vector<4x8x128xbf16> to vector<4x8x32xbf16>
    "tpu.trace_start"() <{level = 10 : i32, message = "bqd,bkd->bqk"}> : () -> ()
    %cst_19 = arith.constant dense<0.000000e+00> : vector<4x8x8xf32>
    %54 = tpu.matmul %52, %53, %cst_19 {dimension_numbers = #tpu.dot_dimension_numbers<[2], [2], [1], [1], [0, 0, 0, 1, 1, 1], [0], [0]>} : vector<4x8x32xbf16>, vector<4x8x32xbf16>, vector<4x8x8xf32> -> vector<4x8x8xf32>
    "tpu.trace_stop"() : () -> ()
    %cst_20 = arith.constant dense<0xFF800000> : vector<4x8xf32>
    %55 = vector.multi_reduction <maximumf>, %54, %cst_20 [2] : vector<4x8x8xf32> to vector<4x8xf32>
    %56 = vector.shape_cast %55 : vector<4x8xf32> to vector<4x8x1xf32>
    %57 = vector.broadcast %56 : vector<4x8x1xf32> to vector<4x8x8xf32>
    %58 = arith.subf %54, %57 : vector<4x8x8xf32>
    %59 = math.exp %58 : vector<4x8x8xf32>
    %cst_21 = arith.constant dense<0.000000e+00> : vector<4x8xf32>
    %60 = vector.multi_reduction <add>, %59, %cst_21 [2] : vector<4x8x8xf32> to vector<4x8xf32>
    %61 = vector.shape_cast %60 : vector<4x8xf32> to vector<4x8x1xf32>
    %62 = tpu.reciprocal %61 {approx = true} : vector<4x8x1xf32> -> vector<4x8x1xf32>
    %63 = vector.broadcast %62 : vector<4x8x1xf32> to vector<4x8x8xf32>
    %64 = arith.mulf %59, %63 : vector<4x8x8xf32>
    %65 = arith.truncf %64 : vector<4x8x8xf32> to vector<4x8x8xbf16>
    %66 = vector.extract_strided_slice %51 {offsets = [0, 0, 0], sizes = [4, 8, 32], strides = [1, 1, 1]} : vector<4x8x128xbf16> to vector<4x8x32xbf16>
    "tpu.trace_start"() <{level = 10 : i32, message = "bqk,bkd->bqd"}> : () -> ()
    %cst_22 = arith.constant dense<0.000000e+00> : vector<4x8x32xf32>
    %67 = tpu.matmul %65, %66, %cst_22 {dimension_numbers = #tpu.dot_dimension_numbers<[2], [1], [1], [2], [0, 0, 0, 1, 1, 2], [0], [0]>} : vector<4x8x8xbf16>, vector<4x8x32xbf16>, vector<4x8x32xf32> -> vector<4x8x32xf32>
    "tpu.trace_stop"() : () -> ()
    %68 = vector.extract_strided_slice %45 {offsets = [0, 0, 32], sizes = [4, 8, 32], strides = [1, 1, 1]} : vector<4x8x128xbf16> to vector<4x8x32xbf16>
    %69 = vector.extract_strided_slice %48 {offsets = [0, 0, 32], sizes = [4, 8, 32], strides = [1, 1, 1]} : vector<4x8x128xbf16> to vector<4x8x32xbf16>
    "tpu.trace_start"() <{level = 10 : i32, message = "bqd,bkd->bqk"}> : () -> ()
    %cst_23 = arith.constant dense<0.000000e+00> : vector<4x8x8xf32>
    %70 = tpu.matmul %68, %69, %cst_23 {dimension_numbers = #tpu.dot_dimension_numbers<[2], [2], [1], [1], [0, 0, 0, 1, 1, 1], [0], [0]>} : vector<4x8x32xbf16>, vector<4x8x32xbf16>, vector<4x8x8xf32> -> vector<4x8x8xf32>
    "tpu.trace_stop"() : () -> ()
    %cst_24 = arith.constant dense<0xFF800000> : vector<4x8xf32>
    %71 = vector.multi_reduction <maximumf>, %70, %cst_24 [2] : vector<4x8x8xf32> to vector<4x8xf32>
    %72 = vector.shape_cast %71 : vector<4x8xf32> to vector<4x8x1xf32>
    %73 = vector.broadcast %72 : vector<4x8x1xf32> to vector<4x8x8xf32>
    %74 = arith.subf %70, %73 : vector<4x8x8xf32>
    %75 = math.exp %74 : vector<4x8x8xf32>
    %cst_25 = arith.constant dense<0.000000e+00> : vector<4x8xf32>
    %76 = vector.multi_reduction <add>, %75, %cst_25 [2] : vector<4x8x8xf32> to vector<4x8xf32>
    %77 = vector.shape_cast %76 : vector<4x8xf32> to vector<4x8x1xf32>
    %78 = tpu.reciprocal %77 {approx = true} : vector<4x8x1xf32> -> vector<4x8x1xf32>
    %79 = vector.broadcast %78 : vector<4x8x1xf32> to vector<4x8x8xf32>
    %80 = arith.mulf %75, %79 : vector<4x8x8xf32>
    %81 = arith.truncf %80 : vector<4x8x8xf32> to vector<4x8x8xbf16>
    %82 = vector.extract_strided_slice %51 {offsets = [0, 0, 32], sizes = [4, 8, 32], strides = [1, 1, 1]} : vector<4x8x128xbf16> to vector<4x8x32xbf16>
    "tpu.trace_start"() <{level = 10 : i32, message = "bqk,bkd->bqd"}> : () -> ()
    %cst_26 = arith.constant dense<0.000000e+00> : vector<4x8x32xf32>
    %83 = tpu.matmul %81, %82, %cst_26 {dimension_numbers = #tpu.dot_dimension_numbers<[2], [1], [1], [2], [0, 0, 0, 1, 1, 2], [0], [0]>} : vector<4x8x8xbf16>, vector<4x8x32xbf16>, vector<4x8x32xf32> -> vector<4x8x32xf32>
    "tpu.trace_stop"() : () -> ()
    %84 = vector.extract_strided_slice %45 {offsets = [0, 0, 64], sizes = [4, 8, 32], strides = [1, 1, 1]} : vector<4x8x128xbf16> to vector<4x8x32xbf16>
    %85 = vector.extract_strided_slice %48 {offsets = [0, 0, 64], sizes = [4, 8, 32], strides = [1, 1, 1]} : vector<4x8x128xbf16> to vector<4x8x32xbf16>
    "tpu.trace_start"() <{level = 10 : i32, message = "bqd,bkd->bqk"}> : () -> ()
    %cst_27 = arith.constant dense<0.000000e+00> : vector<4x8x8xf32>
    %86 = tpu.matmul %84, %85, %cst_27 {dimension_numbers = #tpu.dot_dimension_numbers<[2], [2], [1], [1], [0, 0, 0, 1, 1, 1], [0], [0]>} : vector<4x8x32xbf16>, vector<4x8x32xbf16>, vector<4x8x8xf32> -> vector<4x8x8xf32>
    "tpu.trace_stop"() : () -> ()
    %cst_28 = arith.constant dense<0xFF800000> : vector<4x8xf32>
    %87 = vector.multi_reduction <maximumf>, %86, %cst_28 [2] : vector<4x8x8xf32> to vector<4x8xf32>
    %88 = vector.shape_cast %87 : vector<4x8xf32> to vector<4x8x1xf32>
    %89 = vector.broadcast %88 : vector<4x8x1xf32> to vector<4x8x8xf32>
    %90 = arith.subf %86, %89 : vector<4x8x8xf32>
    %91 = math.exp %90 : vector<4x8x8xf32>
    %cst_29 = arith.constant dense<0.000000e+00> : vector<4x8xf32>
    %92 = vector.multi_reduction <add>, %91, %cst_29 [2] : vector<4x8x8xf32> to vector<4x8xf32>
    %93 = vector.shape_cast %92 : vector<4x8xf32> to vector<4x8x1xf32>
    %94 = tpu.reciprocal %93 {approx = true} : vector<4x8x1xf32> -> vector<4x8x1xf32>
    %95 = vector.broadcast %94 : vector<4x8x1xf32> to vector<4x8x8xf32>
    %96 = arith.mulf %91, %95 : vector<4x8x8xf32>
    %97 = arith.truncf %96 : vector<4x8x8xf32> to vector<4x8x8xbf16>
    %98 = vector.extract_strided_slice %51 {offsets = [0, 0, 64], sizes = [4, 8, 32], strides = [1, 1, 1]} : vector<4x8x128xbf16> to vector<4x8x32xbf16>
    "tpu.trace_start"() <{level = 10 : i32, message = "bqk,bkd->bqd"}> : () -> ()
    %cst_30 = arith.constant dense<0.000000e+00> : vector<4x8x32xf32>
    %99 = tpu.matmul %97, %98, %cst_30 {dimension_numbers = #tpu.dot_dimension_numbers<[2], [1], [1], [2], [0, 0, 0, 1, 1, 2], [0], [0]>} : vector<4x8x8xbf16>, vector<4x8x32xbf16>, vector<4x8x32xf32> -> vector<4x8x32xf32>
    "tpu.trace_stop"() : () -> ()
    %100 = vector.extract_strided_slice %45 {offsets = [0, 0, 96], sizes = [4, 8, 32], strides = [1, 1, 1]} : vector<4x8x128xbf16> to vector<4x8x32xbf16>
    %101 = vector.extract_strided_slice %48 {offsets = [0, 0, 96], sizes = [4, 8, 32], strides = [1, 1, 1]} : vector<4x8x128xbf16> to vector<4x8x32xbf16>
    "tpu.trace_start"() <{level = 10 : i32, message = "bqd,bkd->bqk"}> : () -> ()
    %cst_31 = arith.constant dense<0.000000e+00> : vector<4x8x8xf32>
    %102 = tpu.matmul %100, %101, %cst_31 {dimension_numbers = #tpu.dot_dimension_numbers<[2], [2], [1], [1], [0, 0, 0, 1, 1, 1], [0], [0]>} : vector<4x8x32xbf16>, vector<4x8x32xbf16>, vector<4x8x8xf32> -> vector<4x8x8xf32>
    "tpu.trace_stop"() : () -> ()
    %cst_32 = arith.constant dense<0xFF800000> : vector<4x8xf32>
    %103 = vector.multi_reduction <maximumf>, %102, %cst_32 [2] : vector<4x8x8xf32> to vector<4x8xf32>
    %104 = vector.shape_cast %103 : vector<4x8xf32> to vector<4x8x1xf32>
    %105 = vector.broadcast %104 : vector<4x8x1xf32> to vector<4x8x8xf32>
    %106 = arith.subf %102, %105 : vector<4x8x8xf32>
    %107 = math.exp %106 : vector<4x8x8xf32>
    %cst_33 = arith.constant dense<0.000000e+00> : vector<4x8xf32>
    %108 = vector.multi_reduction <add>, %107, %cst_33 [2] : vector<4x8x8xf32> to vector<4x8xf32>
    %109 = vector.shape_cast %108 : vector<4x8xf32> to vector<4x8x1xf32>
    %110 = tpu.reciprocal %109 {approx = true} : vector<4x8x1xf32> -> vector<4x8x1xf32>
    %111 = vector.broadcast %110 : vector<4x8x1xf32> to vector<4x8x8xf32>
    %112 = arith.mulf %107, %111 : vector<4x8x8xf32>
    %113 = arith.truncf %112 : vector<4x8x8xf32> to vector<4x8x8xbf16>
    %114 = vector.extract_strided_slice %51 {offsets = [0, 0, 96], sizes = [4, 8, 32], strides = [1, 1, 1]} : vector<4x8x128xbf16> to vector<4x8x32xbf16>
    "tpu.trace_start"() <{level = 10 : i32, message = "bqk,bkd->bqd"}> : () -> ()
    %cst_34 = arith.constant dense<0.000000e+00> : vector<4x8x32xf32>
    %115 = tpu.matmul %113, %114, %cst_34 {dimension_numbers = #tpu.dot_dimension_numbers<[2], [1], [1], [2], [0, 0, 0, 1, 1, 2], [0], [0]>} : vector<4x8x8xbf16>, vector<4x8x32xbf16>, vector<4x8x32xf32> -> vector<4x8x32xf32>
    "tpu.trace_stop"() : () -> ()
    %116 = tpu.concatenate %67, %83, %99, %115 in 2 : vector<4x8x32xf32>, vector<4x8x32xf32>, vector<4x8x32xf32>, vector<4x8x32xf32> -> vector<4x8x128xf32>
    %117 = vector.shape_cast %116 : vector<4x8x128xf32> to vector<32x128xf32>
    %118 = arith.truncf %117 : vector<32x128xf32> to vector<32x128xbf16>
    %c0_35 = arith.constant 0 : index
    %c0_36 = arith.constant 0 : index
    %119 = vector.load %arg7[%c0_35, %c0_36] : memref<128x128xbf16, #tpu.memory_space<vmem>>, vector<128x128xbf16>
    %cst_37 = arith.constant dense<0.000000e+00> : vector<32x128xf32>
    %120 = tpu.matmul %118, %119, %cst_37 {dimension_numbers = #tpu.dot_dimension_numbers<[1], [0], [0], [1], [0, 0, 1, 1], [], []>} : vector<32x128xbf16>, vector<128x128xbf16>, vector<32x128xf32> -> vector<32x128xf32>
    %121 = vector.shape_cast %120 : vector<32x128xf32> to vector<4x8x128xf32>
    %122 = vector.broadcast %4 : vector<4x1x128xf32> to vector<4x8x128xf32>
    %123 = arith.mulf %122, %121 : vector<4x8x128xf32>
    %124 = arith.addf %0, %123 : vector<4x8x128xf32>
    %125 = vector.shape_cast %124 : vector<4x8x128xf32> to vector<32x128xf32>
    %cst_38 = arith.constant dense<0.000000e+00> : vector<32xf32>
    %126 = vector.multi_reduction <add>, %125, %cst_38 [1] : vector<32x128xf32> to vector<32xf32>
    %127 = vector.shape_cast %126 : vector<32xf32> to vector<32x1xf32>
    %cst_39 = arith.constant 1.280000e+02 : f32
    %128 = vector.broadcast %cst_39 : f32 to vector<32x1xf32>
    %129 = arith.divf %127, %128 : vector<32x1xf32>
    %130 = vector.broadcast %129 : vector<32x1xf32> to vector<32x128xf32>
    %131 = arith.subf %125, %130 : vector<32x128xf32>
    %132 = arith.mulf %131, %131 : vector<32x128xf32>
    %cst_40 = arith.constant dense<0.000000e+00> : vector<32xf32>
    %133 = vector.multi_reduction <add>, %132, %cst_40 [1] : vector<32x128xf32> to vector<32xf32>
    %134 = vector.shape_cast %133 : vector<32xf32> to vector<32x1xf32>
    %cst_41 = arith.constant 1.280000e+02 : f32
    %135 = vector.broadcast %cst_41 : f32 to vector<32x1xf32>
    %136 = arith.divf %134, %135 : vector<32x1xf32>
    %cst_42 = arith.constant 9.99999974E-6 : f32
    %137 = vector.broadcast %cst_42 : f32 to vector<32x1xf32>
    %138 = arith.addf %136, %137 : vector<32x1xf32>
    %139 = math.rsqrt %138 : vector<32x1xf32>
    %140 = vector.broadcast %139 : vector<32x1xf32> to vector<32x128xf32>
    %141 = arith.mulf %131, %140 : vector<32x128xf32>
    %142 = vector.broadcast %9 : vector<1x128xf32> to vector<32x128xf32>
    %143 = arith.mulf %141, %142 : vector<32x128xf32>
    %144 = vector.shape_cast %143 : vector<32x128xf32> to vector<4x8x128xf32>
    %145 = vector.broadcast %6 : vector<4x1x128xf32> to vector<4x8x128xf32>
    %146 = arith.mulf %144, %145 : vector<4x8x128xf32>
    %147 = vector.broadcast %5 : vector<4x1x128xf32> to vector<4x8x128xf32>
    %148 = arith.addf %147, %146 : vector<4x8x128xf32>
    %149 = vector.shape_cast %148 : vector<4x8x128xf32> to vector<32x128xf32>
    %150 = arith.truncf %149 : vector<32x128xf32> to vector<32x128xbf16>
    %c0_43 = arith.constant 0 : index
    %c0_44 = arith.constant 0 : index
    %151 = vector.load %arg8[%c0_43, %c0_44] : memref<128x512xbf16, #tpu.memory_space<vmem>>, vector<128x512xbf16>
    %cst_45 = arith.constant dense<0.000000e+00> : vector<32x512xf32>
    %152 = tpu.matmul %150, %151, %cst_45 {dimension_numbers = #tpu.dot_dimension_numbers<[1], [0], [0], [1], [0, 0, 1, 1], [], []>} : vector<32x128xbf16>, vector<128x512xbf16>, vector<32x512xf32> -> vector<32x512xf32>
    %cst_46 = arith.constant 5.000000e-01 : f32
    %153 = vector.broadcast %cst_46 : f32 to vector<32x512xf32>
    %154 = arith.mulf %153, %152 : vector<32x512xf32>
    %cst_47 = arith.constant 0.707106769 : f32
    %155 = vector.broadcast %cst_47 : f32 to vector<32x512xf32>
    %156 = arith.mulf %152, %155 : vector<32x512xf32>
    %157 = math.erf %156 : vector<32x512xf32>
    %cst_48 = arith.constant 1.000000e+00 : f32
    %158 = vector.broadcast %cst_48 : f32 to vector<32x512xf32>
    %159 = arith.addf %158, %157 : vector<32x512xf32>
    %160 = arith.mulf %154, %159 : vector<32x512xf32>
    %161 = arith.truncf %160 : vector<32x512xf32> to vector<32x512xbf16>
    %c0_49 = arith.constant 0 : index
    %c0_50 = arith.constant 0 : index
    %162 = vector.load %arg9[%c0_49, %c0_50] : memref<512x128xbf16, #tpu.memory_space<vmem>>, vector<512x128xbf16>
    %cst_51 = arith.constant dense<0.000000e+00> : vector<32x128xf32>
    %163 = tpu.matmul %161, %162, %cst_51 {dimension_numbers = #tpu.dot_dimension_numbers<[1], [0], [0], [1], [0, 0, 1, 1], [], []>} : vector<32x512xbf16>, vector<512x128xbf16>, vector<32x128xf32> -> vector<32x128xf32>
    %164 = vector.shape_cast %163 : vector<32x128xf32> to vector<4x8x128xf32>
    %165 = vector.broadcast %7 : vector<4x1x128xf32> to vector<4x8x128xf32>
    %166 = arith.mulf %165, %164 : vector<4x8x128xf32>
    %167 = arith.addf %124, %166 : vector<4x8x128xf32>
    %c0_52 = arith.constant 0 : index
    %c0_53 = arith.constant 0 : index
    %c0_54 = arith.constant 0 : index
    %168 = vector.load %arg10[%c0_52, %c0_53, %c0_54] : memref<4x8x128xf32, #tpu.memory_space<vmem>>, vector<4x8x128xf32>
    tpu.vector_store %arg10[%c0_52, %c0_53, %c0_54], %167 {strides = array<i32>} : memref<4x8x128xf32, #tpu.memory_space<vmem>>, vector<4x8x128xf32>,
    return
  }
  func.func @transform_0(%arg0: i32) -> (i32, i32, i32) {
    %c0_i32 = arith.constant 0 : i32
    %c0_i32_0 = arith.constant 0 : i32
    %c0_i32_1 = arith.constant 0 : i32
    return %arg0, %c0_i32, %c0_i32_0 : i32, i32, i32
  }
  func.func @transform_1(%arg0: i32) -> (i32, i32, i32) {
    %c0_i32 = arith.constant 0 : i32
    %c0_i32_0 = arith.constant 0 : i32
    %c0_i32_1 = arith.constant 0 : i32
    return %arg0, %c0_i32, %c0_i32_0 : i32, i32, i32
  }
  func.func @transform_2(%arg0: i32) -> (i32, i32) {
    %c0_i32 = arith.constant 0 : i32
    %c0_i32_0 = arith.constant 0 : i32
    %c0_i32_1 = arith.constant 0 : i32
    return %c0_i32, %c0_i32_0 : i32, i32
  }
  func.func @transform_3(%arg0: i32) -> (i32, i32) {
    %c0_i32 = arith.constant 0 : i32
    %c0_i32_0 = arith.constant 0 : i32
    %c0_i32_1 = arith.constant 0 : i32
    return %c0_i32, %c0_i32_0 : i32, i32
  }
  func.func @transform_4(%arg0: i32) -> (i32, i32) {
    %c0_i32 = arith.constant 0 : i32
    %c0_i32_0 = arith.constant 0 : i32
    %c0_i32_1 = arith.constant 0 : i32
    return %c0_i32, %c0_i32_0 : i32, i32
  }
  func.func @transform_5(%arg0: i32) -> (i32, i32) {
    %c0_i32 = arith.constant 0 : i32
    %c0_i32_0 = arith.constant 0 : i32
    %c0_i32_1 = arith.constant 0 : i32
    return %c0_i32, %c0_i32_0 : i32, i32
  }
  func.func @transform_6(%arg0: i32) -> (i32, i32) {
    %c0_i32 = arith.constant 0 : i32
    %c0_i32_0 = arith.constant 0 : i32
    %c0_i32_1 = arith.constant 0 : i32
    return %c0_i32, %c0_i32_0 : i32, i32
  }
  func.func @transform_7(%arg0: i32) -> (i32, i32) {
    %c0_i32 = arith.constant 0 : i32
    %c0_i32_0 = arith.constant 0 : i32
    %c0_i32_1 = arith.constant 0 : i32
    return %c0_i32, %c0_i32_0 : i32, i32
  }
  func.func @transform_8(%arg0: i32) -> (i32, i32) {
    %c0_i32 = arith.constant 0 : i32
    %c0_i32_0 = arith.constant 0 : i32
    %c0_i32_1 = arith.constant 0 : i32
    return %c0_i32, %c0_i32_0 : i32, i32
  }
  func.func @transform_9(%arg0: i32) -> (i32, i32, i32) {
    %c0_i32 = arith.constant 0 : i32
    %c0_i32_0 = arith.constant 0 : i32
    %c0_i32_1 = arith.constant 0 : i32
    return %arg0, %c0_i32, %c0_i32_0 : i32, i32, i32
  }
}

</mosaic_0001>

<llo_original>
// kernel: tpu_custom_call.1
$region0: #{tpu_custom_call.1}
  #allocation0 [shape = 'u32[]', space=smem, size = 0x4, offset = 0x4, fixed_abs, tag = 'smem constant byte address 0x4 - core index']
  #allocation1 [shape = 'u32[144,128]{1,0:T(1,128)}', space=vmem, size = 0x12000, scoped, tag = 'internal scratch']
  %s0 = inlined_call_operand.hbm [shape: f32[4,8,128], index: 0, kind: input, shape index: {}]
  %s1 = inlined_call_operand.vmem [shape: f32[4,6,128], index: 1, kind: input, shape index: {}]
  %s2 = inlined_call_operand.vmem [shape: f32[1,128], index: 2, kind: input, shape index: {}]
  %s3 = inlined_call_operand.vmem [shape: f32[1,128], index: 3, kind: input, shape index: {}]
  %s4 = inlined_call_operand.hbm [shape: bf16[128,384], index: 4, kind: input, shape index: {}]
  %s5 = inlined_call_operand.hbm [shape: f32[1,384], index: 5, kind: input, shape index: {}]
  %s6 = inlined_call_operand.vmem [shape: bf16[128,128], index: 6, kind: input, shape index: {}]
  %s7 = inlined_call_operand.hbm [shape: bf16[128,512], index: 7, kind: input, shape index: {}]
  %s8 = inlined_call_operand.hbm [shape: bf16[512,128], index: 8, kind: input, shape index: {}]
  %s9 = inlined_call_operand.hbm [shape: f32[4,8,128], index: 9, kind: output, shape index: {}]
  %s10 = sld [smem:[#allocation0]]
  $region66: #{tpu_custom_call.1} parent=0
    _
  %s12 = ssub.s32 1, %s10
  %s13 = scalar_select 0, %s12, %s10
  $region1: #{tpu_custom_call.1} parent=0
    #allocation2 [shape = 'u8[16384]{0}', space=vmem, size = 0x4000, scoped, tag = 'input window, operand 0, single buffered']
    #allocation3 [shape = 's32[1]{0}', space=sflag, size = 0x4, scoped, tag = 'scoped memory for tpu_custom_call.1']
    #allocation4 [shape = 's32[1]{0}', space=sflag, size = 0x4, scoped, tag = 'scoped memory for tpu_custom_call.1']
    #allocation5 [shape = 'u8[98304]{0}', space=vmem, size = 0x18000, scoped, tag = 'input window, operand 4, single buffered']
    #allocation6 [shape = 's32[1]{0}', space=sflag, size = 0x4, scoped, tag = 'scoped memory for tpu_custom_call.1']
    #allocation7 [shape = 'u8[1536]{0}', space=vmem, size = 0x800, scoped, tag = 'input window, operand 5, single buffered']
    #allocation8 [shape = 'u8[131072]{0}', space=vmem, size = 0x20000, scoped, tag = 'input window, operand 7, single buffered']
    #allocation9 [shape = 's32[1]{0}', space=sflag, size = 0x4, scoped, tag = 'scoped memory for tpu_custom_call.1']
    #allocation10 [shape = 'u8[131072]{0}', space=vmem, size = 0x20000, scoped, tag = 'input window, operand 8, single buffered']
    #allocation11 [shape = 'u8[16384]{0}', space=vmem, size = 0x4000, scoped, tag = 'output window, operand 0, single buffered']
    %14 = vsyncpa [#allocation3], 0
    %15 = vsyncpa [#allocation6], 0
    %16 = vsyncpa [#allocation9], 0
    %17 = vsyncpa [#allocation4], 0
    // Predicated region
    $region2: #{tpu_custom_call.1} parent=1 // pred_check
      _
    $region3: #{tpu_custom_call.1} parent=1 // pred_check_branch
      %19 = sbr.rel (0) target = $region5
    $region4: #{tpu_custom_call.1} parent=1 // pred_region
      %s21 = ssub.s32 512, 512
      %22 = vsyncadd [#allocation3], %s21
      %s23 = sshll.u32 [#allocation2], 4
      %s24 = int_to_ptr.vmem [resolvable:$true] %s23
      %29 = dma.hbm_to_vmem [thread:$0]  %s0, 512, %s24, [#allocation3], 128, 128, 8
    $region5: #{tpu_custom_call.1} parent=1 // pred_fallthru
      _
    // Predicated region
    $region6: #{tpu_custom_call.1} parent=1 // pred_check
      _
    $region7: #{tpu_custom_call.1} parent=1 // pred_check_branch
      %31 = sbr.rel (0) target = $region9
    $region8: #{tpu_custom_call.1} parent=1 // pred_region
      _
    $region9: #{tpu_custom_call.1} parent=1 // pred_fallthru
      _
    // Predicated region
    $region10: #{tpu_custom_call.1} parent=1 // pred_check
      _
    $region11: #{tpu_custom_call.1} parent=1 // pred_check_branch
      %33 = sbr.rel (0) target = $region13
    $region12: #{tpu_custom_call.1} parent=1 // pred_region
      _
    $region13: #{tpu_custom_call.1} parent=1 // pred_fallthru
      _
    // Predicated region
    $region14: #{tpu_custom_call.1} parent=1 // pred_check
      _
    $region15: #{tpu_custom_call.1} parent=1 // pred_check_branch
      %35 = sbr.rel (0) target = $region17
    $region16: #{tpu_custom_call.1} parent=1 // pred_region
      _
    $region17: #{tpu_custom_call.1} parent=1 // pred_fallthru
      _
    // Predicated region
    $region18: #{tpu_custom_call.1} parent=1 // pred_check
      _
    $region19: #{tpu_custom_call.1} parent=1 // pred_check_branch
      %37 = sbr.rel (0) target = $region21
    $region20: #{tpu_custom_call.1} parent=1 // pred_region
      %s39 = ssub.s32 3072, 3072
      %40 = vsyncadd [#allocation6], %s39
      %s41 = sshll.u32 [#allocation5], 4
      %s42 = int_to_ptr.vmem [resolvable:$true] %s41
      %47 = dma.hbm_to_vmem [thread:$0]  %s4, 3072, %s42, [#allocation6], 192, 192, 12
    $region21: #{tpu_custom_call.1} parent=1 // pred_fallthru
      _
    // Predicated region
    $region22: #{tpu_custom_call.1} parent=1 // pred_check
      _
    $region23: #{tpu_custom_call.1} parent=1 // pred_check_branch
      %49 = sbr.rel (0) target = $region25
    $region24: #{tpu_custom_call.1} parent=1 // pred_region
      %s51 = ssub.s32 48, 48
      %52 = vsyncadd [#allocation6], %s51
      %s54 = sshll.u32 [#allocation7], 4
      %s55 = int_to_ptr.vmem [resolvable:$true] %s54
      %57 = dma.hbm_to_vmem [thread:$0]  %s5, 48, %s55, [#allocation6]
    $region25: #{tpu_custom_call.1} parent=1 // pred_fallthru
      _
    // Predicated region
    $region26: #{tpu_custom_call.1} parent=1 // pred_check
      _
    $region27: #{tpu_custom_call.1} parent=1 // pred_check_branch
      %59 = sbr.rel (0) target = $region29
    $region28: #{tpu_custom_call.1} parent=1 // pred_region
      _
    $region29: #{tpu_custom_call.1} parent=1 // pred_fallthru
      _
    // Predicated region
    $region30: #{tpu_custom_call.1} parent=1 // pred_check
      _
    $region31: #{tpu_custom_call.1} parent=1 // pred_check_branch
      %61 = sbr.rel (0) target = $region33
    $region32: #{tpu_custom_call.1} parent=1 // pred_region
      %s63 = ssub.s32 4096, 4096
      %64 = vsyncadd [#allocation9], %s63
      %s65 = sshll.u32 [#allocation8], 4
      %s66 = int_to_ptr.vmem [resolvable:$true] %s65
      %71 = dma.hbm_to_vmem [thread:$0]  %s7, 4096, %s66, [#allocation9], 256, 256, 16
    $region33: #{tpu_custom_call.1} parent=1 // pred_fallthru
      _
    // Predicated region
    $region34: #{tpu_custom_call.1} parent=1 // pred_check
      _
    $region35: #{tpu_custom_call.1} parent=1 // pred_check_branch
      %73 = sbr.rel (0) target = $region37
    $region36: #{tpu_custom_call.1} parent=1 // pred_region
      %s75 = ssub.s32 4096, 4096
      %76 = vsyncadd [#allocation9], %s75
      %s77 = sshll.u32 [#allocation10], 4
      %s78 = int_to_ptr.vmem [resolvable:$true] %s77
      %83 = dma.hbm_to_vmem [thread:$0]  %s8, 4096, %s78, [#allocation9], 64, 64, 4
    $region37: #{tpu_custom_call.1} parent=1 // pred_fallthru
      _
    // Predicated region
    $region38: #{tpu_custom_call.1} parent=1 // pred_check
      _
    $region39: #{tpu_custom_call.1} parent=1 // pred_check_branch
      %85 = sbr.rel (0) target = $region41
    $region40: #{tpu_custom_call.1} parent=1 // pred_region
      %86 = dma.done [#allocation3], 512
    $region41: #{tpu_custom_call.1} parent=1 // pred_fallthru
      _
    // Predicated region
    $region42: #{tpu_custom_call.1} parent=1 // pred_check
      _
    $region43: #{tpu_custom_call.1} parent=1 // pred_check_branch
      %88 = sbr.rel (0) target = $region45
    $region44: #{tpu_custom_call.1} parent=1 // pred_region
      %89 = dma.done [#allocation6], 3072
    $region45: #{tpu_custom_call.1} parent=1 // pred_fallthru
      _
    // Predicated region
    $region46: #{tpu_custom_call.1} parent=1 // pred_check
      _
    $region47: #{tpu_custom_call.1} parent=1 // pred_check_branch
      %91 = sbr.rel (0) target = $region49
    $region48: #{tpu_custom_call.1} parent=1 // pred_region
      %92 = dma.done [#allocation6], 48
    $region49: #{tpu_custom_call.1} parent=1 // pred_fallthru
      _
    // Predicated region
    $region50: #{tpu_custom_call.1} parent=1 // pred_check
      _
    $region51: #{tpu_custom_call.1} parent=1 // pred_check_branch
      %94 = sbr.rel (0) target = $region53
    $region52: #{tpu_custom_call.1} parent=1 // pred_region
      %95 = dma.done [#allocation9], 4096
    $region53: #{tpu_custom_call.1} parent=1 // pred_fallthru
      _
    // Predicated region
    $region54: #{tpu_custom_call.1} parent=1 // pred_check
      _
    $region55: #{tpu_custom_call.1} parent=1 // pred_check_branch
      %97 = sbr.rel (0) target = $region57
    $region56: #{tpu_custom_call.1} parent=1 // pred_region
      %98 = dma.done [#allocation9], 4096
    $region57: #{tpu_custom_call.1} parent=1 // pred_fallthru
      _
    %v100 = vld [vmem:[#allocation2] sm:$0xff]
    %v101 = vld [vmem:[#allocation2 + $0x8] sm:$0xff]
    %v102 = vld [vmem:[#allocation2 + $0x10] sm:$0xff]
    %v103 = vld [vmem:[#allocation2 + $0x18] sm:$0xff]
    %v104 = vld [vmem:[%s1] sm:$0x3f]
    %v105 = vld [vmem:[%s1 + $0x8] sm:$0x3f]
    %v106 = vld [vmem:[%s1 + $0x10] sm:$0x3f]
    %v107 = vld [vmem:[%s1 + $0x18] sm:$0x3f]
    %v108 = vld [vmem:[%s2] sm:$0x1]
    %v109 = vld [vmem:[%s3] sm:$0x1]
    %110 = vadd.xlane.f32.xlu0 %v100
    %v111 = vpop.xlane.xlu0 %110
    %112 = vadd.xlane.f32.xlu0 %v101
    %v113 = vpop.xlane.xlu0 %112
    %114 = vadd.xlane.f32.xlu0 %v102
    %v115 = vpop.xlane.xlu0 %114
    %116 = vadd.xlane.f32.xlu0 %v103
    %v117 = vpop.xlane.xlu0 %116
    %v118 = vrcp.pop 128.0
    %v119 = vmul.f32 %v111, %v118
    %v120 = vmul.f32 %v113, %v118
    %v121 = vmul.f32 %v115, %v118
    %v122 = vmul.f32 %v117, %v118
    %v123 = vsub.f32 %v100, %v119
    %v124 = vsub.f32 %v101, %v120
    %v125 = vsub.f32 %v102, %v121
    %v126 = vsub.f32 %v103, %v122
    %v127 = vmul.f32 %v123, %v123
    %v128 = vmul.f32 %v124, %v124
    %v129 = vmul.f32 %v125, %v125
    %v130 = vmul.f32 %v126, %v126
    %131 = vadd.xlane.f32.xlu0 %v127
    %v132 = vpop.xlane.xlu0 %131
    %133 = vadd.xlane.f32.xlu0 %v128
    %v134 = vpop.xlane.xlu0 %133
    %135 = vadd.xlane.f32.xlu0 %v129
    %v136 = vpop.xlane.xlu0 %135
    %137 = vadd.xlane.f32.xlu0 %v130
    %v138 = vpop.xlane.xlu0 %137
    %v139 = vmul.f32 %v132, %v118
    %v140 = vmul.f32 %v134, %v118
    %v141 = vmul.f32 %v136, %v118
    %v142 = vmul.f32 %v138, %v118
    %v143 = vadd.f32 %v139, 1e-05
    %v144 = vadd.f32 %v140, 1e-05
    %v145 = vadd.f32 %v141, 1e-05
    %v146 = vadd.f32 %v142, 1e-05
    %v147 = vrsqrt.pop %v143
    %v148 = vrsqrt.pop %v144
    %v149 = vrsqrt.pop %v145
    %v150 = vrsqrt.pop %v146
    %v151 = vmul.f32 %v123, %v147
    %v152 = vmul.f32 %v124, %v148
    %v153 = vmul.f32 %v125, %v149
    %v154 = vmul.f32 %v126, %v150
    %v156 = vlaneseq
    %v157 = vshrl.u32 %v156, 7
    %v158 = vsub.s32 0, %v157
    %v159 = vrot.slane %v108, %v158
    %v161 = vmul.f32 %v151, %v159
    %v162 = vmul.f32 %v152, %v159
    %v163 = vmul.f32 %v153, %v159
    %v164 = vmul.f32 %v154, %v159
    %v165 = vlaneseq
    %v166 = vshrl.u32 %v165, 7
    %v167 = vsub.s32 1, %v166
    %v168 = vrot.slane %v104, %v167
    %v169 = vlaneseq
    %v170 = vshrl.u32 %v169, 7
    %v171 = vsub.s32 1, %v170
    %v172 = vrot.slane %v105, %v171
    %v173 = vlaneseq
    %v174 = vshrl.u32 %v173, 7
    %v175 = vsub.s32 1, %v174
    %v176 = vrot.slane %v106, %v175
    %v177 = vlaneseq
    %v178 = vshrl.u32 %v177, 7
    %v179 = vsub.s32 1, %v178
    %v180 = vrot.slane %v107, %v179
    %v181 = vmul.f32 %v161, %v168
    %v182 = vmul.f32 %v162, %v172
    %v183 = vmul.f32 %v163, %v176
    %v184 = vmul.f32 %v164, %v180
    %v185 = vlaneseq
    %v186 = vshrl.u32 %v185, 7
    %v187 = vsub.s32 0, %v186
    %v188 = vrot.slane %v104, %v187
    %v189 = vlaneseq
    %v190 = vshrl.u32 %v189, 7
    %v191 = vsub.s32 0, %v190
    %v192 = vrot.slane %v105, %v191
    %v193 = vlaneseq
    %v194 = vshrl.u32 %v193, 7
    %v195 = vsub.s32 0, %v194
    %v196 = vrot.slane %v106, %v195
    %v197 = vlaneseq
    %v198 = vshrl.u32 %v197, 7
    %v199 = vsub.s32 0, %v198
    %v200 = vrot.slane %v107, %v199
    %v201 = vadd.f32 %v188, %v181
    %v202 = vadd.f32 %v192, %v182
    %v203 = vadd.f32 %v196, %v183
    %v204 = vadd.f32 %v200, %v184
    %v205 = vpack.c.bf16 %v202, %v201
    %v206 = vpack.c.bf16 %v204, %v203
    %v207 = vld [vmem:[#allocation5] sm:$0xff]
    %v208 = vld [vmem:[#allocation5 + $0x8] sm:$0xf]
    %v209 = vld [vmem:[#allocation5 + $0xc] sm:$0xff]
    %v210 = vld [vmem:[#allocation5 + $0x14] sm:$0xf]
    %v211 = vld [vmem:[#allocation5 + $0x18] sm:$0xff]
    %v212 = vld [vmem:[#allocation5 + $0x20] sm:$0xf]
    %v213 = vld [vmem:[#allocation5 + $0x24] sm:$0xff]
    %v214 = vld [vmem:[#allocation5 + $0x2c] sm:$0xf]
    %v215 = vld [vmem:[#allocation5 + $0x30] sm:$0xff]
    %v216 = vld [vmem:[#allocation5 + $0x38] sm:$0xf]
    %v217 = vld [vmem:[#allocation5 + $0x3c] sm:$0xff]
    %v218 = vld [vmem:[#allocation5 + $0x44] sm:$0xf]
    %v219 = vld [vmem:[#allocation5 + $0x48] sm:$0xff]
    %v220 = vld [vmem:[#allocation5 + $0x50] sm:$0xf]
    %v221 = vld [vmem:[#allocation5 + $0x54] sm:$0xff]
    %v222 = vld [vmem:[#allocation5 + $0x5c] sm:$0xf]
    %v223 = vld [vmem:[#allocation5 + $0x60] sm:$0xff]
    %v224 = vld [vmem:[#allocation5 + $0x68] sm:$0xf]
    %v225 = vld [vmem:[#allocation5 + $0x6c] sm:$0xff]
    %v226 = vld [vmem:[#allocation5 + $0x74] sm:$0xf]
    %v227 = vld [vmem:[#allocation5 + $0x78] sm:$0xff]
    %v228 = vld [vmem:[#allocation5 + $0x80] sm:$0xf]
    %v229 = vld [vmem:[#allocation5 + $0x84] sm:$0xff]
    %v230 = vld [vmem:[#allocation5 + $0x8c] sm:$0xf]
    %v231 = vld [vmem:[#allocation5 + $0x90] sm:$0xff]
    %v232 = vld [vmem:[#allocation5 + $0x98] sm:$0xf]
    %v233 = vld [vmem:[#allocation5 + $0x9c] sm:$0xff]
    %v234 = vld [vmem:[#allocation5 + $0xa4] sm:$0xf]
    %v235 = vld [vmem:[#allocation5 + $0xa8] sm:$0xff]
    %v236 = vld [vmem:[#allocation5 + $0xb0] sm:$0xf]
    %v237 = vld [vmem:[#allocation5 + $0xb4] sm:$0xff]
    %v238 = vld [vmem:[#allocation5 + $0xbc] sm:$0xf]
    %v239 = vld [vmem:[#allocation7] sm:$0x7]
    %v241 = vlaneseq
    %v242 = vshrl.u32 %v241, 7
    %v243 = vsub.s32 0, %v242
    %v244 = vrot.slane %v239, %v243
    %v245 = vlaneseq
    %v246 = vshrl.u32 %v245, 7
    %v247 = vsub.s32 1, %v246
    %v248 = vrot.slane %v239, %v247
    %v249 = vlaneseq
    %v250 = vshrl.u32 %v249, 7
    %v251 = vsub.s32 2, %v250
    %v252 = vrot.slane %v239, %v251
    %v288 = vunpack.c.l.b16 %v207
    %v289 = vunpack.c.h.b16 %v207
    %v290 = vunpack.c.l.b16 %v208
    %v291 = vunpack.c.l.b16 %v209
    %v292 = vunpack.c.h.b16 %v209
    %v293 = vunpack.c.l.b16 %v210
    %v294 = vunpack.c.l.b16 %v211
    %v295 = vunpack.c.h.b16 %v211
    %v296 = vunpack.c.l.b16 %v212
    %v297 = vunpack.c.l.b16 %v213
    %v298 = vunpack.c.h.b16 %v213
    %v299 = vunpack.c.l.b16 %v214
    %v300 = vunpack.c.l.b16 %v215
    %v301 = vunpack.c.h.b16 %v215
    %v302 = vunpack.c.l.b16 %v216
    %v303 = vunpack.c.l.b16 %v217
    %v304 = vunpack.c.h.b16 %v217
    %v305 = vunpack.c.l.b16 %v218
    %v306 = vunpack.c.l.b16 %v219
    %v307 = vunpack.c.h.b16 %v219
    %v308 = vunpack.c.l.b16 %v220
    %v309 = vunpack.c.l.b16 %v221
    %v310 = vunpack.c.h.b16 %v221
    %v311 = vunpack.c.l.b16 %v222
    %v312 = vunpack.c.l.b16 %v223
    %v313 = vunpack.c.h.b16 %v223
    %v314 = vunpack.c.l.b16 %v224
    %v315 = vunpack.c.l.b16 %v225
    %v316 = vunpack.c.h.b16 %v225
    %v317 = vunpack.c.l.b16 %v226
    %v318 = vunpack.c.l.b16 %v227
    %v319 = vunpack.c.h.b16 %v227
    %v320 = vunpack.c.l.b16 %v228
    %v321 = vunpack.c.l.b16 %v229
    %v322 = vunpack.c.h.b16 %v229
    %v323 = vunpack.c.l.b16 %v230
    %v324 = vunpack.c.l.b16 %v231
    %v325 = vunpack.c.h.b16 %v231
    %v326 = vunpack.c.l.b16 %v232
    %v327 = vunpack.c.l.b16 %v233
    %v328 = vunpack.c.h.b16 %v233
    %v329 = vunpack.c.l.b16 %v234
    %v330 = vunpack.c.l.b16 %v235
    %v331 = vunpack.c.h.b16 %v235
    %v332 = vunpack.c.l.b16 %v236
    %v333 = vunpack.c.l.b16 %v237
    %v334 = vunpack.c.h.b16 %v237
    %v335 = vunpack.c.l.b16 %v238
    %v336 = vpack.c.b16 %v291, %v288
    %v337 = vpack.c.b16 %v292, %v289
    %v338 = vpack.c.b16 %v293, %v290
    %v339 = vpack.c.b16 %v297, %v294
    %v340 = vpack.c.b16 %v298, %v295
    %v341 = vpack.c.b16 %v299, %v296
    %v342 = vpack.c.b16 %v303, %v300
    %v343 = vpack.c.b16 %v304, %v301
    %v344 = vpack.c.b16 %v305, %v302
    %v345 = vpack.c.b16 %v309, %v306
    %v346 = vpack.c.b16 %v310, %v307
    %v347 = vpack.c.b16 %v311, %v308
    %v348 = vpack.c.b16 %v315, %v312
    %v349 = vpack.c.b16 %v316, %v313
    %v350 = vpack.c.b16 %v317, %v314
    %v351 = vpack.c.b16 %v321, %v318
    %v352 = vpack.c.b16 %v322, %v319
    %v353 = vpack.c.b16 %v323, %v320
    %v354 = vpack.c.b16 %v327, %v324
    %v355 = vpack.c.b16 %v328, %v325
    %v356 = vpack.c.b16 %v329, %v326
    %v357 = vpack.c.b16 %v333, %v330
    %v358 = vpack.c.b16 %v334, %v331
    %v359 = vpack.c.b16 %v335, %v332
    %384 = vmatprep.subr.bf16.mxu0 %v358
    %385 = vmatpush1.bf16.msra.mxu0 %v357
    %386 = vmatprep.subr.bf16.mxu0 %v355
    %387 = vmatpush1.bf16.msra.mxu0 %v354
    %388 = vmatprep.subr.bf16.mxu0 %v352
    %389 = vmatpush1.bf16.msra.mxu0 %v351
    %390 = vmatprep.subr.bf16.mxu0 %v349
    %391 = vmatpush1.bf16.msra.mxu0 %v348
    %392 = vmatprep.subr.bf16.mxu0 %v346
    %393 = vmatpush1.bf16.msra.mxu0 %v345
    %394 = vmatprep.subr.bf16.mxu0 %v343
    %395 = vmatpush1.bf16.msra.mxu0 %v342
    %396 = vmatprep.subr.bf16.mxu0 %v340
    %397 = vmatpush1.bf16.msra.mxu0 %v339
    %398 = vmatprep.subr.bf16.mxu0 %v337
    %399 = vmatpush1.bf16.msra.mxu0 %v336
    %400 = vmatprep.subr.bf16.mxu0 0
    %401 = vmatpush2.bf16.msra.mxu0 0
    %402 = vmatprep.subr.bf16.mxu0 0
    %403 = vmatpush2.bf16.msra.mxu0 0
    %404 = vmatprep.subr.bf16.mxu0 0
    %405 = vmatpush2.bf16.msra.mxu0 0
    %406 = vmatprep.subr.bf16.mxu0 0
    %407 = vmatpush2.bf16.msra.mxu0 0
    %408 = vmatprep.subr.bf16.mxu0 0
    %409 = vmatpush2.bf16.msra.mxu0 0
    %410 = vmatprep.subr.bf16.mxu0 0
    %411 = vmatpush2.bf16.msra.mxu0 0
    %412 = vmatprep.subr.bf16.mxu0 0
    %413 = vmatpush2.bf16.msra.mxu0 0
    %414 = vmatprep.subr.bf16.mxu0 0
    %415 = vmatpush2.bf16.msra.mxu0 0
    %416 = vmatprep.mubr.bf16.mxu0 0
    %417 = vmatmul.mubr.bf16.gmra.mxu0 %v205
    %v418 = vpop.f32.mrf.mxu0
    %v419 = vadd.f32 %v244, %v418
    %v420 = vpop.f32.mrf.mxu0
    %v421 = vadd.f32 %v248, %v420
    %v422 = vpop.f32.mrf.mxu0
    %v423 = vadd.f32 %v244, %v422
    %v424 = vpop.f32.mrf.mxu0
    %v425 = vadd.f32 %v248, %v424
    %426 = vmatprep.mubr.bf16.mxu0 0
    %427 = vmatmul.mubr.bf16.gmra.mxu0 %v206
    %v428 = vpop.f32.mrf.mxu0
    %v429 = vadd.f32 %v244, %v428
    %v430 = vpop.f32.mrf.mxu0
    %v431 = vadd.f32 %v248, %v430
    %v432 = vpop.f32.mrf.mxu0
    %v433 = vadd.f32 %v244, %v432
    %v434 = vpop.f32.mrf.mxu0
    %v435 = vadd.f32 %v248, %v434
    %436 = vdwg.mxu0
    %437 = vmatprep.subr.bf16.mxu0 0
    %438 = vmatpush1.bf16.msra.mxu0 %v359
    %439 = vmatprep.subr.bf16.mxu0 0
    %440 = vmatpush1.bf16.msra.mxu0 %v356
    %441 = vmatprep.subr.bf16.mxu0 0
    %442 = vmatpush1.bf16.msra.mxu0 %v353
    %443 = vmatprep.subr.bf16.mxu0 0
    %444 = vmatpush1.bf16.msra.mxu0 %v350
    %445 = vmatprep.subr.bf16.mxu0 0
    %446 = vmatpush1.bf16.msra.mxu0 %v347
    %447 = vmatprep.subr.bf16.mxu0 0
    %448 = vmatpush1.bf16.msra.mxu0 %v344
    %449 = vmatprep.subr.bf16.mxu0 0
    %450 = vmatpush1.bf16.msra.mxu0 %v341
    %451 = vmatprep.subr.bf16.mxu0 0
    %452 = vmatpush1.bf16.msra.mxu0 %v338
    %453 = vmatprep.subr.bf16.mxu0 0
    %454 = vmatpush2.bf16.msra.mxu0 0
    %455 = vmatprep.subr.bf16.mxu0 0
    %456 = vmatpush2.bf16.msra.mxu0 0
    %457 = vmatprep.subr.bf16.mxu0 0
    %458 = vmatpush2.bf16.msra.mxu0 0
    %459 = vmatprep.subr.bf16.mxu0 0
    %460 = vmatpush2.bf16.msra.mxu0 0
    %461 = vmatprep.subr.bf16.mxu0 0
    %462 = vmatpush2.bf16.msra.mxu0 0
    %463 = vmatprep.subr.bf16.mxu0 0
    %464 = vmatpush2.bf16.msra.mxu0 0
    %465 = vmatprep.subr.bf16.mxu0 0
    %466 = vmatpush2.bf16.msra.mxu0 0
    %467 = vmatprep.subr.bf16.mxu0 0
    %468 = vmatpush2.bf16.msra.mxu0 0
    %469 = vmatprep.mubr.bf16.mxu0 0
    %470 = vmatmul.mubr.bf16.gmra.mxu0 %v205
    %v471 = vpop.f32.mrf.mxu0
    %v472 = vadd.f32 %v252, %v471
    %v473 = vpop.f32.mrf.mxu0
    %v474 = vpop.f32.mrf.mxu0
    %v475 = vadd.f32 %v252, %v474
    %v476 = vpop.f32.mrf.mxu0
    %477 = vmatprep.mubr.bf16.mxu0 0
    %478 = vmatmul.mubr.bf16.gmra.mxu0 %v206
    %v479 = vpop.f32.mrf.mxu0
    %v480 = vadd.f32 %v252, %v479
    %v481 = vpop.f32.mrf.mxu0
    %v482 = vpop.f32.mrf.mxu0
    %v483 = vadd.f32 %v252, %v482
    %v484 = vpop.f32.mrf.mxu0
    %485 = vdwg.mxu0
    %v486 = vmul.f32 %v419, 0.17677669
    %v487 = vmul.f32 %v423, 0.17677669
    %v488 = vmul.f32 %v429, 0.17677669
    %v489 = vmul.f32 %v433, 0.17677669
    %v490 = vpack.c.bf16 %v487, %v486
    %v491 = vpack.c.bf16 %v489, %v488
    %v494 = vunpack.c.l.b16 %v490
    %v495 = vunpack.c.h.b16 %v490
    %v496 = vunpack.c.l.b16 %v491
    %v497 = vunpack.c.h.b16 %v491
    %v498 = vpack.c.b16 %v494, %v494
    %v499 = vpack.c.b16 %v495, %v495
    %v500 = vpack.c.b16 %v496, %v496
    %v501 = vpack.c.b16 %v497, %v497
    %v502 = vpack.c.bf16 %v425, %v421
    %v503 = vpack.c.bf16 %v435, %v431
    %v506 = vunpack.c.l.b16 %v502
    %v507 = vunpack.c.h.b16 %v502
    %v508 = vunpack.c.l.b16 %v503
    %v509 = vunpack.c.h.b16 %v503
    %v510 = vpack.c.b16 %v506, %v506
    %v511 = vpack.c.b16 %v507, %v507
    %v512 = vpack.c.b16 %v508, %v508
    %v513 = vpack.c.b16 %v509, %v509
    %v514 = vpack.c.bf16 %v475, %v472
    %v515 = vpack.c.bf16 %v483, %v480
    %v518 = vunpack.c.l.b16 %v514
    %v519 = vunpack.c.h.b16 %v514
    %v520 = vunpack.c.l.b16 %v515
    %v521 = vunpack.c.h.b16 %v515
    %v522 = vpack.c.b16 %v518, %v518
    %v523 = vpack.c.b16 %v519, %v519
    %v524 = vpack.c.b16 %v520, %v520
    %v525 = vpack.c.b16 %v521, %v521
    %vm526 = vcmask 261120
    %v528 = vsel %vm526, %v498, 0
    %v531 = vsel %vm526, %v510, 0
    %533 = vmatprep.subr.bf16.mxu0 0
    %534 = vmatpush1.bf16.xpose.msra.mxu0 0
    %535 = vmatprep.subr.bf16.mxu0 0
    %536 = vmatpush1.bf16.xpose.msra.mxu0 0
    %537 = vmatprep.subr.bf16.mxu0 0
    %538 = vmatpush1.bf16.xpose.msra.mxu0 0
    %539 = vmatprep.subr.bf16.mxu0 0
    %540 = vmatpush1.bf16.xpose.msra.mxu0 0
    %541 = vmatprep.subr.bf16.mxu0 0
    %542 = vmatpush1.bf16.xpose.msra.mxu0 0
    %543 = vmatprep.subr.bf16.mxu0 0
    %544 = vmatpush1.bf16.xpose.msra.mxu0 0
    %545 = vmatprep.subr.bf16.mxu0 0
    %546 = vmatpush1.bf16.xpose.msra.mxu0 0
    %547 = vmatprep.subr.bf16.mxu0 0
    %548 = vmatpush1.bf16.xpose.msra.mxu0 %v531
    %549 = vmatprep.subr.bf16.mxu0 0
    %550 = vmatpush2.bf16.xpose.msra.mxu0 0
    %551 = vmatprep.subr.bf16.mxu0 0
    %552 = vmatpush2.bf16.xpose.msra.mxu0 0
    %553 = vmatprep.subr.bf16.mxu0 0
    %554 = vmatpush2.bf16.xpose.msra.mxu0 0
    %555 = vmatprep.subr.bf16.mxu0 0
    %556 = vmatpush2.bf16.xpose.msra.mxu0 0
    %557 = vmatprep.subr.bf16.mxu0 0
    %558 = vmatpush2.bf16.xpose.msra.mxu0 0
    %559 = vmatprep.subr.bf16.mxu0 0
    %560 = vmatpush2.bf16.xpose.msra.mxu0 0
    %561 = vmatprep.subr.bf16.mxu0 0
    %562 = vmatpush2.bf16.xpose.msra.mxu0 0
    %563 = vmatprep.subr.bf16.mxu0 0
    %564 = vmatpush2.bf16.xpose.msra.mxu0 0
    %565 = vmatprep.mubr.bf16.mxu0 0
    %566 = vmatmul.mubr.bf16.gmra.mxu0 %v528
    %v567 = vpop.f32.mrf.mxu0
    %v568 = vadd.f32 0.0, %v567
    %v569 = vpop.f32.mrf.mxu0
    %v570 = vpop.f32.mrf.mxu0
    %v571 = vpop.f32.mrf.mxu0
    %572 = vdwg.mxu0
    %v574 = vsel %vm526, %v499, 0
    %v577 = vsel %vm526, %v511, 0
    %579 = vmatprep.subr.bf16.mxu0 0
    %580 = vmatpush1.bf16.xpose.msra.mxu0 0
    %581 = vmatprep.subr.bf16.mxu0 0
    %582 = vmatpush1.bf16.xpose.msra.mxu0 0
    %583 = vmatprep.subr.bf16.mxu0 0
    %584 = vmatpush1.bf16.xpose.msra.mxu0 0
    %585 = vmatprep.subr.bf16.mxu0 0
    %586 = vmatpush1.bf16.xpose.msra.mxu0 0
    %587 = vmatprep.subr.bf16.mxu0 0
    %588 = vmatpush1.bf16.xpose.msra.mxu0 0
    %589 = vmatprep.subr.bf16.mxu0 0
    %590 = vmatpush1.bf16.xpose.msra.mxu0 0
    %591 = vmatprep.subr.bf16.mxu0 0
    %592 = vmatpush1.bf16.xpose.msra.mxu0 0
    %593 = vmatprep.subr.bf16.mxu0 0
    %594 = vmatpush1.bf16.xpose.msra.mxu0 %v577
    %595 = vmatprep.subr.bf16.mxu0 0
    %596 = vmatpush2.bf16.xpose.msra.mxu0 0
    %597 = vmatprep.subr.bf16.mxu0 0
    %598 = vmatpush2.bf16.xpose.msra.mxu0 0
    %599 = vmatprep.subr.bf16.mxu0 0
    %600 = vmatpush2.bf16.xpose.msra.mxu0 0
    %601 = vmatprep.subr.bf16.mxu0 0
    %602 = vmatpush2.bf16.xpose.msra.mxu0 0
    %603 = vmatprep.subr.bf16.mxu0 0
    %604 = vmatpush2.bf16.xpose.msra.mxu0 0
    %605 = vmatprep.subr.bf16.mxu0 0
    %606 = vmatpush2.bf16.xpose.msra.mxu0 0
    %607 = vmatprep.subr.bf16.mxu0 0
    %608 = vmatpush2.bf16.xpose.msra.mxu0 0
    %609 = vmatprep.subr.bf16.mxu0 0
    %610 = vmatpush2.bf16.xpose.msra.mxu0 0
    %611 = vmatprep.mubr.bf16.mxu0 0
    %612 = vmatmul.mubr.bf16.gmra.mxu0 %v574
    %v613 = vpop.f32.mrf.mxu0
    %v614 = vadd.f32 0.0, %v613
    %v615 = vpop.f32.mrf.mxu0
    %v616 = vpop.f32.mrf.mxu0
    %v617 = vpop.f32.mrf.mxu0
    %618 = vdwg.mxu0
    %v620 = vsel %vm526, %v500, 0
    %v623 = vsel %vm526, %v512, 0
    %625 = vmatprep.subr.bf16.mxu0 0
    %626 = vmatpush1.bf16.xpose.msra.mxu0 0
    %627 = vmatprep.subr.bf16.mxu0 0
    %628 = vmatpush1.bf16.xpose.msra.mxu0 0
    %629 = vmatprep.subr.bf16.mxu0 0
    %630 = vmatpush1.bf16.xpose.msra.mxu0 0
    %631 = vmatprep.subr.bf16.mxu0 0
    %632 = vmatpush1.bf16.xpose.msra.mxu0 0
    %633 = vmatprep.subr.bf16.mxu0 0
    %634 = vmatpush1.bf16.xpose.msra.mxu0 0
    %635 = vmatprep.subr.bf16.mxu0 0
    %636 = vmatpush1.bf16.xpose.msra.mxu0 0
    %637 = vmatprep.subr.bf16.mxu0 0
    %638 = vmatpush1.bf16.xpose.msra.mxu0 0
    %639 = vmatprep.subr.bf16.mxu0 0
    %640 = vmatpush1.bf16.xpose.msra.mxu0 %v623
    %641 = vmatprep.subr.bf16.mxu0 0
    %642 = vmatpush2.bf16.xpose.msra.mxu0 0
    %643 = vmatprep.subr.bf16.mxu0 0
    %644 = vmatpush2.bf16.xpose.msra.mxu0 0
    %645 = vmatprep.subr.bf16.mxu0 0
    %646 = vmatpush2.bf16.xpose.msra.mxu0 0
    %647 = vmatprep.subr.bf16.mxu0 0
    %648 = vmatpush2.bf16.xpose.msra.mxu0 0
    %649 = vmatprep.subr.bf16.mxu0 0
    %650 = vmatpush2.bf16.xpose.msra.mxu0 0
    %651 = vmatprep.subr.bf16.mxu0 0
    %652 = vmatpush2.bf16.xpose.msra.mxu0 0
    %653 = vmatprep.subr.bf16.mxu0 0
    %654 = vmatpush2.bf16.xpose.msra.mxu0 0
    %655 = vmatprep.subr.bf16.mxu0 0
    %656 = vmatpush2.bf16.xpose.msra.mxu0 0
    %657 = vmatprep.mubr.bf16.mxu0 0
    %658 = vmatmul.mubr.bf16.gmra.mxu0 %v620
    %v659 = vpop.f32.mrf.mxu0
    %v660 = vadd.f32 0.0, %v659
    %v661 = vpop.f32.mrf.mxu0
    %v662 = vpop.f32.mrf.mxu0
    %v663 = vpop.f32.mrf.mxu0
    %664 = vdwg.mxu0
    %v666 = vsel %vm526, %v501, 0
    %v669 = vsel %vm526, %v513, 0
    %671 = vmatprep.subr.bf16.mxu0 0
    %672 = vmatpush1.bf16.xpose.msra.mxu0 0
    %673 = vmatprep.subr.bf16.mxu0 0
    %674 = vmatpush1.bf16.xpose.msra.mxu0 0
    %675 = vmatprep.subr.bf16.mxu0 0
    %676 = vmatpush1.bf16.xpose.msra.mxu0 0
    %677 = vmatprep.subr.bf16.mxu0 0
    %678 = vmatpush1.bf16.xpose.msra.mxu0 0
    %679 = vmatprep.subr.bf16.mxu0 0
    %680 = vmatpush1.bf16.xpose.msra.mxu0 0
    %681 = vmatprep.subr.bf16.mxu0 0
    %682 = vmatpush1.bf16.xpose.msra.mxu0 0
    %683 = vmatprep.subr.bf16.mxu0 0
    %684 = vmatpush1.bf16.xpose.msra.mxu0 0
    %685 = vmatprep.subr.bf16.mxu0 0
    %686 = vmatpush1.bf16.xpose.msra.mxu0 %v669
    %687 = vmatprep.subr.bf16.mxu0 0
    %688 = vmatpush2.bf16.xpose.msra.mxu0 0
    %689 = vmatprep.subr.bf16.mxu0 0
    %690 = vmatpush2.bf16.xpose.msra.mxu0 0
    %691 = vmatprep.subr.bf16.mxu0 0
    %692 = vmatpush2.bf16.xpose.msra.mxu0 0
    %693 = vmatprep.subr.bf16.mxu0 0
    %694 = vmatpush2.bf16.xpose.msra.mxu0 0
    %695 = vmatprep.subr.bf16.mxu0 0
    %696 = vmatpush2.bf16.xpose.msra.mxu0 0
    %697 = vmatprep.subr.bf16.mxu0 0
    %698 = vmatpush2.bf16.xpose.msra.mxu0 0
    %699 = vmatprep.subr.bf16.mxu0 0
    %700 = vmatpush2.bf16.xpose.msra.mxu0 0
    %701 = vmatprep.subr.bf16.mxu0 0
    %702 = vmatpush2.bf16.xpose.msra.mxu0 0
    %703 = vmatprep.mubr.bf16.mxu0 0
    %704 = vmatmul.mubr.bf16.gmra.mxu0 %v666
    %v705 = vpop.f32.mrf.mxu0
    %v706 = vadd.f32 0.0, %v705
    %v707 = vpop.f32.mrf.mxu0
    %v708 = vpop.f32.mrf.mxu0
    %v709 = vpop.f32.mrf.mxu0
    %710 = vdwg.mxu0
    %vm711 = vcmask 64512
    %v712 = vsel %vm711, %v568, -inf
    %713 = vmax.xlane.f32.xlu0 %v712
    %v714 = vpop.xlane.xlu0 %713
    %v715 = vsel %vm711, %v614, -inf
    %716 = vmax.xlane.f32.xlu0 %v715
    %v717 = vpop.xlane.xlu0 %716
    %v718 = vsel %vm711, %v660, -inf
    %719 = vmax.xlane.f32.xlu0 %v718
    %v720 = vpop.xlane.xlu0 %719
    %v721 = vsel %vm711, %v706, -inf
    %722 = vmax.xlane.f32.xlu0 %v721
    %v723 = vpop.xlane.xlu0 %722
    %v724 = vsub.f32 %v568, %v714
    %v725 = vsub.f32 %v614, %v717
    %v726 = vsub.f32 %v660, %v720
    %v727 = vsub.f32 %v706, %v723
    %v728 = vmul.f32 %v724, 1.442695
    %v729 = vpow.pop %v728
    %v730 = vmul.f32 %v725, 1.442695
    %v731 = vpow.pop %v730
    %v732 = vmul.f32 %v726, 1.442695
    %v733 = vpow.pop %v732
    %v734 = vmul.f32 %v727, 1.442695
    %v735 = vpow.pop %v734
    %v736 = vsel %vm711, %v729, 0.0
    %737 = vadd.xlane.f32.xlu0 %v736
    %v738 = vpop.xlane.xlu0 %737
    %v739 = vsel %vm711, %v731, 0.0
    %740 = vadd.xlane.f32.xlu0 %v739
    %v741 = vpop.xlane.xlu0 %740
    %v742 = vsel %vm711, %v733, 0.0
    %743 = vadd.xlane.f32.xlu0 %v742
    %v744 = vpop.xlane.xlu0 %743
    %v745 = vsel %vm711, %v735, 0.0
    %746 = vadd.xlane.f32.xlu0 %v745
    %v747 = vpop.xlane.xlu0 %746
    %v748 = vrcp.pop %v738
    %v749 = vrcp.pop %v741
    %v750 = vrcp.pop %v744
    %v751 = vrcp.pop %v747
    %v752 = vmul.f32 %v729, %v748
    %v753 = vmul.f32 %v731, %v749
    %v754 = vmul.f32 %v733, %v750
    %v755 = vmul.f32 %v735, %v751
    %v756 = vpack.c.bf16 %v752, %v752
    %v757 = vpack.c.bf16 %v753, %v753
    %v758 = vpack.c.bf16 %v754, %v754
    %v759 = vpack.c.bf16 %v755, %v755
    %v761 = vsel %vm711, %v756, 0
    %vm763 = vcmask 1043456
    %v765 = vsel %vm763, %v522, 0
    %767 = vmatprep.subr.bf16.mxu0 0
    %768 = vmatpush1.bf16.msra.mxu0 0
    %769 = vmatprep.subr.bf16.mxu0 0
    %770 = vmatpush1.bf16.msra.mxu0 0
    %771 = vmatprep.subr.bf16.mxu0 0
    %772 = vmatpush1.bf16.msra.mxu0 0
    %773 = vmatprep.subr.bf16.mxu0 0
    %774 = vmatpush1.bf16.msra.mxu0 0
    %775 = vmatprep.subr.bf16.mxu0 0
    %776 = vmatpush1.bf16.msra.mxu0 0
    %777 = vmatprep.subr.bf16.mxu0 0
    %778 = vmatpush1.bf16.msra.mxu0 0
    %779 = vmatprep.subr.bf16.mxu0 0
    %780 = vmatpush1.bf16.msra.mxu0 0
    %781 = vmatprep.subr.bf16.mxu0 0
    %782 = vmatpush1.bf16.msra.mxu0 %v765
    %783 = vmatprep.subr.bf16.mxu0 0
    %784 = vmatpush2.bf16.msra.mxu0 0
    %785 = vmatprep.subr.bf16.mxu0 0
    %786 = vmatpush2.bf16.msra.mxu0 0
    %787 = vmatprep.subr.bf16.mxu0 0
    %788 = vmatpush2.bf16.msra.mxu0 0
    %789 = vmatprep.subr.bf16.mxu0 0
    %790 = vmatpush2.bf16.msra.mxu0 0
    %791 = vmatprep.subr.bf16.mxu0 0
    %792 = vmatpush2.bf16.msra.mxu0 0
    %793 = vmatprep.subr.bf16.mxu0 0
    %794 = vmatpush2.bf16.msra.mxu0 0
    %795 = vmatprep.subr.bf16.mxu0 0
    %796 = vmatpush2.bf16.msra.mxu0 0
    %797 = vmatprep.subr.bf16.mxu0 0
    %798 = vmatpush2.bf16.msra.mxu0 0
    %799 = vmatprep.mubr.bf16.mxu0 0
    %800 = vmatmul.mubr.bf16.gmra.mxu0 %v761
    %v801 = vpop.f32.mrf.mxu0
    %v802 = vadd.f32 0.0, %v801
    %v803 = vpop.f32.mrf.mxu0
    %v804 = vpop.f32.mrf.mxu0
    %v805 = vpop.f32.mrf.mxu0
    %806 = vdwg.mxu0
    %v808 = vsel %vm711, %v757, 0
    %v811 = vsel %vm763, %v523, 0
    %813 = vmatprep.subr.bf16.mxu0 0
    %814 = vmatpush1.bf16.msra.mxu0 0
    %815 = vmatprep.subr.bf16.mxu0 0
    %816 = vmatpush1.bf16.msra.mxu0 0
    %817 = vmatprep.subr.bf16.mxu0 0
    %818 = vmatpush1.bf16.msra.mxu0 0
    %819 = vmatprep.subr.bf16.mxu0 0
    %820 = vmatpush1.bf16.msra.mxu0 0
    %821 = vmatprep.subr.bf16.mxu0 0
    %822 = vmatpush1.bf16.msra.mxu0 0
    %823 = vmatprep.subr.bf16.mxu0 0
    %824 = vmatpush1.bf16.msra.mxu0 0
    %825 = vmatprep.subr.bf16.mxu0 0
    %826 = vmatpush1.bf16.msra.mxu0 0
    %827 = vmatprep.subr.bf16.mxu0 0
    %828 = vmatpush1.bf16.msra.mxu0 %v811
    %829 = vmatprep.subr.bf16.mxu0 0
    %830 = vmatpush2.bf16.msra.mxu0 0
    %831 = vmatprep.subr.bf16.mxu0 0
    %832 = vmatpush2.bf16.msra.mxu0 0
    %833 = vmatprep.subr.bf16.mxu0 0
    %834 = vmatpush2.bf16.msra.mxu0 0
    %835 = vmatprep.subr.bf16.mxu0 0
    %836 = vmatpush2.bf16.msra.mxu0 0
    %837 = vmatprep.subr.bf16.mxu0 0
    %838 = vmatpush2.bf16.msra.mxu0 0
    %839 = vmatprep.subr.bf16.mxu0 0
    %840 = vmatpush2.bf16.msra.mxu0 0
    %841 = vmatprep.subr.bf16.mxu0 0
    %842 = vmatpush2.bf16.msra.mxu0 0
    %843 = vmatprep.subr.bf16.mxu0 0
    %844 = vmatpush2.bf16.msra.mxu0 0
    %845 = vmatprep.mubr.bf16.mxu0 0
    %846 = vmatmul.mubr.bf16.gmra.mxu0 %v808
    %v847 = vpop.f32.mrf.mxu0
    %v848 = vadd.f32 0.0, %v847
    %v849 = vpop.f32.mrf.mxu0
    %v850 = vpop.f32.mrf.mxu0
    %v851 = vpop.f32.mrf.mxu0
    %852 = vdwg.mxu0
    %v854 = vsel %vm711, %v758, 0
    %v857 = vsel %vm763, %v524, 0
    %859 = vmatprep.subr.bf16.mxu0 0
    %860 = vmatpush1.bf16.msra.mxu0 0
    %861 = vmatprep.subr.bf16.mxu0 0
    %862 = vmatpush1.bf16.msra.mxu0 0
    %863 = vmatprep.subr.bf16.mxu0 0
    %864 = vmatpush1.bf16.msra.mxu0 0
    %865 = vmatprep.subr.bf16.mxu0 0
    %866 = vmatpush1.bf16.msra.mxu0 0
    %867 = vmatprep.subr.bf16.mxu0 0
    %868 = vmatpush1.bf16.msra.mxu0 0
    %869 = vmatprep.subr.bf16.mxu0 0
    %870 = vmatpush1.bf16.msra.mxu0 0
    %871 = vmatprep.subr.bf16.mxu0 0
    %872 = vmatpush1.bf16.msra.mxu0 0
    %873 = vmatprep.subr.bf16.mxu0 0
    %874 = vmatpush1.bf16.msra.mxu0 %v857
    %875 = vmatprep.subr.bf16.mxu0 0
    %876 = vmatpush2.bf16.msra.mxu0 0
    %877 = vmatprep.subr.bf16.mxu0 0
    %878 = vmatpush2.bf16.msra.mxu0 0
    %879 = vmatprep.subr.bf16.mxu0 0
    %880 = vmatpush2.bf16.msra.mxu0 0
    %881 = vmatprep.subr.bf16.mxu0 0
    %882 = vmatpush2.bf16.msra.mxu0 0
    %883 = vmatprep.subr.bf16.mxu0 0
    %884 = vmatpush2.bf16.msra.mxu0 0
    %885 = vmatprep.subr.bf16.mxu0 0
    %886 = vmatpush2.bf16.msra.mxu0 0
    %887 = vmatprep.subr.bf16.mxu0 0
    %888 = vmatpush2.bf16.msra.mxu0 0
    %889 = vmatprep.subr.bf16.mxu0 0
    %890 = vmatpush2.bf16.msra.mxu0 0
    %891 = vmatprep.mubr.bf16.mxu0 0
    %892 = vmatmul.mubr.bf16.gmra.mxu0 %v854
    %v893 = vpop.f32.mrf.mxu0
    %v894 = vadd.f32 0.0, %v893
    %v895 = vpop.f32.mrf.mxu0
    %v896 = vpop.f32.mrf.mxu0
    %v897 = vpop.f32.mrf.mxu0
    %898 = vdwg.mxu0
    %v900 = vsel %vm711, %v759, 0
    %v903 = vsel %vm763, %v525, 0
    %905 = vmatprep.subr.bf16.mxu0 0
    %906 = vmatpush1.bf16.msra.mxu0 0
    %907 = vmatprep.subr.bf16.mxu0 0
    %908 = vmatpush1.bf16.msra.mxu0 0
    %909 = vmatprep.subr.bf16.mxu0 0
    %910 = vmatpush1.bf16.msra.mxu0 0
    %911 = vmatprep.subr.bf16.mxu0 0
    %912 = vmatpush1.bf16.msra.mxu0 0
    %913 = vmatprep.subr.bf16.mxu0 0
    %914 = vmatpush1.bf16.msra.mxu0 0
    %915 = vmatprep.subr.bf16.mxu0 0
    %916 = vmatpush1.bf16.msra.mxu0 0
    %917 = vmatprep.subr.bf16.mxu0 0
    %918 = vmatpush1.bf16.msra.mxu0 0
    %919 = vmatprep.subr.bf16.mxu0 0
    %920 = vmatpush1.bf16.msra.mxu0 %v903
    %921 = vmatprep.subr.bf16.mxu0 0
    %922 = vmatpush2.bf16.msra.mxu0 0
    %923 = vmatprep.subr.bf16.mxu0 0
    %924 = vmatpush2.bf16.msra.mxu0 0
    %925 = vmatprep.subr.bf16.mxu0 0
    %926 = vmatpush2.bf16.msra.mxu0 0
    %927 = vmatprep.subr.bf16.mxu0 0
    %928 = vmatpush2.bf16.msra.mxu0 0
    %929 = vmatprep.subr.bf16.mxu0 0
    %930 = vmatpush2.bf16.msra.mxu0 0
    %931 = vmatprep.subr.bf16.mxu0 0
    %932 = vmatpush2.bf16.msra.mxu0 0
    %933 = vmatprep.subr.bf16.mxu0 0
    %934 = vmatpush2.bf16.msra.mxu0 0
    %935 = vmatprep.subr.bf16.mxu0 0
    %936 = vmatpush2.bf16.msra.mxu0 0
    %937 = vmatprep.mubr.bf16.mxu0 0
    %938 = vmatmul.mubr.bf16.gmra.mxu0 %v900
    %v939 = vpop.f32.mrf.mxu0
    %v940 = vadd.f32 0.0, %v939
    %v941 = vpop.f32.mrf.mxu0
    %v942 = vpop.f32.mrf.mxu0
    %v943 = vpop.f32.mrf.mxu0
    %944 = vdwg.mxu0
    %945 = vrot.lane.b32.xlu0 %v498, 96
    %v946 = vpop.permute.xlu0 %945
    %947 = vrot.lane.b32.xlu0 %v510, 96
    %v948 = vpop.permute.xlu0 %947
    %v950 = vsel %vm526, %v946, 0
    %v953 = vsel %vm526, %v948, 0
    %955 = vmatprep.subr.bf16.mxu0 0
    %956 = vmatpush1.bf16.xpose.msra.mxu0 0
    %957 = vmatprep.subr.bf16.mxu0 0
    %958 = vmatpush1.bf16.xpose.msra.mxu0 0
    %959 = vmatprep.subr.bf16.mxu0 0
    %960 = vmatpush1.bf16.xpose.msra.mxu0 0
    %961 = vmatprep.subr.bf16.mxu0 0
    %962 = vmatpush1.bf16.xpose.msra.mxu0 0
    %963 = vmatprep.subr.bf16.mxu0 0
    %964 = vmatpush1.bf16.xpose.msra.mxu0 0
    %965 = vmatprep.subr.bf16.mxu0 0
    %966 = vmatpush1.bf16.xpose.msra.mxu0 0
    %967 = vmatprep.subr.bf16.mxu0 0
    %968 = vmatpush1.bf16.xpose.msra.mxu0 0
    %969 = vmatprep.subr.bf16.mxu0 0
    %970 = vmatpush1.bf16.xpose.msra.mxu0 %v953
    %971 = vmatprep.subr.bf16.mxu0 0
    %972 = vmatpush2.bf16.xpose.msra.mxu0 0
    %973 = vmatprep.subr.bf16.mxu0 0
    %974 = vmatpush2.bf16.xpose.msra.mxu0 0
    %975 = vmatprep.subr.bf16.mxu0 0
    %976 = vmatpush2.bf16.xpose.msra.mxu0 0
    %977 = vmatprep.subr.bf16.mxu0 0
    %978 = vmatpush2.bf16.xpose.msra.mxu0 0
    %979 = vmatprep.subr.bf16.mxu0 0
    %980 = vmatpush2.bf16.xpose.msra.mxu0 0
    %981 = vmatprep.subr.bf16.mxu0 0
    %982 = vmatpush2.bf16.xpose.msra.mxu0 0
    %983 = vmatprep.subr.bf16.mxu0 0
    %984 = vmatpush2.bf16.xpose.msra.mxu0 0
    %985 = vmatprep.subr.bf16.mxu0 0
    %986 = vmatpush2.bf16.xpose.msra.mxu0 0
    %987 = vmatprep.mubr.bf16.mxu0 0
    %988 = vmatmul.mubr.bf16.gmra.mxu0 %v950
    %v989 = vpop.f32.mrf.mxu0
    %v990 = vadd.f32 0.0, %v989
    %v991 = vpop.f32.mrf.mxu0
    %v992 = vpop.f32.mrf.mxu0
    %v993 = vpop.f32.mrf.mxu0
    %994 = vdwg.mxu0
    %995 = vrot.lane.b32.xlu0 %v499, 96
    %v996 = vpop.permute.xlu0 %995
    %997 = vrot.lane.b32.xlu0 %v511, 96
    %v998 = vpop.permute.xlu0 %997
    %v1000 = vsel %vm526, %v996, 0
    %v1003 = vsel %vm526, %v998, 0
    %1005 = vmatprep.subr.bf16.mxu0 0
    %1006 = vmatpush1.bf16.xpose.msra.mxu0 0
    %1007 = vmatprep.subr.bf16.mxu0 0
    %1008 = vmatpush1.bf16.xpose.msra.mxu0 0
    %1009 = vmatprep.subr.bf16.mxu0 0
    %1010 = vmatpush1.bf16.xpose.msra.mxu0 0
    %1011 = vmatprep.subr.bf16.mxu0 0
    %1012 = vmatpush1.bf16.xpose.msra.mxu0 0
    %1013 = vmatprep.subr.bf16.mxu0 0
    %1014 = vmatpush1.bf16.xpose.msra.mxu0 0
    %1015 = vmatprep.subr.bf16.mxu0 0
    %1016 = vmatpush1.bf16.xpose.msra.mxu0 0
    %1017 = vmatprep.subr.bf16.mxu0 0
    %1018 = vmatpush1.bf16.xpose.msra.mxu0 0
    %1019 = vmatprep.subr.bf16.mxu0 0
    %1020 = vmatpush1.bf16.xpose.msra.mxu0 %v1003
    %1021 = vmatprep.subr.bf16.mxu0 0
    %1022 = vmatpush2.bf16.xpose.msra.mxu0 0
    %1023 = vmatprep.subr.bf16.mxu0 0
    %1024 = vmatpush2.bf16.xpose.msra.mxu0 0
    %1025 = vmatprep.subr.bf16.mxu0 0
    %1026 = vmatpush2.bf16.xpose.msra.mxu0 0
    %1027 = vmatprep.subr.bf16.mxu0 0
    %1028 = vmatpush2.bf16.xpose.msra.mxu0 0
    %1029 = vmatprep.subr.bf16.mxu0 0
    %1030 = vmatpush2.bf16.xpose.msra.mxu0 0
    %1031 = vmatprep.subr.bf16.mxu0 0
    %1032 = vmatpush2.bf16.xpose.msra.mxu0 0
    %1033 = vmatprep.subr.bf16.mxu0 0
    %1034 = vmatpush2.bf16.xpose.msra.mxu0 0
    %1035 = vmatprep.subr.bf16.mxu0 0
    %1036 = vmatpush2.bf16.xpose.msra.mxu0 0
    %1037 = vmatprep.mubr.bf16.mxu0 0
    %1038 = vmatmul.mubr.bf16.gmra.mxu0 %v1000
    %v1039 = vpop.f32.mrf.mxu0
    %v1040 = vadd.f32 0.0, %v1039
    %v1041 = vpop.f32.mrf.mxu0
    %v1042 = vpop.f32.mrf.mxu0
    %v1043 = vpop.f32.mrf.mxu0
    %1044 = vdwg.mxu0
    %1045 = vrot.lane.b32.xlu0 %v500, 96
    %v1046 = vpop.permute.xlu0 %1045
    %1047 = vrot.lane.b32.xlu0 %v512, 96
    %v1048 = vpop.permute.xlu0 %1047
    %v1050 = vsel %vm526, %v1046, 0
    %v1053 = vsel %vm526, %v1048, 0
    %1055 = vmatprep.subr.bf16.mxu0 0
    %1056 = vmatpush1.bf16.xpose.msra.mxu0 0
    %1057 = vmatprep.subr.bf16.mxu0 0
    %1058 = vmatpush1.bf16.xpose.msra.mxu0 0
    %1059 = vmatprep.subr.bf16.mxu0 0
    %1060 = vmatpush1.bf16.xpose.msra.mxu0 0
    %1061 = vmatprep.subr.bf16.mxu0 0
    %1062 = vmatpush1.bf16.xpose.msra.mxu0 0
    %1063 = vmatprep.subr.bf16.mxu0 0
    %1064 = vmatpush1.bf16.xpose.msra.mxu0 0
    %1065 = vmatprep.subr.bf16.mxu0 0
    %1066 = vmatpush1.bf16.xpose.msra.mxu0 0
    %1067 = vmatprep.subr.bf16.mxu0 0
    %1068 = vmatpush1.bf16.xpose.msra.mxu0 0
    %1069 = vmatprep.subr.bf16.mxu0 0
    %1070 = vmatpush1.bf16.xpose.msra.mxu0 %v1053
    %1071 = vmatprep.subr.bf16.mxu0 0
    %1072 = vmatpush2.bf16.xpose.msra.mxu0 0
    %1073 = vmatprep.subr.bf16.mxu0 0
    %1074 = vmatpush2.bf16.xpose.msra.mxu0 0
    %1075 = vmatprep.subr.bf16.mxu0 0
    %1076 = vmatpush2.bf16.xpose.msra.mxu0 0
    %1077 = vmatprep.subr.bf16.mxu0 0
    %1078 = vmatpush2.bf16.xpose.msra.mxu0 0
    %1079 = vmatprep.subr.bf16.mxu0 0
    %1080 = vmatpush2.bf16.xpose.msra.mxu0 0
    %1081 = vmatprep.subr.bf16.mxu0 0
    %1082 = vmatpush2.bf16.xpose.msra.mxu0 0
    %1083 = vmatprep.subr.bf16.mxu0 0
    %1084 = vmatpush2.bf16.xpose.msra.mxu0 0
    %1085 = vmatprep.subr.bf16.mxu0 0
    %1086 = vmatpush2.bf16.xpose.msra.mxu0 0
    %1087 = vmatprep.mubr.bf16.mxu0 0
    %1088 = vmatmul.mubr.bf16.gmra.mxu0 %v1050
    %v1089 = vpop.f32.mrf.mxu0
    %v1090 = vadd.f32 0.0, %v1089
    %v1091 = vpop.f32.mrf.mxu0
    %v1092 = vpop.f32.mrf.mxu0
    %v1093 = vpop.f32.mrf.mxu0
    %1094 = vdwg.mxu0
    %1095 = vrot.lane.b32.xlu0 %v501, 96
    %v1096 = vpop.permute.xlu0 %1095
    %1097 = vrot.lane.b32.xlu0 %v513, 96
    %v1098 = vpop.permute.xlu0 %1097
    %v1100 = vsel %vm526, %v1096, 0
    %v1103 = vsel %vm526, %v1098, 0
    %1105 = vmatprep.subr.bf16.mxu0 0
    %1106 = vmatpush1.bf16.xpose.msra.mxu0 0
    %1107 = vmatprep.subr.bf16.mxu0 0
    %1108 = vmatpush1.bf16.xpose.msra.mxu0 0
    %1109 = vmatprep.subr.bf16.mxu0 0
    %1110 = vmatpush1.bf16.xpose.msra.mxu0 0
    %1111 = vmatprep.subr.bf16.mxu0 0
    %1112 = vmatpush1.bf16.xpose.msra.mxu0 0
    %1113 = vmatprep.subr.bf16.mxu0 0
    %1114 = vmatpush1.bf16.xpose.msra.mxu0 0
    %1115 = vmatprep.subr.bf16.mxu0 0
    %1116 = vmatpush1.bf16.xpose.msra.mxu0 0
    %1117 = vmatprep.subr.bf16.mxu0 0
    %1118 = vmatpush1.bf16.xpose.msra.mxu0 0
    %1119 = vmatprep.subr.bf16.mxu0 0
    %1120 = vmatpush1.bf16.xpose.msra.mxu0 %v1103
    %1121 = vmatprep.subr.bf16.mxu0 0
    %1122 = vmatpush2.bf16.xpose.msra.mxu0 0
    %1123 = vmatprep.subr.bf16.mxu0 0
    %1124 = vmatpush2.bf16.xpose.msra.mxu0 0
    %1125 = vmatprep.subr.bf16.mxu0 0
    %1126 = vmatpush2.bf16.xpose.msra.mxu0 0
    %1127 = vmatprep.subr.bf16.mxu0 0
    %1128 = vmatpush2.bf16.xpose.msra.mxu0 0
    %1129 = vmatprep.subr.bf16.mxu0 0
    %1130 = vmatpush2.bf16.xpose.msra.mxu0 0
    %1131 = vmatprep.subr.bf16.mxu0 0
    %1132 = vmatpush2.bf16.xpose.msra.mxu0 0
    %1133 = vmatprep.subr.bf16.mxu0 0
    %1134 = vmatpush2.bf16.xpose.msra.mxu0 0
    %1135 = vmatprep.subr.bf16.mxu0 0
    %1136 = vmatpush2.bf16.xpose.msra.mxu0 0
    %1137 = vmatprep.mubr.bf16.mxu0 0
    %1138 = vmatmul.mubr.bf16.gmra.mxu0 %v1100
    %v1139 = vpop.f32.mrf.mxu0
    %v1140 = vadd.f32 0.0, %v1139
    %v1141 = vpop.f32.mrf.mxu0
    %v1142 = vpop.f32.mrf.mxu0
    %v1143 = vpop.f32.mrf.mxu0
    %1144 = vdwg.mxu0
    %v1145 = vsel %vm711, %v990, -inf
    %1146 = vmax.xlane.f32.xlu0 %v1145
    %v1147 = vpop.xlane.xlu0 %1146
    %v1148 = vsel %vm711, %v1040, -inf
    %1149 = vmax.xlane.f32.xlu0 %v1148
    %v1150 = vpop.xlane.xlu0 %1149
    %v1151 = vsel %vm711, %v1090, -inf
    %1152 = vmax.xlane.f32.xlu0 %v1151
    %v1153 = vpop.xlane.xlu0 %1152
    %v1154 = vsel %vm711, %v1140, -inf
    %1155 = vmax.xlane.f32.xlu0 %v1154
    %v1156 = vpop.xlane.xlu0 %1155
    %v1157 = vsub.f32 %v990, %v1147
    %v1158 = vsub.f32 %v1040, %v1150
    %v1159 = vsub.f32 %v1090, %v1153
    %v1160 = vsub.f32 %v1140, %v1156
    %v1161 = vmul.f32 %v1157, 1.442695
    %v1162 = vpow.pop %v1161
    %v1163 = vmul.f32 %v1158, 1.442695
    %v1164 = vpow.pop %v1163
    %v1165 = vmul.f32 %v1159, 1.442695
    %v1166 = vpow.pop %v1165
    %v1167 = vmul.f32 %v1160, 1.442695
    %v1168 = vpow.pop %v1167
    %v1169 = vsel %vm711, %v1162, 0.0
    %1170 = vadd.xlane.f32.xlu0 %v1169
    %v1171 = vpop.xlane.xlu0 %1170
    %v1172 = vsel %vm711, %v1164, 0.0
    %1173 = vadd.xlane.f32.xlu0 %v1172
    %v1174 = vpop.xlane.xlu0 %1173
    %v1175 = vsel %vm711, %v1166, 0.0
    %1176 = vadd.xlane.f32.xlu0 %v1175
    %v1177 = vpop.xlane.xlu0 %1176
    %v1178 = vsel %vm711, %v1168, 0.0
    %1179 = vadd.xlane.f32.xlu0 %v1178
    %v1180 = vpop.xlane.xlu0 %1179
    %v1181 = vrcp.pop %v1171
    %v1182 = vrcp.pop %v1174
    %v1183 = vrcp.pop %v1177
    %v1184 = vrcp.pop %v1180
    %v1185 = vmul.f32 %v1162, %v1181
    %v1186 = vmul.f32 %v1164, %v1182
    %v1187 = vmul.f32 %v1166, %v1183
    %v1188 = vmul.f32 %v1168, %v1184
    %v1189 = vpack.c.bf16 %v1185, %v1185
    %v1190 = vpack.c.bf16 %v1186, %v1186
    %v1191 = vpack.c.bf16 %v1187, %v1187
    %v1192 = vpack.c.bf16 %v1188, %v1188
    %1193 = vrot.lane.b32.xlu0 %v522, 96
    %v1194 = vpop.permute.xlu0 %1193
    %v1196 = vsel %vm711, %v1189, 0
    %v1199 = vsel %vm763, %v1194, 0
    %1201 = vmatprep.subr.bf16.mxu0 0
    %1202 = vmatpush1.bf16.msra.mxu0 0
    %1203 = vmatprep.subr.bf16.mxu0 0
    %1204 = vmatpush1.bf16.msra.mxu0 0
    %1205 = vmatprep.subr.bf16.mxu0 0
    %1206 = vmatpush1.bf16.msra.mxu0 0
    %1207 = vmatprep.subr.bf16.mxu0 0
    %1208 = vmatpush1.bf16.msra.mxu0 0
    %1209 = vmatprep.subr.bf16.mxu0 0
    %1210 = vmatpush1.bf16.msra.mxu0 0
    %1211 = vmatprep.subr.bf16.mxu0 0
    %1212 = vmatpush1.bf16.msra.mxu0 0
    %1213 = vmatprep.subr.bf16.mxu0 0
    %1214 = vmatpush1.bf16.msra.mxu0 0
    %1215 = vmatprep.subr.bf16.mxu0 0
    %1216 = vmatpush1.bf16.msra.mxu0 %v1199
    %1217 = vmatprep.subr.bf16.mxu0 0
    %1218 = vmatpush2.bf16.msra.mxu0 0
    %1219 = vmatprep.subr.bf16.mxu0 0
    %1220 = vmatpush2.bf16.msra.mxu0 0
    %1221 = vmatprep.subr.bf16.mxu0 0
    %1222 = vmatpush2.bf16.msra.mxu0 0
    %1223 = vmatprep.subr.bf16.mxu0 0
    %1224 = vmatpush2.bf16.msra.mxu0 0
    %1225 = vmatprep.subr.bf16.mxu0 0
    %1226 = vmatpush2.bf16.msra.mxu0 0
    %1227 = vmatprep.subr.bf16.mxu0 0
    %1228 = vmatpush2.bf16.msra.mxu0 0
    %1229 = vmatprep.subr.bf16.mxu0 0
    %1230 = vmatpush2.bf16.msra.mxu0 0
    %1231 = vmatprep.subr.bf16.mxu0 0
    %1232 = vmatpush2.bf16.msra.mxu0 0
    %1233 = vmatprep.mubr.bf16.mxu0 0
    %1234 = vmatmul.mubr.bf16.gmra.mxu0 %v1196
    %v1235 = vpop.f32.mrf.mxu0
    %v1236 = vadd.f32 0.0, %v1235
    %v1237 = vpop.f32.mrf.mxu0
    %v1238 = vpop.f32.mrf.mxu0
    %v1239 = vpop.f32.mrf.mxu0
    %1240 = vdwg.mxu0
    %1241 = vrot.lane.b32.xlu0 %v523, 96
    %v1242 = vpop.permute.xlu0 %1241
    %v1244 = vsel %vm711, %v1190, 0
    %v1247 = vsel %vm763, %v1242, 0
    %1249 = vmatprep.subr.bf16.mxu0 0
    %1250 = vmatpush1.bf16.msra.mxu0 0
    %1251 = vmatprep.subr.bf16.mxu0 0
    %1252 = vmatpush1.bf16.msra.mxu0 0
    %1253 = vmatprep.subr.bf16.mxu0 0
    %1254 = vmatpush1.bf16.msra.mxu0 0
    %1255 = vmatprep.subr.bf16.mxu0 0
    %1256 = vmatpush1.bf16.msra.mxu0 0
    %1257 = vmatprep.subr.bf16.mxu0 0
    %1258 = vmatpush1.bf16.msra.mxu0 0
    %1259 = vmatprep.subr.bf16.mxu0 0
    %1260 = vmatpush1.bf16.msra.mxu0 0
    %1261 = vmatprep.subr.bf16.mxu0 0
    %1262 = vmatpush1.bf16.msra.mxu0 0
    %1263 = vmatprep.subr.bf16.mxu0 0
    %1264 = vmatpush1.bf16.msra.mxu0 %v1247
    %1265 = vmatprep.subr.bf16.mxu0 0
    %1266 = vmatpush2.bf16.msra.mxu0 0
    %1267 = vmatprep.subr.bf16.mxu0 0
    %1268 = vmatpush2.bf16.msra.mxu0 0
    %1269 = vmatprep.subr.bf16.mxu0 0
    %1270 = vmatpush2.bf16.msra.mxu0 0
    %1271 = vmatprep.subr.bf16.mxu0 0
    %1272 = vmatpush2.bf16.msra.mxu0 0
    %1273 = vmatprep.subr.bf16.mxu0 0
    %1274 = vmatpush2.bf16.msra.mxu0 0
    %1275 = vmatprep.subr.bf16.mxu0 0
    %1276 = vmatpush2.bf16.msra.mxu0 0
    %1277 = vmatprep.subr.bf16.mxu0 0
    %1278 = vmatpush2.bf16.msra.mxu0 0
    %1279 = vmatprep.subr.bf16.mxu0 0
    %1280 = vmatpush2.bf16.msra.mxu0 0
    %1281 = vmatprep.mubr.bf16.mxu0 0
    %1282 = vmatmul.mubr.bf16.gmra.mxu0 %v1244
    %v1283 = vpop.f32.mrf.mxu0
    %v1284 = vadd.f32 0.0, %v1283
    %v1285 = vpop.f32.mrf.mxu0
    %v1286 = vpop.f32.mrf.mxu0
    %v1287 = vpop.f32.mrf.mxu0
    %1288 = vdwg.mxu0
    %1289 = vrot.lane.b32.xlu0 %v524, 96
    %v1290 = vpop.permute.xlu0 %1289
    %v1292 = vsel %vm711, %v1191, 0
    %v1295 = vsel %vm763, %v1290, 0
    %1297 = vmatprep.subr.bf16.mxu0 0
    %1298 = vmatpush1.bf16.msra.mxu0 0
    %1299 = vmatprep.subr.bf16.mxu0 0
    %1300 = vmatpush1.bf16.msra.mxu0 0
    %1301 = vmatprep.subr.bf16.mxu0 0
    %1302 = vmatpush1.bf16.msra.mxu0 0
    %1303 = vmatprep.subr.bf16.mxu0 0
    %1304 = vmatpush1.bf16.msra.mxu0 0
    %1305 = vmatprep.subr.bf16.mxu0 0
    %1306 = vmatpush1.bf16.msra.mxu0 0
    %1307 = vmatprep.subr.bf16.mxu0 0
    %1308 = vmatpush1.bf16.msra.mxu0 0
    %1309 = vmatprep.subr.bf16.mxu0 0
    %1310 = vmatpush1.bf16.msra.mxu0 0
    %1311 = vmatprep.subr.bf16.mxu0 0
    %1312 = vmatpush1.bf16.msra.mxu0 %v1295
    %1313 = vmatprep.subr.bf16.mxu0 0
    %1314 = vmatpush2.bf16.msra.mxu0 0
    %1315 = vmatprep.subr.bf16.mxu0 0
    %1316 = vmatpush2.bf16.msra.mxu0 0
    %1317 = vmatprep.subr.bf16.mxu0 0
    %1318 = vmatpush2.bf16.msra.mxu0 0
    %1319 = vmatprep.subr.bf16.mxu0 0
    %1320 = vmatpush2.bf16.msra.mxu0 0
    %1321 = vmatprep.subr.bf16.mxu0 0
    %1322 = vmatpush2.bf16.msra.mxu0 0
    %1323 = vmatprep.subr.bf16.mxu0 0
    %1324 = vmatpush2.bf16.msra.mxu0 0
    %1325 = vmatprep.subr.bf16.mxu0 0
    %1326 = vmatpush2.bf16.msra.mxu0 0
    %1327 = vmatprep.subr.bf16.mxu0 0
    %1328 = vmatpush2.bf16.msra.mxu0 0
    %1329 = vmatprep.mubr.bf16.mxu0 0
    %1330 = vmatmul.mubr.bf16.gmra.mxu0 %v1292
    %v1331 = vpop.f32.mrf.mxu0
    %v1332 = vadd.f32 0.0, %v1331
    %v1333 = vpop.f32.mrf.mxu0
    %v1334 = vpop.f32.mrf.mxu0
    %v1335 = vpop.f32.mrf.mxu0
    %1336 = vdwg.mxu0
    %1337 = vrot.lane.b32.xlu0 %v525, 96
    %v1338 = vpop.permute.xlu0 %1337
    %v1340 = vsel %vm711, %v1192, 0
    %v1343 = vsel %vm763, %v1338, 0
    %1345 = vmatprep.subr.bf16.mxu0 0
    %1346 = vmatpush1.bf16.msra.mxu0 0
    %1347 = vmatprep.subr.bf16.mxu0 0
    %1348 = vmatpush1.bf16.msra.mxu0 0
    %1349 = vmatprep.subr.bf16.mxu0 0
    %1350 = vmatpush1.bf16.msra.mxu0 0
    %1351 = vmatprep.subr.bf16.mxu0 0
    %1352 = vmatpush1.bf16.msra.mxu0 0
    %1353 = vmatprep.subr.bf16.mxu0 0
    %1354 = vmatpush1.bf16.msra.mxu0 0
    %1355 = vmatprep.subr.bf16.mxu0 0
    %1356 = vmatpush1.bf16.msra.mxu0 0
    %1357 = vmatprep.subr.bf16.mxu0 0
    %1358 = vmatpush1.bf16.msra.mxu0 0
    %1359 = vmatprep.subr.bf16.mxu0 0
    %1360 = vmatpush1.bf16.msra.mxu0 %v1343
    %1361 = vmatprep.subr.bf16.mxu0 0
    %1362 = vmatpush2.bf16.msra.mxu0 0
    %1363 = vmatprep.subr.bf16.mxu0 0
    %1364 = vmatpush2.bf16.msra.mxu0 0
    %1365 = vmatprep.subr.bf16.mxu0 0
    %1366 = vmatpush2.bf16.msra.mxu0 0
    %1367 = vmatprep.subr.bf16.mxu0 0
    %1368 = vmatpush2.bf16.msra.mxu0 0
    %1369 = vmatprep.subr.bf16.mxu0 0
    %1370 = vmatpush2.bf16.msra.mxu0 0
    %1371 = vmatprep.subr.bf16.mxu0 0
    %1372 = vmatpush2.bf16.msra.mxu0 0
    %1373 = vmatprep.subr.bf16.mxu0 0
    %1374 = vmatpush2.bf16.msra.mxu0 0
    %1375 = vmatprep.subr.bf16.mxu0 0
    %1376 = vmatpush2.bf16.msra.mxu0 0
    %1377 = vmatprep.mubr.bf16.mxu0 0
    %1378 = vmatmul.mubr.bf16.gmra.mxu0 %v1340
    %v1379 = vpop.f32.mrf.mxu0
    %v1380 = vadd.f32 0.0, %v1379
    %v1381 = vpop.f32.mrf.mxu0
    %v1382 = vpop.f32.mrf.mxu0
    %v1383 = vpop.f32.mrf.mxu0
    %1384 = vdwg.mxu0
    %1385 = vrot.lane.b32.xlu0 %v498, 64
    %v1386 = vpop.permute.xlu0 %1385
    %1387 = vrot.lane.b32.xlu0 %v510, 64
    %v1388 = vpop.permute.xlu0 %1387
    %v1390 = vsel %vm526, %v1386, 0
    %v1393 = vsel %vm526, %v1388, 0
    %1395 = vmatprep.subr.bf16.mxu0 0
    %1396 = vmatpush1.bf16.xpose.msra.mxu0 0
    %1397 = vmatprep.subr.bf16.mxu0 0
    %1398 = vmatpush1.bf16.xpose.msra.mxu0 0
    %1399 = vmatprep.subr.bf16.mxu0 0
    %1400 = vmatpush1.bf16.xpose.msra.mxu0 0
    %1401 = vmatprep.subr.bf16.mxu0 0
    %1402 = vmatpush1.bf16.xpose.msra.mxu0 0
    %1403 = vmatprep.subr.bf16.mxu0 0
    %1404 = vmatpush1.bf16.xpose.msra.mxu0 0
    %1405 = vmatprep.subr.bf16.mxu0 0
    %1406 = vmatpush1.bf16.xpose.msra.mxu0 0
    %1407 = vmatprep.subr.bf16.mxu0 0
    %1408 = vmatpush1.bf16.xpose.msra.mxu0 0
    %1409 = vmatprep.subr.bf16.mxu0 0
    %1410 = vmatpush1.bf16.xpose.msra.mxu0 %v1393
    %1411 = vmatprep.subr.bf16.mxu0 0
    %1412 = vmatpush2.bf16.xpose.msra.mxu0 0
    %1413 = vmatprep.subr.bf16.mxu0 0
    %1414 = vmatpush2.bf16.xpose.msra.mxu0 0
    %1415 = vmatprep.subr.bf16.mxu0 0
    %1416 = vmatpush2.bf16.xpose.msra.mxu0 0
    %1417 = vmatprep.subr.bf16.mxu0 0
    %1418 = vmatpush2.bf16.xpose.msra.mxu0 0
    %1419 = vmatprep.subr.bf16.mxu0 0
    %1420 = vmatpush2.bf16.xpose.msra.mxu0 0
    %1421 = vmatprep.subr.bf16.mxu0 0
    %1422 = vmatpush2.bf16.xpose.msra.mxu0 0
    %1423 = vmatprep.subr.bf16.mxu0 0
    %1424 = vmatpush2.bf16.xpose.msra.mxu0 0
    %1425 = vmatprep.subr.bf16.mxu0 0
    %1426 = vmatpush2.bf16.xpose.msra.mxu0 0
    %1427 = vmatprep.mubr.bf16.mxu0 0
    %1428 = vmatmul.mubr.bf16.gmra.mxu0 %v1390
    %v1429 = vpop.f32.mrf.mxu0
    %v1430 = vadd.f32 0.0, %v1429
    %v1431 = vpop.f32.mrf.mxu0
    %v1432 = vpop.f32.mrf.mxu0
    %v1433 = vpop.f32.mrf.mxu0
    %1434 = vdwg.mxu0
    %1435 = vrot.lane.b32.xlu0 %v499, 64
    %v1436 = vpop.permute.xlu0 %1435
    %1437 = vrot.lane.b32.xlu0 %v511, 64
    %v1438 = vpop.permute.xlu0 %1437
    %v1440 = vsel %vm526, %v1436, 0
    %v1443 = vsel %vm526, %v1438, 0
    %1445 = vmatprep.subr.bf16.mxu0 0
    %1446 = vmatpush1.bf16.xpose.msra.mxu0 0
    %1447 = vmatprep.subr.bf16.mxu0 0
    %1448 = vmatpush1.bf16.xpose.msra.mxu0 0
    %1449 = vmatprep.subr.bf16.mxu0 0
    %1450 = vmatpush1.bf16.xpose.msra.mxu0 0
    %1451 = vmatprep.subr.bf16.mxu0 0
    %1452 = vmatpush1.bf16.xpose.msra.mxu0 0
    %1453 = vmatprep.subr.bf16.mxu0 0
    %1454 = vmatpush1.bf16.xpose.msra.mxu0 0
    %1455 = vmatprep.subr.bf16.mxu0 0
    %1456 = vmatpush1.bf16.xpose.msra.mxu0 0
    %1457 = vmatprep.subr.bf16.mxu0 0
    %1458 = vmatpush1.bf16.xpose.msra.mxu0 0
    %1459 = vmatprep.subr.bf16.mxu0 0
    %1460 = vmatpush1.bf16.xpose.msra.mxu0 %v1443
    %1461 = vmatprep.subr.bf16.mxu0 0
    %1462 = vmatpush2.bf16.xpose.msra.mxu0 0
    %1463 = vmatprep.subr.bf16.mxu0 0
    %1464 = vmatpush2.bf16.xpose.msra.mxu0 0
    %1465 = vmatprep.subr.bf16.mxu0 0
    %1466 = vmatpush2.bf16.xpose.msra.mxu0 0
    %1467 = vmatprep.subr.bf16.mxu0 0
    %1468 = vmatpush2.bf16.xpose.msra.mxu0 0
    %1469 = vmatprep.subr.bf16.mxu0 0
    %1470 = vmatpush2.bf16.xpose.msra.mxu0 0
    %1471 = vmatprep.subr.bf16.mxu0 0
    %1472 = vmatpush2.bf16.xpose.msra.mxu0 0
    %1473 = vmatprep.subr.bf16.mxu0 0
    %1474 = vmatpush2.bf16.xpose.msra.mxu0 0
    %1475 = vmatprep.subr.bf16.mxu0 0
    %1476 = vmatpush2.bf16.xpose.msra.mxu0 0
    %1477 = vmatprep.mubr.bf16.mxu0 0
    %1478 = vmatmul.mubr.bf16.gmra.mxu0 %v1440
    %v1479 = vpop.f32.mrf.mxu0
    %v1480 = vadd.f32 0.0, %v1479
    %v1481 = vpop.f32.mrf.mxu0
    %v1482 = vpop.f32.mrf.mxu0
    %v1483 = vpop.f32.mrf.mxu0
    %1484 = vdwg.mxu0
    %1485 = vrot.lane.b32.xlu0 %v500, 64
    %v1486 = vpop.permute.xlu0 %1485
    %1487 = vrot.lane.b32.xlu0 %v512, 64
    %v1488 = vpop.permute.xlu0 %1487
    %v1490 = vsel %vm526, %v1486, 0
    %v1493 = vsel %vm526, %v1488, 0
    %1495 = vmatprep.subr.bf16.mxu0 0
    %1496 = vmatpush1.bf16.xpose.msra.mxu0 0
    %1497 = vmatprep.subr.bf16.mxu0 0
    %1498 = vmatpush1.bf16.xpose.msra.mxu0 0
    %1499 = vmatprep.subr.bf16.mxu0 0
    %1500 = vmatpush1.bf16.xpose.msra.mxu0 0
    %1501 = vmatprep.subr.bf16.mxu0 0
    %1502 = vmatpush1.bf16.xpose.msra.mxu0 0
    %1503 = vmatprep.subr.bf16.mxu0 0
    %1504 = vmatpush1.bf16.xpose.msra.mxu0 0
    %1505 = vmatprep.subr.bf16.mxu0 0
    %1506 = vmatpush1.bf16.xpose.msra.mxu0 0
    %1507 = vmatprep.subr.bf16.mxu0 0
    %1508 = vmatpush1.bf16.xpose.msra.mxu0 0
    %1509 = vmatprep.subr.bf16.mxu0 0
    %1510 = vmatpush1.bf16.xpose.msra.mxu0 %v1493
    %1511 = vmatprep.subr.bf16.mxu0 0
    %1512 = vmatpush2.bf16.xpose.msra.mxu0 0
    %1513 = vmatprep.subr.bf16.mxu0 0
    %1514 = vmatpush2.bf16.xpose.msra.mxu0 0
    %1515 = vmatprep.subr.bf16.mxu0 0
    %1516 = vmatpush2.bf16.xpose.msra.mxu0 0
    %1517 = vmatprep.subr.bf16.mxu0 0
    %1518 = vmatpush2.bf16.xpose.msra.mxu0 0
    %1519 = vmatprep.subr.bf16.mxu0 0
    %1520 = vmatpush2.bf16.xpose.msra.mxu0 0
    %1521 = vmatprep.subr.bf16.mxu0 0
    %1522 = vmatpush2.bf16.xpose.msra.mxu0 0
    %1523 = vmatprep.subr.bf16.mxu0 0
    %1524 = vmatpush2.bf16.xpose.msra.mxu0 0
    %1525 = vmatprep.subr.bf16.mxu0 0
    %1526 = vmatpush2.bf16.xpose.msra.mxu0 0
    %1527 = vmatprep.mubr.bf16.mxu0 0
    %1528 = vmatmul.mubr.bf16.gmra.mxu0 %v1490
    %v1529 = vpop.f32.mrf.mxu0
    %v1530 = vadd.f32 0.0, %v1529
    %v1531 = vpop.f32.mrf.mxu0
    %v1532 = vpop.f32.mrf.mxu0
    %v1533 = vpop.f32.mrf.mxu0
    %1534 = vdwg.mxu0
    %1535 = vrot.lane.b32.xlu0 %v501, 64
    %v1536 = vpop.permute.xlu0 %1535
    %1537 = vrot.lane.b32.xlu0 %v513, 64
    %v1538 = vpop.permute.xlu0 %1537
    %v1540 = vsel %vm526, %v1536, 0
    %v1543 = vsel %vm526, %v1538, 0
    %1545 = vmatprep.subr.bf16.mxu0 0
    %1546 = vmatpush1.bf16.xpose.msra.mxu0 0
    %1547 = vmatprep.subr.bf16.mxu0 0
    %1548 = vmatpush1.bf16.xpose.msra.mxu0 0
    %1549 = vmatprep.subr.bf16.mxu0 0
    %1550 = vmatpush1.bf16.xpose.msra.mxu0 0
    %1551 = vmatprep.subr.bf16.mxu0 0
    %1552 = vmatpush1.bf16.xpose.msra.mxu0 0
    %1553 = vmatprep.subr.bf16.mxu0 0
    %1554 = vmatpush1.bf16.xpose.msra.mxu0 0
    %1555 = vmatprep.subr.bf16.mxu0 0
    %1556 = vmatpush1.bf16.xpose.msra.mxu0 0
    %1557 = vmatprep.subr.bf16.mxu0 0
    %1558 = vmatpush1.bf16.xpose.msra.mxu0 0
    %1559 = vmatprep.subr.bf16.mxu0 0
    %1560 = vmatpush1.bf16.xpose.msra.mxu0 %v1543
    %1561 = vmatprep.subr.bf16.mxu0 0
    %1562 = vmatpush2.bf16.xpose.msra.mxu0 0
    %1563 = vmatprep.subr.bf16.mxu0 0
    %1564 = vmatpush2.bf16.xpose.msra.mxu0 0
    %1565 = vmatprep.subr.bf16.mxu0 0
    %1566 = vmatpush2.bf16.xpose.msra.mxu0 0
    %1567 = vmatprep.subr.bf16.mxu0 0
    %1568 = vmatpush2.bf16.xpose.msra.mxu0 0
    %1569 = vmatprep.subr.bf16.mxu0 0
    %1570 = vmatpush2.bf16.xpose.msra.mxu0 0
    %1571 = vmatprep.subr.bf16.mxu0 0
    %1572 = vmatpush2.bf16.xpose.msra.mxu0 0
    %1573 = vmatprep.subr.bf16.mxu0 0
    %1574 = vmatpush2.bf16.xpose.msra.mxu0 0
    %1575 = vmatprep.subr.bf16.mxu0 0
    %1576 = vmatpush2.bf16.xpose.msra.mxu0 0
    %1577 = vmatprep.mubr.bf16.mxu0 0
    %1578 = vmatmul.mubr.bf16.gmra.mxu0 %v1540
    %v1579 = vpop.f32.mrf.mxu0
    %v1580 = vadd.f32 0.0, %v1579
    %v1581 = vpop.f32.mrf.mxu0
    %v1582 = vpop.f32.mrf.mxu0
    %v1583 = vpop.f32.mrf.mxu0
    %1584 = vdwg.mxu0
    %v1585 = vsel %vm711, %v1430, -inf
    %1586 = vmax.xlane.f32.xlu0 %v1585
    %v1587 = vpop.xlane.xlu0 %1586
    %v1588 = vsel %vm711, %v1480, -inf
    %1589 = vmax.xlane.f32.xlu0 %v1588
    %v1590 = vpop.xlane.xlu0 %1589
    %v1591 = vsel %vm711, %v1530, -inf
    %1592 = vmax.xlane.f32.xlu0 %v1591
    %v1593 = vpop.xlane.xlu0 %1592
    %v1594 = vsel %vm711, %v1580, -inf
    %1595 = vmax.xlane.f32.xlu0 %v1594
    %v1596 = vpop.xlane.xlu0 %1595
    %v1597 = vsub.f32 %v1430, %v1587
    %v1598 = vsub.f32 %v1480, %v1590
    %v1599 = vsub.f32 %v1530, %v1593
    %v1600 = vsub.f32 %v1580, %v1596
    %v1601 = vmul.f32 %v1597, 1.442695
    %v1602 = vpow.pop %v1601
    %v1603 = vmul.f32 %v1598, 1.442695
    %v1604 = vpow.pop %v1603
    %v1605 = vmul.f32 %v1599, 1.442695
    %v1606 = vpow.pop %v1605
    %v1607 = vmul.f32 %v1600, 1.442695
    %v1608 = vpow.pop %v1607
    %v1609 = vsel %vm711, %v1602, 0.0
    %1610 = vadd.xlane.f32.xlu0 %v1609
    %v1611 = vpop.xlane.xlu0 %1610
    %v1612 = vsel %vm711, %v1604, 0.0
    %1613 = vadd.xlane.f32.xlu0 %v1612
    %v1614 = vpop.xlane.xlu0 %1613
    %v1615 = vsel %vm711, %v1606, 0.0
    %1616 = vadd.xlane.f32.xlu0 %v1615
    %v1617 = vpop.xlane.xlu0 %1616
    %v1618 = vsel %vm711, %v1608, 0.0
    %1619 = vadd.xlane.f32.xlu0 %v1618
    %v1620 = vpop.xlane.xlu0 %1619
    %v1621 = vrcp.pop %v1611
    %v1622 = vrcp.pop %v1614
    %v1623 = vrcp.pop %v1617
    %v1624 = vrcp.pop %v1620
    %v1625 = vmul.f32 %v1602, %v1621
    %v1626 = vmul.f32 %v1604, %v1622
    %v1627 = vmul.f32 %v1606, %v1623
    %v1628 = vmul.f32 %v1608, %v1624
    %v1629 = vpack.c.bf16 %v1625, %v1625
    %v1630 = vpack.c.bf16 %v1626, %v1626
    %v1631 = vpack.c.bf16 %v1627, %v1627
    %v1632 = vpack.c.bf16 %v1628, %v1628
    %1633 = vrot.lane.b32.xlu0 %v522, 64
    %v1634 = vpop.permute.xlu0 %1633
    %v1636 = vsel %vm711, %v1629, 0
    %v1639 = vsel %vm763, %v1634, 0
    %1641 = vmatprep.subr.bf16.mxu0 0
    %1642 = vmatpush1.bf16.msra.mxu0 0
    %1643 = vmatprep.subr.bf16.mxu0 0
    %1644 = vmatpush1.bf16.msra.mxu0 0
    %1645 = vmatprep.subr.bf16.mxu0 0
    %1646 = vmatpush1.bf16.msra.mxu0 0
    %1647 = vmatprep.subr.bf16.mxu0 0
    %1648 = vmatpush1.bf16.msra.mxu0 0
    %1649 = vmatprep.subr.bf16.mxu0 0
    %1650 = vmatpush1.bf16.msra.mxu0 0
    %1651 = vmatprep.subr.bf16.mxu0 0
    %1652 = vmatpush1.bf16.msra.mxu0 0
    %1653 = vmatprep.subr.bf16.mxu0 0
    %1654 = vmatpush1.bf16.msra.mxu0 0
    %1655 = vmatprep.subr.bf16.mxu0 0
    %1656 = vmatpush1.bf16.msra.mxu0 %v1639
    %1657 = vmatprep.subr.bf16.mxu0 0
    %1658 = vmatpush2.bf16.msra.mxu0 0
    %1659 = vmatprep.subr.bf16.mxu0 0
    %1660 = vmatpush2.bf16.msra.mxu0 0
    %1661 = vmatprep.subr.bf16.mxu0 0
    %1662 = vmatpush2.bf16.msra.mxu0 0
    %1663 = vmatprep.subr.bf16.mxu0 0
    %1664 = vmatpush2.bf16.msra.mxu0 0
    %1665 = vmatprep.subr.bf16.mxu0 0
    %1666 = vmatpush2.bf16.msra.mxu0 0
    %1667 = vmatprep.subr.bf16.mxu0 0
    %1668 = vmatpush2.bf16.msra.mxu0 0
    %1669 = vmatprep.subr.bf16.mxu0 0
    %1670 = vmatpush2.bf16.msra.mxu0 0
    %1671 = vmatprep.subr.bf16.mxu0 0
    %1672 = vmatpush2.bf16.msra.mxu0 0
    %1673 = vmatprep.mubr.bf16.mxu0 0
    %1674 = vmatmul.mubr.bf16.gmra.mxu0 %v1636
    %v1675 = vpop.f32.mrf.mxu0
    %v1676 = vadd.f32 0.0, %v1675
    %v1677 = vpop.f32.mrf.mxu0
    %v1678 = vpop.f32.mrf.mxu0
    %v1679 = vpop.f32.mrf.mxu0
    %1680 = vdwg.mxu0
    %1681 = vrot.lane.b32.xlu0 %v523, 64
    %v1682 = vpop.permute.xlu0 %1681
    %v1684 = vsel %vm711, %v1630, 0
    %v1687 = vsel %vm763, %v1682, 0
    %1689 = vmatprep.subr.bf16.mxu0 0
    %1690 = vmatpush1.bf16.msra.mxu0 0
    %1691 = vmatprep.subr.bf16.mxu0 0
    %1692 = vmatpush1.bf16.msra.mxu0 0
    %1693 = vmatprep.subr.bf16.mxu0 0
    %1694 = vmatpush1.bf16.msra.mxu0 0
    %1695 = vmatprep.subr.bf16.mxu0 0
    %1696 = vmatpush1.bf16.msra.mxu0 0
    %1697 = vmatprep.subr.bf16.mxu0 0
    %1698 = vmatpush1.bf16.msra.mxu0 0
    %1699 = vmatprep.subr.bf16.mxu0 0
    %1700 = vmatpush1.bf16.msra.mxu0 0
    %1701 = vmatprep.subr.bf16.mxu0 0
    %1702 = vmatpush1.bf16.msra.mxu0 0
    %1703 = vmatprep.subr.bf16.mxu0 0
    %1704 = vmatpush1.bf16.msra.mxu0 %v1687
    %1705 = vmatprep.subr.bf16.mxu0 0
    %1706 = vmatpush2.bf16.msra.mxu0 0
    %1707 = vmatprep.subr.bf16.mxu0 0
    %1708 = vmatpush2.bf16.msra.mxu0 0
    %1709 = vmatprep.subr.bf16.mxu0 0
    %1710 = vmatpush2.bf16.msra.mxu0 0
    %1711 = vmatprep.subr.bf16.mxu0 0
    %1712 = vmatpush2.bf16.msra.mxu0 0
    %1713 = vmatprep.subr.bf16.mxu0 0
    %1714 = vmatpush2.bf16.msra.mxu0 0
    %1715 = vmatprep.subr.bf16.mxu0 0
    %1716 = vmatpush2.bf16.msra.mxu0 0
    %1717 = vmatprep.subr.bf16.mxu0 0
    %1718 = vmatpush2.bf16.msra.mxu0 0
    %1719 = vmatprep.subr.bf16.mxu0 0
    %1720 = vmatpush2.bf16.msra.mxu0 0
    %1721 = vmatprep.mubr.bf16.mxu0 0
    %1722 = vmatmul.mubr.bf16.gmra.mxu0 %v1684
    %v1723 = vpop.f32.mrf.mxu0
    %v1724 = vadd.f32 0.0, %v1723
    %v1725 = vpop.f32.mrf.mxu0
    %v1726 = vpop.f32.mrf.mxu0
    %v1727 = vpop.f32.mrf.mxu0
    %1728 = vdwg.mxu0
    %1729 = vrot.lane.b32.xlu0 %v524, 64
    %v1730 = vpop.permute.xlu0 %1729
    %v1732 = vsel %vm711, %v1631, 0
    %v1735 = vsel %vm763, %v1730, 0
    %1737 = vmatprep.subr.bf16.mxu0 0
    %1738 = vmatpush1.bf16.msra.mxu0 0
    %1739 = vmatprep.subr.bf16.mxu0 0
    %1740 = vmatpush1.bf16.msra.mxu0 0
    %1741 = vmatprep.subr.bf16.mxu0 0
    %1742 = vmatpush1.bf16.msra.mxu0 0
    %1743 = vmatprep.subr.bf16.mxu0 0
    %1744 = vmatpush1.bf16.msra.mxu0 0
    %1745 = vmatprep.subr.bf16.mxu0 0
    %1746 = vmatpush1.bf16.msra.mxu0 0
    %1747 = vmatprep.subr.bf16.mxu0 0
    %1748 = vmatpush1.bf16.msra.mxu0 0
    %1749 = vmatprep.subr.bf16.mxu0 0
    %1750 = vmatpush1.bf16.msra.mxu0 0
    %1751 = vmatprep.subr.bf16.mxu0 0
    %1752 = vmatpush1.bf16.msra.mxu0 %v1735
    %1753 = vmatprep.subr.bf16.mxu0 0
    %1754 = vmatpush2.bf16.msra.mxu0 0
    %1755 = vmatprep.subr.bf16.mxu0 0
    %1756 = vmatpush2.bf16.msra.mxu0 0
    %1757 = vmatprep.subr.bf16.mxu0 0
    %1758 = vmatpush2.bf16.msra.mxu0 0
    %1759 = vmatprep.subr.bf16.mxu0 0
    %1760 = vmatpush2.bf16.msra.mxu0 0
    %1761 = vmatprep.subr.bf16.mxu0 0
    %1762 = vmatpush2.bf16.msra.mxu0 0
    %1763 = vmatprep.subr.bf16.mxu0 0
    %1764 = vmatpush2.bf16.msra.mxu0 0
    %1765 = vmatprep.subr.bf16.mxu0 0
    %1766 = vmatpush2.bf16.msra.mxu0 0
    %1767 = vmatprep.subr.bf16.mxu0 0
    %1768 = vmatpush2.bf16.msra.mxu0 0
    %1769 = vmatprep.mubr.bf16.mxu0 0
    %1770 = vmatmul.mubr.bf16.gmra.mxu0 %v1732
    %v1771 = vpop.f32.mrf.mxu0
    %v1772 = vadd.f32 0.0, %v1771
    %v1773 = vpop.f32.mrf.mxu0
    %v1774 = vpop.f32.mrf.mxu0
    %v1775 = vpop.f32.mrf.mxu0
    %1776 = vdwg.mxu0
    %1777 = vrot.lane.b32.xlu0 %v525, 64
    %v1778 = vpop.permute.xlu0 %1777
    %v1780 = vsel %vm711, %v1632, 0
    %v1783 = vsel %vm763, %v1778, 0
    %1785 = vmatprep.subr.bf16.mxu0 0
    %1786 = vmatpush1.bf16.msra.mxu0 0
    %1787 = vmatprep.subr.bf16.mxu0 0
    %1788 = vmatpush1.bf16.msra.mxu0 0
    %1789 = vmatprep.subr.bf16.mxu0 0
    %1790 = vmatpush1.bf16.msra.mxu0 0
    %1791 = vmatprep.subr.bf16.mxu0 0
    %1792 = vmatpush1.bf16.msra.mxu0 0
    %1793 = vmatprep.subr.bf16.mxu0 0
    %1794 = vmatpush1.bf16.msra.mxu0 0
    %1795 = vmatprep.subr.bf16.mxu0 0
    %1796 = vmatpush1.bf16.msra.mxu0 0
    %1797 = vmatprep.subr.bf16.mxu0 0
    %1798 = vmatpush1.bf16.msra.mxu0 0
    %1799 = vmatprep.subr.bf16.mxu0 0
    %1800 = vmatpush1.bf16.msra.mxu0 %v1783
    %1801 = vmatprep.subr.bf16.mxu0 0
    %1802 = vmatpush2.bf16.msra.mxu0 0
    %1803 = vmatprep.subr.bf16.mxu0 0
    %1804 = vmatpush2.bf16.msra.mxu0 0
    %1805 = vmatprep.subr.bf16.mxu0 0
    %1806 = vmatpush2.bf16.msra.mxu0 0
    %1807 = vmatprep.subr.bf16.mxu0 0
    %1808 = vmatpush2.bf16.msra.mxu0 0
    %1809 = vmatprep.subr.bf16.mxu0 0
    %1810 = vmatpush2.bf16.msra.mxu0 0
    %1811 = vmatprep.subr.bf16.mxu0 0
    %1812 = vmatpush2.bf16.msra.mxu0 0
    %1813 = vmatprep.subr.bf16.mxu0 0
    %1814 = vmatpush2.bf16.msra.mxu0 0
    %1815 = vmatprep.subr.bf16.mxu0 0
    %1816 = vmatpush2.bf16.msra.mxu0 0
    %1817 = vmatprep.mubr.bf16.mxu0 0
    %1818 = vmatmul.mubr.bf16.gmra.mxu0 %v1780
    %v1819 = vpop.f32.mrf.mxu0
    %v1820 = vadd.f32 0.0, %v1819
    %v1821 = vpop.f32.mrf.mxu0
    %v1822 = vpop.f32.mrf.mxu0
    %v1823 = vpop.f32.mrf.mxu0
    %1824 = vdwg.mxu0
    %1825 = vrot.lane.b32.xlu0 %v498, 32
    %v1826 = vpop.permute.xlu0 %1825
    %1827 = vrot.lane.b32.xlu0 %v510, 32
    %v1828 = vpop.permute.xlu0 %1827
    %v1830 = vsel %vm526, %v1826, 0
    %v1833 = vsel %vm526, %v1828, 0
    %1835 = vmatprep.subr.bf16.mxu0 0
    %1836 = vmatpush1.bf16.xpose.msra.mxu0 0
    %1837 = vmatprep.subr.bf16.mxu0 0
    %1838 = vmatpush1.bf16.xpose.msra.mxu0 0
    %1839 = vmatprep.subr.bf16.mxu0 0
    %1840 = vmatpush1.bf16.xpose.msra.mxu0 0
    %1841 = vmatprep.subr.bf16.mxu0 0
    %1842 = vmatpush1.bf16.xpose.msra.mxu0 0
    %1843 = vmatprep.subr.bf16.mxu0 0
    %1844 = vmatpush1.bf16.xpose.msra.mxu0 0
    %1845 = vmatprep.subr.bf16.mxu0 0
    %1846 = vmatpush1.bf16.xpose.msra.mxu0 0
    %1847 = vmatprep.subr.bf16.mxu0 0
    %1848 = vmatpush1.bf16.xpose.msra.mxu0 0
    %1849 = vmatprep.subr.bf16.mxu0 0
    %1850 = vmatpush1.bf16.xpose.msra.mxu0 %v1833
    %1851 = vmatprep.subr.bf16.mxu0 0
    %1852 = vmatpush2.bf16.xpose.msra.mxu0 0
    %1853 = vmatprep.subr.bf16.mxu0 0
    %1854 = vmatpush2.bf16.xpose.msra.mxu0 0
    %1855 = vmatprep.subr.bf16.mxu0 0
    %1856 = vmatpush2.bf16.xpose.msra.mxu0 0
    %1857 = vmatprep.subr.bf16.mxu0 0
    %1858 = vmatpush2.bf16.xpose.msra.mxu0 0
    %1859 = vmatprep.subr.bf16.mxu0 0
    %1860 = vmatpush2.bf16.xpose.msra.mxu0 0
    %1861 = vmatprep.subr.bf16.mxu0 0
    %1862 = vmatpush2.bf16.xpose.msra.mxu0 0
    %1863 = vmatprep.subr.bf16.mxu0 0
    %1864 = vmatpush2.bf16.xpose.msra.mxu0 0
    %1865 = vmatprep.subr.bf16.mxu0 0
    %1866 = vmatpush2.bf16.xpose.msra.mxu0 0
    %1867 = vmatprep.mubr.bf16.mxu0 0
    %1868 = vmatmul.mubr.bf16.gmra.mxu0 %v1830
    %v1869 = vpop.f32.mrf.mxu0
    %v1870 = vadd.f32 0.0, %v1869
    %v1871 = vpop.f32.mrf.mxu0
    %v1872 = vpop.f32.mrf.mxu0
    %v1873 = vpop.f32.mrf.mxu0
    %1874 = vdwg.mxu0
    %1875 = vrot.lane.b32.xlu0 %v499, 32
    %v1876 = vpop.permute.xlu0 %1875
    %1877 = vrot.lane.b32.xlu0 %v511, 32
    %v1878 = vpop.permute.xlu0 %1877
    %v1880 = vsel %vm526, %v1876, 0
    %v1883 = vsel %vm526, %v1878, 0
    %1885 = vmatprep.subr.bf16.mxu0 0
    %1886 = vmatpush1.bf16.xpose.msra.mxu0 0
    %1887 = vmatprep.subr.bf16.mxu0 0
    %1888 = vmatpush1.bf16.xpose.msra.mxu0 0
    %1889 = vmatprep.subr.bf16.mxu0 0
    %1890 = vmatpush1.bf16.xpose.msra.mxu0 0
    %1891 = vmatprep.subr.bf16.mxu0 0
    %1892 = vmatpush1.bf16.xpose.msra.mxu0 0
    %1893 = vmatprep.subr.bf16.mxu0 0
    %1894 = vmatpush1.bf16.xpose.msra.mxu0 0
    %1895 = vmatprep.subr.bf16.mxu0 0
    %1896 = vmatpush1.bf16.xpose.msra.mxu0 0
    %1897 = vmatprep.subr.bf16.mxu0 0
    %1898 = vmatpush1.bf16.xpose.msra.mxu0 0
    %1899 = vmatprep.subr.bf16.mxu0 0
    %1900 = vmatpush1.bf16.xpose.msra.mxu0 %v1883
    %1901 = vmatprep.subr.bf16.mxu0 0
    %1902 = vmatpush2.bf16.xpose.msra.mxu0 0
    %1903 = vmatprep.subr.bf16.mxu0 0
    %1904 = vmatpush2.bf16.xpose.msra.mxu0 0
    %1905 = vmatprep.subr.bf16.mxu0 0
    %1906 = vmatpush2.bf16.xpose.msra.mxu0 0
    %1907 = vmatprep.subr.bf16.mxu0 0
    %1908 = vmatpush2.bf16.xpose.msra.mxu0 0
    %1909 = vmatprep.subr.bf16.mxu0 0
    %1910 = vmatpush2.bf16.xpose.msra.mxu0 0
    %1911 = vmatprep.subr.bf16.mxu0 0
    %1912 = vmatpush2.bf16.xpose.msra.mxu0 0
    %1913 = vmatprep.subr.bf16.mxu0 0
    %1914 = vmatpush2.bf16.xpose.msra.mxu0 0
    %1915 = vmatprep.subr.bf16.mxu0 0
    %1916 = vmatpush2.bf16.xpose.msra.mxu0 0
    %1917 = vmatprep.mubr.bf16.mxu0 0
    %1918 = vmatmul.mubr.bf16.gmra.mxu0 %v1880
    %v1919 = vpop.f32.mrf.mxu0
    %v1920 = vadd.f32 0.0, %v1919
    %v1921 = vpop.f32.mrf.mxu0
    %v1922 = vpop.f32.mrf.mxu0
    %v1923 = vpop.f32.mrf.mxu0
    %1924 = vdwg.mxu0
    %1925 = vrot.lane.b32.xlu0 %v500, 32
    %v1926 = vpop.permute.xlu0 %1925
    %1927 = vrot.lane.b32.xlu0 %v512, 32
    %v1928 = vpop.permute.xlu0 %1927
    %v1930 = vsel %vm526, %v1926, 0
    %v1933 = vsel %vm526, %v1928, 0
    %1935 = vmatprep.subr.bf16.mxu0 0
    %1936 = vmatpush1.bf16.xpose.msra.mxu0 0
    %1937 = vmatprep.subr.bf16.mxu0 0
    %1938 = vmatpush1.bf16.xpose.msra.mxu0 0
    %1939 = vmatprep.subr.bf16.mxu0 0
    %1940 = vmatpush1.bf16.xpose.msra.mxu0 0
    %1941 = vmatprep.subr.bf16.mxu0 0
    %1942 = vmatpush1.bf16.xpose.msra.mxu0 0
    %1943 = vmatprep.subr.bf16.mxu0 0
    %1944 = vmatpush1.bf16.xpose.msra.mxu0 0
    %1945 = vmatprep.subr.bf16.mxu0 0
    %1946 = vmatpush1.bf16.xpose.msra.mxu0 0
    %1947 = vmatprep.subr.bf16.mxu0 0
    %1948 = vmatpush1.bf16.xpose.msra.mxu0 0
    %1949 = vmatprep.subr.bf16.mxu0 0
    %1950 = vmatpush1.bf16.xpose.msra.mxu0 %v1933
    %1951 = vmatprep.subr.bf16.mxu0 0
    %1952 = vmatpush2.bf16.xpose.msra.mxu0 0
    %1953 = vmatprep.subr.bf16.mxu0 0
    %1954 = vmatpush2.bf16.xpose.msra.mxu0 0
    %1955 = vmatprep.subr.bf16.mxu0 0
    %1956 = vmatpush2.bf16.xpose.msra.mxu0 0
    %1957 = vmatprep.subr.bf16.mxu0 0
    %1958 = vmatpush2.bf16.xpose.msra.mxu0 0
    %1959 = vmatprep.subr.bf16.mxu0 0
    %1960 = vmatpush2.bf16.xpose.msra.mxu0 0
    %1961 = vmatprep.subr.bf16.mxu0 0
    %1962 = vmatpush2.bf16.xpose.msra.mxu0 0
    %1963 = vmatprep.subr.bf16.mxu0 0
    %1964 = vmatpush2.bf16.xpose.msra.mxu0 0
    %1965 = vmatprep.subr.bf16.mxu0 0
    %1966 = vmatpush2.bf16.xpose.msra.mxu0 0
    %1967 = vmatprep.mubr.bf16.mxu0 0
    %1968 = vmatmul.mubr.bf16.gmra.mxu0 %v1930
    %v1969 = vpop.f32.mrf.mxu0
    %v1970 = vadd.f32 0.0, %v1969
    %v1971 = vpop.f32.mrf.mxu0
    %v1972 = vpop.f32.mrf.mxu0
    %v1973 = vpop.f32.mrf.mxu0
    %1974 = vdwg.mxu0
    %1975 = vrot.lane.b32.xlu0 %v501, 32
    %v1976 = vpop.permute.xlu0 %1975
    %1977 = vrot.lane.b32.xlu0 %v513, 32
    %v1978 = vpop.permute.xlu0 %1977
    %v1980 = vsel %vm526, %v1976, 0
    %v1983 = vsel %vm526, %v1978, 0
    %1985 = vmatprep.subr.bf16.mxu0 0
    %1986 = vmatpush1.bf16.xpose.msra.mxu0 0
    %1987 = vmatprep.subr.bf16.mxu0 0
    %1988 = vmatpush1.bf16.xpose.msra.mxu0 0
    %1989 = vmatprep.subr.bf16.mxu0 0
    %1990 = vmatpush1.bf16.xpose.msra.mxu0 0
    %1991 = vmatprep.subr.bf16.mxu0 0
    %1992 = vmatpush1.bf16.xpose.msra.mxu0 0
    %1993 = vmatprep.subr.bf16.mxu0 0
    %1994 = vmatpush1.bf16.xpose.msra.mxu0 0
    %1995 = vmatprep.subr.bf16.mxu0 0
    %1996 = vmatpush1.bf16.xpose.msra.mxu0 0
    %1997 = vmatprep.subr.bf16.mxu0 0
    %1998 = vmatpush1.bf16.xpose.msra.mxu0 0
    %1999 = vmatprep.subr.bf16.mxu0 0
    %2000 = vmatpush1.bf16.xpose.msra.mxu0 %v1983
    %2001 = vmatprep.subr.bf16.mxu0 0
    %2002 = vmatpush2.bf16.xpose.msra.mxu0 0
    %2003 = vmatprep.subr.bf16.mxu0 0
    %2004 = vmatpush2.bf16.xpose.msra.mxu0 0
    %2005 = vmatprep.subr.bf16.mxu0 0
    %2006 = vmatpush2.bf16.xpose.msra.mxu0 0
    %2007 = vmatprep.subr.bf16.mxu0 0
    %2008 = vmatpush2.bf16.xpose.msra.mxu0 0
    %2009 = vmatprep.subr.bf16.mxu0 0
    %2010 = vmatpush2.bf16.xpose.msra.mxu0 0
    %2011 = vmatprep.subr.bf16.mxu0 0
    %2012 = vmatpush2.bf16.xpose.msra.mxu0 0
    %2013 = vmatprep.subr.bf16.mxu0 0
    %2014 = vmatpush2.bf16.xpose.msra.mxu0 0
    %2015 = vmatprep.subr.bf16.mxu0 0
    %2016 = vmatpush2.bf16.xpose.msra.mxu0 0
    %2017 = vmatprep.mubr.bf16.mxu0 0
    %2018 = vmatmul.mubr.bf16.gmra.mxu0 %v1980
    %v2019 = vpop.f32.mrf.mxu0
    %v2020 = vadd.f32 0.0, %v2019
    %v2021 = vpop.f32.mrf.mxu0
    %v2022 = vpop.f32.mrf.mxu0
    %v2023 = vpop.f32.mrf.mxu0
    %2024 = vdwg.mxu0
    %v2025 = vsel %vm711, %v1870, -inf
    %2026 = vmax.xlane.f32.xlu0 %v2025
    %v2027 = vpop.xlane.xlu0 %2026
    %v2028 = vsel %vm711, %v1920, -inf
    %2029 = vmax.xlane.f32.xlu0 %v2028
    %v2030 = vpop.xlane.xlu0 %2029
    %v2031 = vsel %vm711, %v1970, -inf
    %2032 = vmax.xlane.f32.xlu0 %v2031
    %v2033 = vpop.xlane.xlu0 %2032
    %v2034 = vsel %vm711, %v2020, -inf
    %2035 = vmax.xlane.f32.xlu0 %v2034
    %v2036 = vpop.xlane.xlu0 %2035
    %v2037 = vsub.f32 %v1870, %v2027
    %v2038 = vsub.f32 %v1920, %v2030
    %v2039 = vsub.f32 %v1970, %v2033
    %v2040 = vsub.f32 %v2020, %v2036
    %v2041 = vmul.f32 %v2037, 1.442695
    %v2042 = vpow.pop %v2041
    %v2043 = vmul.f32 %v2038, 1.442695
    %v2044 = vpow.pop %v2043
    %v2045 = vmul.f32 %v2039, 1.442695
    %v2046 = vpow.pop %v2045
    %v2047 = vmul.f32 %v2040, 1.442695
    %v2048 = vpow.pop %v2047
    %v2049 = vsel %vm711, %v2042, 0.0
    %2050 = vadd.xlane.f32.xlu0 %v2049
    %v2051 = vpop.xlane.xlu0 %2050
    %v2052 = vsel %vm711, %v2044, 0.0
    %2053 = vadd.xlane.f32.xlu0 %v2052
    %v2054 = vpop.xlane.xlu0 %2053
    %v2055 = vsel %vm711, %v2046, 0.0
    %2056 = vadd.xlane.f32.xlu0 %v2055
    %v2057 = vpop.xlane.xlu0 %2056
    %v2058 = vsel %vm711, %v2048, 0.0
    %2059 = vadd.xlane.f32.xlu0 %v2058
    %v2060 = vpop.xlane.xlu0 %2059
    %v2061 = vrcp.pop %v2051
    %v2062 = vrcp.pop %v2054
    %v2063 = vrcp.pop %v2057
    %v2064 = vrcp.pop %v2060
    %v2065 = vmul.f32 %v2042, %v2061
    %v2066 = vmul.f32 %v2044, %v2062
    %v2067 = vmul.f32 %v2046, %v2063
    %v2068 = vmul.f32 %v2048, %v2064
    %v2069 = vpack.c.bf16 %v2065, %v2065
    %v2070 = vpack.c.bf16 %v2066, %v2066
    %v2071 = vpack.c.bf16 %v2067, %v2067
    %v2072 = vpack.c.bf16 %v2068, %v2068
    %2073 = vrot.lane.b32.xlu0 %v522, 32
    %v2074 = vpop.permute.xlu0 %2073
    %v2076 = vsel %vm711, %v2069, 0
    %v2079 = vsel %vm763, %v2074, 0
    %2081 = vmatprep.subr.bf16.mxu0 0
    %2082 = vmatpush1.bf16.msra.mxu0 0
    %2083 = vmatprep.subr.bf16.mxu0 0
    %2084 = vmatpush1.bf16.msra.mxu0 0
    %2085 = vmatprep.subr.bf16.mxu0 0
    %2086 = vmatpush1.bf16.msra.mxu0 0
    %2087 = vmatprep.subr.bf16.mxu0 0
    %2088 = vmatpush1.bf16.msra.mxu0 0
    %2089 = vmatprep.subr.bf16.mxu0 0
    %2090 = vmatpush1.bf16.msra.mxu0 0
    %2091 = vmatprep.subr.bf16.mxu0 0
    %2092 = vmatpush1.bf16.msra.mxu0 0
    %2093 = vmatprep.subr.bf16.mxu0 0
    %2094 = vmatpush1.bf16.msra.mxu0 0
    %2095 = vmatprep.subr.bf16.mxu0 0
    %2096 = vmatpush1.bf16.msra.mxu0 %v2079
    %2097 = vmatprep.subr.bf16.mxu0 0
    %2098 = vmatpush2.bf16.msra.mxu0 0
    %2099 = vmatprep.subr.bf16.mxu0 0
    %2100 = vmatpush2.bf16.msra.mxu0 0
    %2101 = vmatprep.subr.bf16.mxu0 0
    %2102 = vmatpush2.bf16.msra.mxu0 0
    %2103 = vmatprep.subr.bf16.mxu0 0
    %2104 = vmatpush2.bf16.msra.mxu0 0
    %2105 = vmatprep.subr.bf16.mxu0 0
    %2106 = vmatpush2.bf16.msra.mxu0 0
    %2107 = vmatprep.subr.bf16.mxu0 0
    %2108 = vmatpush2.bf16.msra.mxu0 0
    %2109 = vmatprep.subr.bf16.mxu0 0
    %2110 = vmatpush2.bf16.msra.mxu0 0
    %2111 = vmatprep.subr.bf16.mxu0 0
    %2112 = vmatpush2.bf16.msra.mxu0 0
    %2113 = vmatprep.mubr.bf16.mxu0 0
    %2114 = vmatmul.mubr.bf16.gmra.mxu0 %v2076
    %v2115 = vpop.f32.mrf.mxu0
    %v2116 = vadd.f32 0.0, %v2115
    %v2117 = vpop.f32.mrf.mxu0
    %v2118 = vpop.f32.mrf.mxu0
    %v2119 = vpop.f32.mrf.mxu0
    %2120 = vdwg.mxu0
    %2121 = vrot.lane.b32.xlu0 %v523, 32
    %v2122 = vpop.permute.xlu0 %2121
    %v2124 = vsel %vm711, %v2070, 0
    %v2127 = vsel %vm763, %v2122, 0
    %2129 = vmatprep.subr.bf16.mxu0 0
    %2130 = vmatpush1.bf16.msra.mxu0 0
    %2131 = vmatprep.subr.bf16.mxu0 0
    %2132 = vmatpush1.bf16.msra.mxu0 0
    %2133 = vmatprep.subr.bf16.mxu0 0
    %2134 = vmatpush1.bf16.msra.mxu0 0
    %2135 = vmatprep.subr.bf16.mxu0 0
    %2136 = vmatpush1.bf16.msra.mxu0 0
    %2137 = vmatprep.subr.bf16.mxu0 0
    %2138 = vmatpush1.bf16.msra.mxu0 0
    %2139 = vmatprep.subr.bf16.mxu0 0
    %2140 = vmatpush1.bf16.msra.mxu0 0
    %2141 = vmatprep.subr.bf16.mxu0 0
    %2142 = vmatpush1.bf16.msra.mxu0 0
    %2143 = vmatprep.subr.bf16.mxu0 0
    %2144 = vmatpush1.bf16.msra.mxu0 %v2127
    %2145 = vmatprep.subr.bf16.mxu0 0
    %2146 = vmatpush2.bf16.msra.mxu0 0
    %2147 = vmatprep.subr.bf16.mxu0 0
    %2148 = vmatpush2.bf16.msra.mxu0 0
    %2149 = vmatprep.subr.bf16.mxu0 0
    %2150 = vmatpush2.bf16.msra.mxu0 0
    %2151 = vmatprep.subr.bf16.mxu0 0
    %2152 = vmatpush2.bf16.msra.mxu0 0
    %2153 = vmatprep.subr.bf16.mxu0 0
    %2154 = vmatpush2.bf16.msra.mxu0 0
    %2155 = vmatprep.subr.bf16.mxu0 0
    %2156 = vmatpush2.bf16.msra.mxu0 0
    %2157 = vmatprep.subr.bf16.mxu0 0
    %2158 = vmatpush2.bf16.msra.mxu0 0
    %2159 = vmatprep.subr.bf16.mxu0 0
    %2160 = vmatpush2.bf16.msra.mxu0 0
    %2161 = vmatprep.mubr.bf16.mxu0 0
    %2162 = vmatmul.mubr.bf16.gmra.mxu0 %v2124
    %v2163 = vpop.f32.mrf.mxu0
    %v2164 = vadd.f32 0.0, %v2163
    %v2165 = vpop.f32.mrf.mxu0
    %v2166 = vpop.f32.mrf.mxu0
    %v2167 = vpop.f32.mrf.mxu0
    %2168 = vdwg.mxu0
    %2169 = vrot.lane.b32.xlu0 %v524, 32
    %v2170 = vpop.permute.xlu0 %2169
    %v2172 = vsel %vm711, %v2071, 0
    %v2175 = vsel %vm763, %v2170, 0
    %2177 = vmatprep.subr.bf16.mxu0 0
    %2178 = vmatpush1.bf16.msra.mxu0 0
    %2179 = vmatprep.subr.bf16.mxu0 0
    %2180 = vmatpush1.bf16.msra.mxu0 0
    %2181 = vmatprep.subr.bf16.mxu0 0
    %2182 = vmatpush1.bf16.msra.mxu0 0
    %2183 = vmatprep.subr.bf16.mxu0 0
    %2184 = vmatpush1.bf16.msra.mxu0 0
    %2185 = vmatprep.subr.bf16.mxu0 0
    %2186 = vmatpush1.bf16.msra.mxu0 0
    %2187 = vmatprep.subr.bf16.mxu0 0
    %2188 = vmatpush1.bf16.msra.mxu0 0
    %2189 = vmatprep.subr.bf16.mxu0 0
    %2190 = vmatpush1.bf16.msra.mxu0 0
    %2191 = vmatprep.subr.bf16.mxu0 0
    %2192 = vmatpush1.bf16.msra.mxu0 %v2175
    %2193 = vmatprep.subr.bf16.mxu0 0
    %2194 = vmatpush2.bf16.msra.mxu0 0
    %2195 = vmatprep.subr.bf16.mxu0 0
    %2196 = vmatpush2.bf16.msra.mxu0 0
    %2197 = vmatprep.subr.bf16.mxu0 0
    %2198 = vmatpush2.bf16.msra.mxu0 0
    %2199 = vmatprep.subr.bf16.mxu0 0
    %2200 = vmatpush2.bf16.msra.mxu0 0
    %2201 = vmatprep.subr.bf16.mxu0 0
    %2202 = vmatpush2.bf16.msra.mxu0 0
    %2203 = vmatprep.subr.bf16.mxu0 0
    %2204 = vmatpush2.bf16.msra.mxu0 0
    %2205 = vmatprep.subr.bf16.mxu0 0
    %2206 = vmatpush2.bf16.msra.mxu0 0
    %2207 = vmatprep.subr.bf16.mxu0 0
    %2208 = vmatpush2.bf16.msra.mxu0 0
    %2209 = vmatprep.mubr.bf16.mxu0 0
    %2210 = vmatmul.mubr.bf16.gmra.mxu0 %v2172
    %v2211 = vpop.f32.mrf.mxu0
    %v2212 = vadd.f32 0.0, %v2211
    %v2213 = vpop.f32.mrf.mxu0
    %v2214 = vpop.f32.mrf.mxu0
    %v2215 = vpop.f32.mrf.mxu0
    %2216 = vdwg.mxu0
    %2217 = vrot.lane.b32.xlu0 %v525, 32
    %v2218 = vpop.permute.xlu0 %2217
    %v2220 = vsel %vm711, %v2072, 0
    %v2223 = vsel %vm763, %v2218, 0
    %2225 = vmatprep.subr.bf16.mxu0 0
    %2226 = vmatpush1.bf16.msra.mxu0 0
    %2227 = vmatprep.subr.bf16.mxu0 0
    %2228 = vmatpush1.bf16.msra.mxu0 0
    %2229 = vmatprep.subr.bf16.mxu0 0
    %2230 = vmatpush1.bf16.msra.mxu0 0
    %2231 = vmatprep.subr.bf16.mxu0 0
    %2232 = vmatpush1.bf16.msra.mxu0 0
    %2233 = vmatprep.subr.bf16.mxu0 0
    %2234 = vmatpush1.bf16.msra.mxu0 0
    %2235 = vmatprep.subr.bf16.mxu0 0
    %2236 = vmatpush1.bf16.msra.mxu0 0
    %2237 = vmatprep.subr.bf16.mxu0 0
    %2238 = vmatpush1.bf16.msra.mxu0 0
    %2239 = vmatprep.subr.bf16.mxu0 0
    %2240 = vmatpush1.bf16.msra.mxu0 %v2223
    %2241 = vmatprep.subr.bf16.mxu0 0
    %2242 = vmatpush2.bf16.msra.mxu0 0
    %2243 = vmatprep.subr.bf16.mxu0 0
    %2244 = vmatpush2.bf16.msra.mxu0 0
    %2245 = vmatprep.subr.bf16.mxu0 0
    %2246 = vmatpush2.bf16.msra.mxu0 0
    %2247 = vmatprep.subr.bf16.mxu0 0
    %2248 = vmatpush2.bf16.msra.mxu0 0
    %2249 = vmatprep.subr.bf16.mxu0 0
    %2250 = vmatpush2.bf16.msra.mxu0 0
    %2251 = vmatprep.subr.bf16.mxu0 0
    %2252 = vmatpush2.bf16.msra.mxu0 0
    %2253 = vmatprep.subr.bf16.mxu0 0
    %2254 = vmatpush2.bf16.msra.mxu0 0
    %2255 = vmatprep.subr.bf16.mxu0 0
    %2256 = vmatpush2.bf16.msra.mxu0 0
    %2257 = vmatprep.mubr.bf16.mxu0 0
    %2258 = vmatmul.mubr.bf16.gmra.mxu0 %v2220
    %v2259 = vpop.f32.mrf.mxu0
    %v2260 = vadd.f32 0.0, %v2259
    %v2261 = vpop.f32.mrf.mxu0
    %v2262 = vpop.f32.mrf.mxu0
    %v2263 = vpop.f32.mrf.mxu0
    %2264 = vdwg.mxu0
    %2269 = vrot.lane.b32.xlu0 %v1236, 32
    %v2270 = vpop.permute.xlu0 %2269
    %2271 = vrot.lane.b32.xlu0 %v1284, 32
    %v2272 = vpop.permute.xlu0 %2271
    %2273 = vrot.lane.b32.xlu0 %v1332, 32
    %v2274 = vpop.permute.xlu0 %2273
    %2275 = vrot.lane.b32.xlu0 %v1380, 32
    %v2276 = vpop.permute.xlu0 %2275
    %2285 = vrot.lane.b32.xlu0 %v1676, 64
    %v2286 = vpop.permute.xlu0 %2285
    %2287 = vrot.lane.b32.xlu0 %v1724, 64
    %v2288 = vpop.permute.xlu0 %2287
    %2289 = vrot.lane.b32.xlu0 %v1772, 64
    %v2290 = vpop.permute.xlu0 %2289
    %2291 = vrot.lane.b32.xlu0 %v1820, 64
    %v2292 = vpop.permute.xlu0 %2291
    %2301 = vrot.lane.b32.xlu0 %v2116, 96
    %v2302 = vpop.permute.xlu0 %2301
    %2303 = vrot.lane.b32.xlu0 %v2164, 96
    %v2304 = vpop.permute.xlu0 %2303
    %2305 = vrot.lane.b32.xlu0 %v2212, 96
    %v2306 = vpop.permute.xlu0 %2305
    %2307 = vrot.lane.b32.xlu0 %v2260, 96
    %v2308 = vpop.permute.xlu0 %2307
    %v2313 = vsel %vm526, %v802, %v2270
    %v2314 = vsel %vm526, %v848, %v2272
    %v2315 = vsel %vm526, %v894, %v2274
    %v2316 = vsel %vm526, %v940, %v2276
    %vm2317 = vcmask 523264
    %v2318 = vsel %vm2317, %v2313, %v2286
    %v2319 = vsel %vm2317, %v2314, %v2288
    %v2320 = vsel %vm2317, %v2315, %v2290
    %v2321 = vsel %vm2317, %v2316, %v2292
    %vm2322 = vcmask 785408
    %v2323 = vsel %vm2322, %v2318, %v2302
    %v2324 = vsel %vm2322, %v2319, %v2304
    %v2325 = vsel %vm2322, %v2320, %v2306
    %v2326 = vsel %vm2322, %v2321, %v2308
    %v2327 = vpack.c.bf16 %v2324, %v2323
    %v2328 = vpack.c.bf16 %v2326, %v2325
    %v2329 = vld [vmem:[%s6] sm:$0xf]
    %v2330 = vld [vmem:[%s6 + $0x4] sm:$0xf]
    %v2331 = vld [vmem:[%s6 + $0x8] sm:$0xf]
    %v2332 = vld [vmem:[%s6 + $0xc] sm:$0xf]
    %v2333 = vld [vmem:[%s6 + $0x10] sm:$0xf]
    %v2334 = vld [vmem:[%s6 + $0x14] sm:$0xf]
    %v2335 = vld [vmem:[%s6 + $0x18] sm:$0xf]
    %v2336 = vld [vmem:[%s6 + $0x1c] sm:$0xf]
    %v2337 = vld [vmem:[%s6 + $0x20] sm:$0xf]
    %v2338 = vld [vmem:[%s6 + $0x24] sm:$0xf]
    %v2339 = vld [vmem:[%s6 + $0x28] sm:$0xf]
    %v2340 = vld [vmem:[%s6 + $0x2c] sm:$0xf]
    %v2341 = vld [vmem:[%s6 + $0x30] sm:$0xf]
    %v2342 = vld [vmem:[%s6 + $0x34] sm:$0xf]
    %v2343 = vld [vmem:[%s6 + $0x38] sm:$0xf]
    %v2344 = vld [vmem:[%s6 + $0x3c] sm:$0xf]
    %v2361 = vunpack.c.l.b16 %v2329
    %v2362 = vunpack.c.l.b16 %v2330
    %v2363 = vunpack.c.l.b16 %v2331
    %v2364 = vunpack.c.l.b16 %v2332
    %v2365 = vunpack.c.l.b16 %v2333
    %v2366 = vunpack.c.l.b16 %v2334
    %v2367 = vunpack.c.l.b16 %v2335
    %v2368 = vunpack.c.l.b16 %v2336
    %v2369 = vunpack.c.l.b16 %v2337
    %v2370 = vunpack.c.l.b16 %v2338
    %v2371 = vunpack.c.l.b16 %v2339
    %v2372 = vunpack.c.l.b16 %v2340
    %v2373 = vunpack.c.l.b16 %v2341
    %v2374 = vunpack.c.l.b16 %v2342
    %v2375 = vunpack.c.l.b16 %v2343
    %v2376 = vunpack.c.l.b16 %v2344
    %v2377 = vpack.c.b16 %v2362, %v2361
    %v2378 = vpack.c.b16 %v2364, %v2363
    %v2379 = vpack.c.b16 %v2366, %v2365
    %v2380 = vpack.c.b16 %v2368, %v2367
    %v2381 = vpack.c.b16 %v2370, %v2369
    %v2382 = vpack.c.b16 %v2372, %v2371
    %v2383 = vpack.c.b16 %v2374, %v2373
    %v2384 = vpack.c.b16 %v2376, %v2375
    %2393 = vmatprep.subr.bf16.mxu0 0
    %2394 = vmatpush1.bf16.msra.mxu0 %v2384
    %2395 = vmatprep.subr.bf16.mxu0 0
    %2396 = vmatpush1.bf16.msra.mxu0 %v2383
    %2397 = vmatprep.subr.bf16.mxu0 0
    %2398 = vmatpush1.bf16.msra.mxu0 %v2382
    %2399 = vmatprep.subr.bf16.mxu0 0
    %2400 = vmatpush1.bf16.msra.mxu0 %v2381
    %2401 = vmatprep.subr.bf16.mxu0 0
    %2402 = vmatpush1.bf16.msra.mxu0 %v2380
    %2403 = vmatprep.subr.bf16.mxu0 0
    %2404 = vmatpush1.bf16.msra.mxu0 %v2379
    %2405 = vmatprep.subr.bf16.mxu0 0
    %2406 = vmatpush1.bf16.msra.mxu0 %v2378
    %2407 = vmatprep.subr.bf16.mxu0 0
    %2408 = vmatpush1.bf16.msra.mxu0 %v2377
    %2409 = vmatprep.subr.bf16.mxu0 0
    %2410 = vmatpush2.bf16.msra.mxu0 0
    %2411 = vmatprep.subr.bf16.mxu0 0
    %2412 = vmatpush2.bf16.msra.mxu0 0
    %2413 = vmatprep.subr.bf16.mxu0 0
    %2414 = vmatpush2.bf16.msra.mxu0 0
    %2415 = vmatprep.subr.bf16.mxu0 0
    %2416 = vmatpush2.bf16.msra.mxu0 0
    %2417 = vmatprep.subr.bf16.mxu0 0
    %2418 = vmatpush2.bf16.msra.mxu0 0
    %2419 = vmatprep.subr.bf16.mxu0 0
    %2420 = vmatpush2.bf16.msra.mxu0 0
    %2421 = vmatprep.subr.bf16.mxu0 0
    %2422 = vmatpush2.bf16.msra.mxu0 0
    %2423 = vmatprep.subr.bf16.mxu0 0
    %2424 = vmatpush2.bf16.msra.mxu0 0
    %2425 = vmatprep.mubr.bf16.mxu0 0
    %2426 = vmatmul.mubr.bf16.gmra.mxu0 %v2327
    %v2427 = vpop.f32.mrf.mxu0
    %v2428 = vadd.f32 0.0, %v2427
    %v2429 = vpop.f32.mrf.mxu0
    %v2430 = vpop.f32.mrf.mxu0
    %v2431 = vadd.f32 0.0, %v2430
    %v2432 = vpop.f32.mrf.mxu0
    %2433 = vmatprep.mubr.bf16.mxu0 0
    %2434 = vmatmul.mubr.bf16.gmra.mxu0 %v2328
    %v2435 = vpop.f32.mrf.mxu0
    %v2436 = vadd.f32 0.0, %v2435
    %v2437 = vpop.f32.mrf.mxu0
    %v2438 = vpop.f32.mrf.mxu0
    %v2439 = vadd.f32 0.0, %v2438
    %v2440 = vpop.f32.mrf.mxu0
    %2441 = vdwg.mxu0
    %v2442 = vlaneseq
    %v2443 = vshrl.u32 %v2442, 7
    %v2444 = vsub.s32 2, %v2443
    %v2445 = vrot.slane %v104, %v2444
    %v2446 = vlaneseq
    %v2447 = vshrl.u32 %v2446, 7
    %v2448 = vsub.s32 2, %v2447
    %v2449 = vrot.slane %v105, %v2448
    %v2450 = vlaneseq
    %v2451 = vshrl.u32 %v2450, 7
    %v2452 = vsub.s32 2, %v2451
    %v2453 = vrot.slane %v106, %v2452
    %v2454 = vlaneseq
    %v2455 = vshrl.u32 %v2454, 7
    %v2456 = vsub.s32 2, %v2455
    %v2457 = vrot.slane %v107, %v2456
    %v2458 = vmul.f32 %v2445, %v2428
    %v2459 = vmul.f32 %v2449, %v2431
    %v2460 = vmul.f32 %v2453, %v2436
    %v2461 = vmul.f32 %v2457, %v2439
    %v2462 = vadd.f32 %v100, %v2458
    %v2463 = vadd.f32 %v101, %v2459
    %v2464 = vadd.f32 %v102, %v2460
    %v2465 = vadd.f32 %v103, %v2461
    %2466 = vadd.xlane.f32.xlu0 %v2462
    %v2467 = vpop.xlane.xlu0 %2466
    %2468 = vadd.xlane.f32.xlu0 %v2463
    %v2469 = vpop.xlane.xlu0 %2468
    %2470 = vadd.xlane.f32.xlu0 %v2464
    %v2471 = vpop.xlane.xlu0 %2470
    %2472 = vadd.xlane.f32.xlu0 %v2465
    %v2473 = vpop.xlane.xlu0 %2472
    %v2474 = vmul.f32 %v2467, %v118
    %v2475 = vmul.f32 %v2469, %v118
    %v2476 = vmul.f32 %v2471, %v118
    %v2477 = vmul.f32 %v2473, %v118
    %v2478 = vsub.f32 %v2462, %v2474
    %v2479 = vsub.f32 %v2463, %v2475
    %v2480 = vsub.f32 %v2464, %v2476
    %v2481 = vsub.f32 %v2465, %v2477
    %v2482 = vmul.f32 %v2478, %v2478
    %v2483 = vmul.f32 %v2479, %v2479
    %v2484 = vmul.f32 %v2480, %v2480
    %v2485 = vmul.f32 %v2481, %v2481
    %2486 = vadd.xlane.f32.xlu0 %v2482
    %v2487 = vpop.xlane.xlu0 %2486
    %2488 = vadd.xlane.f32.xlu0 %v2483
    %v2489 = vpop.xlane.xlu0 %2488
    %2490 = vadd.xlane.f32.xlu0 %v2484
    %v2491 = vpop.xlane.xlu0 %2490
    %2492 = vadd.xlane.f32.xlu0 %v2485
    %v2493 = vpop.xlane.xlu0 %2492
    %v2494 = vmul.f32 %v2487, %v118
    %v2495 = vmul.f32 %v2489, %v118
    %v2496 = vmul.f32 %v2491, %v118
    %v2497 = vmul.f32 %v2493, %v118
    %v2498 = vadd.f32 %v2494, 1e-05
    %v2499 = vadd.f32 %v2495, 1e-05
    %v2500 = vadd.f32 %v2496, 1e-05
    %v2501 = vadd.f32 %v2497, 1e-05
    %v2502 = vrsqrt.pop %v2498
    %v2503 = vrsqrt.pop %v2499
    %v2504 = vrsqrt.pop %v2500
    %v2505 = vrsqrt.pop %v2501
    %v2506 = vmul.f32 %v2478, %v2502
    %v2507 = vmul.f32 %v2479, %v2503
    %v2508 = vmul.f32 %v2480, %v2504
    %v2509 = vmul.f32 %v2481, %v2505
    %v2511 = vlaneseq
    %v2512 = vshrl.u32 %v2511, 7
    %v2513 = vsub.s32 0, %v2512
    %v2514 = vrot.slane %v109, %v2513
    %v2516 = vmul.f32 %v2506, %v2514
    %v2517 = vmul.f32 %v2507, %v2514
    %v2518 = vmul.f32 %v2508, %v2514
    %v2519 = vmul.f32 %v2509, %v2514
    %v2520 = vlaneseq
    %v2521 = vshrl.u32 %v2520, 7
    %v2522 = vsub.s32 4, %v2521
    %v2523 = vrot.slane %v104, %v2522
    %v2524 = vlaneseq
    %v2525 = vshrl.u32 %v2524, 7
    %v2526 = vsub.s32 4, %v2525
    %v2527 = vrot.slane %v105, %v2526
    %v2528 = vlaneseq
    %v2529 = vshrl.u32 %v2528, 7
    %v2530 = vsub.s32 4, %v2529
    %v2531 = vrot.slane %v106, %v2530
    %v2532 = vlaneseq
    %v2533 = vshrl.u32 %v2532, 7
    %v2534 = vsub.s32 4, %v2533
    %v2535 = vrot.slane %v107, %v2534
    %v2536 = vmul.f32 %v2516, %v2523
    %v2537 = vmul.f32 %v2517, %v2527
    %v2538 = vmul.f32 %v2518, %v2531
    %v2539 = vmul.f32 %v2519, %v2535
    %v2540 = vlaneseq
    %v2541 = vshrl.u32 %v2540, 7
    %v2542 = vsub.s32 3, %v2541
    %v2543 = vrot.slane %v104, %v2542
    %v2544 = vlaneseq
    %v2545 = vshrl.u32 %v2544, 7
    %v2546 = vsub.s32 3, %v2545
    %v2547 = vrot.slane %v105, %v2546
    %v2548 = vlaneseq
    %v2549 = vshrl.u32 %v2548, 7
    %v2550 = vsub.s32 3, %v2549
    %v2551 = vrot.slane %v106, %v2550
    %v2552 = vlaneseq
    %v2553 = vshrl.u32 %v2552, 7
    %v2554 = vsub.s32 3, %v2553
    %v2555 = vrot.slane %v107, %v2554
    %v2556 = vadd.f32 %v2543, %v2536
    %v2557 = vadd.f32 %v2547, %v2537
    %v2558 = vadd.f32 %v2551, %v2538
    %v2559 = vadd.f32 %v2555, %v2539
    %v2560 = vpack.c.bf16 %v2557, %v2556
    %v2561 = vpack.c.bf16 %v2559, %v2558
    %v2562 = vld [vmem:[#allocation8] sm:$0xff]
    %v2563 = vld [vmem:[#allocation8 + $0x8] sm:$0xff]
    %v2564 = vld [vmem:[#allocation8 + $0x10] sm:$0xff]
    %v2565 = vld [vmem:[#allocation8 + $0x18] sm:$0xff]
    %v2566 = vld [vmem:[#allocation8 + $0x20] sm:$0xff]
    %v2567 = vld [vmem:[#allocation8 + $0x28] sm:$0xff]
    %v2568 = vld [vmem:[#allocation8 + $0x30] sm:$0xff]
    %v2569 = vld [vmem:[#allocation8 + $0x38] sm:$0xff]
    %v2570 = vld [vmem:[#allocation8 + $0x40] sm:$0xff]
    %v2571 = vld [vmem:[#allocation8 + $0x48] sm:$0xff]
    %v2572 = vld [vmem:[#allocation8 + $0x50] sm:$0xff]
    %v2573 = vld [vmem:[#allocation8 + $0x58] sm:$0xff]
    %v2574 = vld [vmem:[#allocation8 + $0x60] sm:$0xff]
    %v2575 = vld [vmem:[#allocation8 + $0x68] sm:$0xff]
    %v2576 = vld [vmem:[#allocation8 + $0x70] sm:$0xff]
    %v2577 = vld [vmem:[#allocation8 + $0x78] sm:$0xff]
    %v2578 = vld [vmem:[#allocation8 + $0x80] sm:$0xff]
    %v2579 = vld [vmem:[#allocation8 + $0x88] sm:$0xff]
    %v2580 = vld [vmem:[#allocation8 + $0x90] sm:$0xff]
    %v2581 = vld [vmem:[#allocation8 + $0x98] sm:$0xff]
    %v2582 = vld [vmem:[#allocation8 + $0xa0] sm:$0xff]
    %v2583 = vld [vmem:[#allocation8 + $0xa8] sm:$0xff]
    %v2584 = vld [vmem:[#allocation8 + $0xb0] sm:$0xff]
    %v2585 = vld [vmem:[#allocation8 + $0xb8] sm:$0xff]
    %v2586 = vld [vmem:[#allocation8 + $0xc0] sm:$0xff]
    %v2587 = vld [vmem:[#allocation8 + $0xc8] sm:$0xff]
    %v2588 = vld [vmem:[#allocation8 + $0xd0] sm:$0xff]
    %v2589 = vld [vmem:[#allocation8 + $0xd8] sm:$0xff]
    %v2590 = vld [vmem:[#allocation8 + $0xe0] sm:$0xff]
    %v2591 = vld [vmem:[#allocation8 + $0xe8] sm:$0xff]
    %v2592 = vld [vmem:[#allocation8 + $0xf0] sm:$0xff]
    %v2593 = vld [vmem:[#allocation8 + $0xf8] sm:$0xff]
    %v2626 = vunpack.c.l.b16 %v2562
    %v2627 = vunpack.c.h.b16 %v2562
    %v2628 = vunpack.c.l.b16 %v2563
    %v2629 = vunpack.c.h.b16 %v2563
    %v2630 = vunpack.c.l.b16 %v2564
    %v2631 = vunpack.c.h.b16 %v2564
    %v2632 = vunpack.c.l.b16 %v2565
    %v2633 = vunpack.c.h.b16 %v2565
    %v2634 = vunpack.c.l.b16 %v2566
    %v2635 = vunpack.c.h.b16 %v2566
    %v2636 = vunpack.c.l.b16 %v2567
    %v2637 = vunpack.c.h.b16 %v2567
    %v2638 = vunpack.c.l.b16 %v2568
    %v2639 = vunpack.c.h.b16 %v2568
    %v2640 = vunpack.c.l.b16 %v2569
    %v2641 = vunpack.c.h.b16 %v2569
    %v2642 = vunpack.c.l.b16 %v2570
    %v2643 = vunpack.c.h.b16 %v2570
    %v2644 = vunpack.c.l.b16 %v2571
    %v2645 = vunpack.c.h.b16 %v2571
    %v2646 = vunpack.c.l.b16 %v2572
    %v2647 = vunpack.c.h.b16 %v2572
    %v2648 = vunpack.c.l.b16 %v2573
    %v2649 = vunpack.c.h.b16 %v2573
    %v2650 = vunpack.c.l.b16 %v2574
    %v2651 = vunpack.c.h.b16 %v2574
    %v2652 = vunpack.c.l.b16 %v2575
    %v2653 = vunpack.c.h.b16 %v2575
    %v2654 = vunpack.c.l.b16 %v2576
    %v2655 = vunpack.c.h.b16 %v2576
    %v2656 = vunpack.c.l.b16 %v2577
    %v2657 = vunpack.c.h.b16 %v2577
    %v2658 = vunpack.c.l.b16 %v2578
    %v2659 = vunpack.c.h.b16 %v2578
    %v2660 = vunpack.c.l.b16 %v2579
    %v2661 = vunpack.c.h.b16 %v2579
    %v2662 = vunpack.c.l.b16 %v2580
    %v2663 = vunpack.c.h.b16 %v2580
    %v2664 = vunpack.c.l.b16 %v2581
    %v2665 = vunpack.c.h.b16 %v2581
    %v2666 = vunpack.c.l.b16 %v2582
    %v2667 = vunpack.c.h.b16 %v2582
    %v2668 = vunpack.c.l.b16 %v2583
    %v2669 = vunpack.c.h.b16 %v2583
    %v2670 = vunpack.c.l.b16 %v2584
    %v2671 = vunpack.c.h.b16 %v2584
    %v2672 = vunpack.c.l.b16 %v2585
    %v2673 = vunpack.c.h.b16 %v2585
    %v2674 = vunpack.c.l.b16 %v2586
    %v2675 = vunpack.c.h.b16 %v2586
    %v2676 = vunpack.c.l.b16 %v2587
    %v2677 = vunpack.c.h.b16 %v2587
    %v2678 = vunpack.c.l.b16 %v2588
    %v2679 = vunpack.c.h.b16 %v2588
    %v2680 = vunpack.c.l.b16 %v2589
    %v2681 = vunpack.c.h.b16 %v2589
    %v2682 = vunpack.c.l.b16 %v2590
    %v2683 = vunpack.c.h.b16 %v2590
    %v2684 = vunpack.c.l.b16 %v2591
    %v2685 = vunpack.c.h.b16 %v2591
    %v2686 = vunpack.c.l.b16 %v2592
    %v2687 = vunpack.c.h.b16 %v2592
    %v2688 = vunpack.c.l.b16 %v2593
    %v2689 = vunpack.c.h.b16 %v2593
    %v2690 = vpack.c.b16 %v2630, %v2626
    %v2691 = vpack.c.b16 %v2631, %v2627
    %v2692 = vpack.c.b16 %v2632, %v2628
    %v2693 = vpack.c.b16 %v2633, %v2629
    %v2694 = vpack.c.b16 %v2638, %v2634
    %v2695 = vpack.c.b16 %v2639, %v2635
    %v2696 = vpack.c.b16 %v2640, %v2636
    %v2697 = vpack.c.b16 %v2641, %v2637
    %v2698 = vpack.c.b16 %v2646, %v2642
    %v2699 = vpack.c.b16 %v2647, %v2643
    %v2700 = vpack.c.b16 %v2648, %v2644
    %v2701 = vpack.c.b16 %v2649, %v2645
    %v2702 = vpack.c.b16 %v2654, %v2650
    %v2703 = vpack.c.b16 %v2655, %v2651
    %v2704 = vpack.c.b16 %v2656, %v2652
    %v2705 = vpack.c.b16 %v2657, %v2653
    %v2706 = vpack.c.b16 %v2662, %v2658
    %v2707 = vpack.c.b16 %v2663, %v2659
    %v2708 = vpack.c.b16 %v2664, %v2660
    %v2709 = vpack.c.b16 %v2665, %v2661
    %v2710 = vpack.c.b16 %v2670, %v2666
    %v2711 = vpack.c.b16 %v2671, %v2667
    %v2712 = vpack.c.b16 %v2672, %v2668
    %v2713 = vpack.c.b16 %v2673, %v2669
    %v2714 = vpack.c.b16 %v2678, %v2674
    %v2715 = vpack.c.b16 %v2679, %v2675
    %v2716 = vpack.c.b16 %v2680, %v2676
    %v2717 = vpack.c.b16 %v2681, %v2677
    %v2718 = vpack.c.b16 %v2686, %v2682
    %v2719 = vpack.c.b16 %v2687, %v2683
    %v2720 = vpack.c.b16 %v2688, %v2684
    %v2721 = vpack.c.b16 %v2689, %v2685
    %2754 = vmatprep.subr.bf16.mxu0 %v2719
    %2755 = vmatpush1.bf16.msra.mxu0 %v2718
    %2756 = vmatprep.subr.bf16.mxu0 %v2715
    %2757 = vmatpush1.bf16.msra.mxu0 %v2714
    %2758 = vmatprep.subr.bf16.mxu0 %v2711
    %2759 = vmatpush1.bf16.msra.mxu0 %v2710
    %2760 = vmatprep.subr.bf16.mxu0 %v2707
    %2761 = vmatpush1.bf16.msra.mxu0 %v2706
    %2762 = vmatprep.subr.bf16.mxu0 %v2703
    %2763 = vmatpush1.bf16.msra.mxu0 %v2702
    %2764 = vmatprep.subr.bf16.mxu0 %v2699
    %2765 = vmatpush1.bf16.msra.mxu0 %v2698
    %2766 = vmatprep.subr.bf16.mxu0 %v2695
    %2767 = vmatpush1.bf16.msra.mxu0 %v2694
    %2768 = vmatprep.subr.bf16.mxu0 %v2691
    %2769 = vmatpush1.bf16.msra.mxu0 %v2690
    %2770 = vmatprep.subr.bf16.mxu0 0
    %2771 = vmatpush2.bf16.msra.mxu0 0
    %2772 = vmatprep.subr.bf16.mxu0 0
    %2773 = vmatpush2.bf16.msra.mxu0 0
    %2774 = vmatprep.subr.bf16.mxu0 0
    %2775 = vmatpush2.bf16.msra.mxu0 0
    %2776 = vmatprep.subr.bf16.mxu0 0
    %2777 = vmatpush2.bf16.msra.mxu0 0
    %2778 = vmatprep.subr.bf16.mxu0 0
    %2779 = vmatpush2.bf16.msra.mxu0 0
    %2780 = vmatprep.subr.bf16.mxu0 0
    %2781 = vmatpush2.bf16.msra.mxu0 0
    %2782 = vmatprep.subr.bf16.mxu0 0
    %2783 = vmatpush2.bf16.msra.mxu0 0
    %2784 = vmatprep.subr.bf16.mxu0 0
    %2785 = vmatpush2.bf16.msra.mxu0 0
    %2786 = vmatprep.mubr.bf16.mxu0 0
    %2787 = vmatmul.mubr.bf16.gmra.mxu0 %v2560
    %v2788 = vpop.f32.mrf.mxu0
    %v2789 = vadd.f32 0.0, %v2788
    %v2790 = vpop.f32.mrf.mxu0
    %v2791 = vadd.f32 0.0, %v2790
    %v2792 = vpop.f32.mrf.mxu0
    %v2793 = vadd.f32 0.0, %v2792
    %v2794 = vpop.f32.mrf.mxu0
    %v2795 = vadd.f32 0.0, %v2794
    %2796 = vmatprep.mubr.bf16.mxu0 0
    %2797 = vmatmul.mubr.bf16.gmra.mxu0 %v2561
    %v2798 = vpop.f32.mrf.mxu0
    %v2799 = vadd.f32 0.0, %v2798
    %v2800 = vpop.f32.mrf.mxu0
    %v2801 = vadd.f32 0.0, %v2800
    %v2802 = vpop.f32.mrf.mxu0
    %v2803 = vadd.f32 0.0, %v2802
    %v2804 = vpop.f32.mrf.mxu0
    %v2805 = vadd.f32 0.0, %v2804
    %2806 = vdwg.mxu0
    %2807 = vmatprep.subr.bf16.mxu0 %v2721
    %2808 = vmatpush1.bf16.msra.mxu0 %v2720
    %2809 = vmatprep.subr.bf16.mxu0 %v2717
    %2810 = vmatpush1.bf16.msra.mxu0 %v2716
    %2811 = vmatprep.subr.bf16.mxu0 %v2713
    %2812 = vmatpush1.bf16.msra.mxu0 %v2712
    %2813 = vmatprep.subr.bf16.mxu0 %v2709
    %2814 = vmatpush1.bf16.msra.mxu0 %v2708
    %2815 = vmatprep.subr.bf16.mxu0 %v2705
    %2816 = vmatpush1.bf16.msra.mxu0 %v2704
    %2817 = vmatprep.subr.bf16.mxu0 %v2701
    %2818 = vmatpush1.bf16.msra.mxu0 %v2700
    %2819 = vmatprep.subr.bf16.mxu0 %v2697
    %2820 = vmatpush1.bf16.msra.mxu0 %v2696
    %2821 = vmatprep.subr.bf16.mxu0 %v2693
    %2822 = vmatpush1.bf16.msra.mxu0 %v2692
    %2823 = vmatprep.subr.bf16.mxu0 0
    %2824 = vmatpush2.bf16.msra.mxu0 0
    %2825 = vmatprep.subr.bf16.mxu0 0
    %2826 = vmatpush2.bf16.msra.mxu0 0
    %2827 = vmatprep.subr.bf16.mxu0 0
    %2828 = vmatpush2.bf16.msra.mxu0 0
    %2829 = vmatprep.subr.bf16.mxu0 0
    %2830 = vmatpush2.bf16.msra.mxu0 0
    %2831 = vmatprep.subr.bf16.mxu0 0
    %2832 = vmatpush2.bf16.msra.mxu0 0
    %2833 = vmatprep.subr.bf16.mxu0 0
    %2834 = vmatpush2.bf16.msra.mxu0 0
    %2835 = vmatprep.subr.bf16.mxu0 0
    %2836 = vmatpush2.bf16.msra.mxu0 0
    %2837 = vmatprep.subr.bf16.mxu0 0
    %2838 = vmatpush2.bf16.msra.mxu0 0
    %2839 = vmatprep.mubr.bf16.mxu0 0
    %2840 = vmatmul.mubr.bf16.gmra.mxu0 %v2560
    %v2841 = vpop.f32.mrf.mxu0
    %v2842 = vadd.f32 0.0, %v2841
    %v2843 = vpop.f32.mrf.mxu0
    %v2844 = vadd.f32 0.0, %v2843
    %v2845 = vpop.f32.mrf.mxu0
    %v2846 = vadd.f32 0.0, %v2845
    %v2847 = vpop.f32.mrf.mxu0
    %v2848 = vadd.f32 0.0, %v2847
    %2849 = vmatprep.mubr.bf16.mxu0 0
    %2850 = vmatmul.mubr.bf16.gmra.mxu0 %v2561
    %v2851 = vpop.f32.mrf.mxu0
    %v2852 = vadd.f32 0.0, %v2851
    %v2853 = vpop.f32.mrf.mxu0
    %v2854 = vadd.f32 0.0, %v2853
    %v2855 = vpop.f32.mrf.mxu0
    %v2856 = vadd.f32 0.0, %v2855
    %v2857 = vpop.f32.mrf.mxu0
    %v2858 = vadd.f32 0.0, %v2857
    %2859 = vdwg.mxu0
    %v2860 = vmul.f32 %v2789, 0.5
    %v2861 = vmul.f32 %v2791, 0.5
    %v2862 = vmul.f32 %v2842, 0.5
    %v2863 = vmul.f32 %v2844, 0.5
    %v2864 = vmul.f32 %v2793, 0.5
    %v2865 = vmul.f32 %v2795, 0.5
    %v2866 = vmul.f32 %v2846, 0.5
    %v2867 = vmul.f32 %v2848, 0.5
    %v2868 = vmul.f32 %v2799, 0.5
    %v2869 = vmul.f32 %v2801, 0.5
    %v2870 = vmul.f32 %v2852, 0.5
    %v2871 = vmul.f32 %v2854, 0.5
    %v2872 = vmul.f32 %v2803, 0.5
    %v2873 = vmul.f32 %v2805, 0.5
    %v2874 = vmul.f32 %v2856, 0.5
    %v2875 = vmul.f32 %v2858, 0.5
    %v2876 = vmul.f32 %v2789, 0.70710677
    %v2877 = vmul.f32 %v2791, 0.70710677
    %v2878 = vmul.f32 %v2842, 0.70710677
    %v2879 = vmul.f32 %v2844, 0.70710677
    %v2880 = vmul.f32 %v2793, 0.70710677
    %v2881 = vmul.f32 %v2795, 0.70710677
    %v2882 = vmul.f32 %v2846, 0.70710677
    %v2883 = vmul.f32 %v2848, 0.70710677
    %v2884 = vmul.f32 %v2799, 0.70710677
    %v2885 = vmul.f32 %v2801, 0.70710677
    %v2886 = vmul.f32 %v2852, 0.70710677
    %v2887 = vmul.f32 %v2854, 0.70710677
    %v2888 = vmul.f32 %v2803, 0.70710677
    %v2889 = vmul.f32 %v2805, 0.70710677
    %v2890 = vmul.f32 %v2856, 0.70710677
    %v2891 = vmul.f32 %v2858, 0.70710677
    %v2892 = verf.f32.pop %v2876
    %v2893 = verf.f32.pop %v2877
    %v2894 = verf.f32.pop %v2878
    %v2895 = verf.f32.pop %v2879
    %v2896 = verf.f32.pop %v2880
    %v2897 = verf.f32.pop %v2881
    %v2898 = verf.f32.pop %v2882
    %v2899 = verf.f32.pop %v2883
    %v2900 = verf.f32.pop %v2884
    %v2901 = verf.f32.pop %v2885
    %v2902 = verf.f32.pop %v2886
    %v2903 = verf.f32.pop %v2887
    %v2904 = verf.f32.pop %v2888
    %v2905 = verf.f32.pop %v2889
    %v2906 = verf.f32.pop %v2890
    %v2907 = verf.f32.pop %v2891
    %v2908 = vadd.f32 %v2892, 1.0
    %v2909 = vadd.f32 %v2893, 1.0
    %v2910 = vadd.f32 %v2894, 1.0
    %v2911 = vadd.f32 %v2895, 1.0
    %v2912 = vadd.f32 %v2896, 1.0
    %v2913 = vadd.f32 %v2897, 1.0
    %v2914 = vadd.f32 %v2898, 1.0
    %v2915 = vadd.f32 %v2899, 1.0
    %v2916 = vadd.f32 %v2900, 1.0
    %v2917 = vadd.f32 %v2901, 1.0
    %v2918 = vadd.f32 %v2902, 1.0
    %v2919 = vadd.f32 %v2903, 1.0
    %v2920 = vadd.f32 %v2904, 1.0
    %v2921 = vadd.f32 %v2905, 1.0
    %v2922 = vadd.f32 %v2906, 1.0
    %v2923 = vadd.f32 %v2907, 1.0
    %v2924 = vmul.f32 %v2860, %v2908
    %v2925 = vmul.f32 %v2861, %v2909
    %v2926 = vmul.f32 %v2862, %v2910
    %v2927 = vmul.f32 %v2863, %v2911
    %v2928 = vmul.f32 %v2864, %v2912
    %v2929 = vmul.f32 %v2865, %v2913
    %v2930 = vmul.f32 %v2866, %v2914
    %v2931 = vmul.f32 %v2867, %v2915
    %v2932 = vmul.f32 %v2868, %v2916
    %v2933 = vmul.f32 %v2869, %v2917
    %v2934 = vmul.f32 %v2870, %v2918
    %v2935 = vmul.f32 %v2871, %v2919
    %v2936 = vmul.f32 %v2872, %v2920
    %v2937 = vmul.f32 %v2873, %v2921
    %v2938 = vmul.f32 %v2874, %v2922
    %v2939 = vmul.f32 %v2875, %v2923
    %v2940 = vpack.c.bf16 %v2928, %v2924
    %v2941 = vpack.c.bf16 %v2929, %v2925
    %v2942 = vpack.c.bf16 %v2930, %v2926
    %v2943 = vpack.c.bf16 %v2931, %v2927
    %v2944 = vpack.c.bf16 %v2936, %v2932
    %v2945 = vpack.c.bf16 %v2937, %v2933
    %v2946 = vpack.c.bf16 %v2938, %v2934
    %v2947 = vpack.c.bf16 %v2939, %v2935
    %v2948 = vld [vmem:[#allocation10] sm:$0xf]
    %v2949 = vld [vmem:[#allocation10 + $0x4] sm:$0xf]
    %v2950 = vld [vmem:[#allocation10 + $0x8] sm:$0xf]
    %v2951 = vld [vmem:[#allocation10 + $0xc] sm:$0xf]
    %v2952 = vld [vmem:[#allocation10 + $0x10] sm:$0xf]
    %v2953 = vld [vmem:[#allocation10 + $0x14] sm:$0xf]
    %v2954 = vld [vmem:[#allocation10 + $0x18] sm:$0xf]
    %v2955 = vld [vmem:[#allocation10 + $0x1c] sm:$0xf]
    %v2956 = vld [vmem:[#allocation10 + $0x20] sm:$0xf]
    %v2957 = vld [vmem:[#allocation10 + $0x24] sm:$0xf]
    %v2958 = vld [vmem:[#allocation10 + $0x28] sm:$0xf]
    %v2959 = vld [vmem:[#allocation10 + $0x2c] sm:$0xf]
    %v2960 = vld [vmem:[#allocation10 + $0x30] sm:$0xf]
    %v2961 = vld [vmem:[#allocation10 + $0x34] sm:$0xf]
    %v2962 = vld [vmem:[#allocation10 + $0x38] sm:$0xf]
    %v2963 = vld [vmem:[#allocation10 + $0x3c] sm:$0xf]
    %v2964 = vld [vmem:[#allocation10 + $0x40] sm:$0xf]
    %v2965 = vld [vmem:[#allocation10 + $0x44] sm:$0xf]
    %v2966 = vld [vmem:[#allocation10 + $0x48] sm:$0xf]
    %v2967 = vld [vmem:[#allocation10 + $0x4c] sm:$0xf]
    %v2968 = vld [vmem:[#allocation10 + $0x50] sm:$0xf]
    %v2969 = vld [vmem:[#allocation10 + $0x54] sm:$0xf]
    %v2970 = vld [vmem:[#allocation10 + $0x58] sm:$0xf]
    %v2971 = vld [vmem:[#allocation10 + $0x5c] sm:$0xf]
    %v2972 = vld [vmem:[#allocation10 + $0x60] sm:$0xf]
    %v2973 = vld [vmem:[#allocation10 + $0x64] sm:$0xf]
    %v2974 = vld [vmem:[#allocation10 + $0x68] sm:$0xf]
    %v2975 = vld [vmem:[#allocation10 + $0x6c] sm:$0xf]
    %v2976 = vld [vmem:[#allocation10 + $0x70] sm:$0xf]
    %v2977 = vld [vmem:[#allocation10 + $0x74] sm:$0xf]
    %v2978 = vld [vmem:[#allocation10 + $0x78] sm:$0xf]
    %v2979 = vld [vmem:[#allocation10 + $0x7c] sm:$0xf]
    %v2980 = vld [vmem:[#allocation10 + $0x80] sm:$0xf]
    %v2981 = vld [vmem:[#allocation10 + $0x84] sm:$0xf]
    %v2982 = vld [vmem:[#allocation10 + $0x88] sm:$0xf]
    %v2983 = vld [vmem:[#allocation10 + $0x8c] sm:$0xf]
    %v2984 = vld [vmem:[#allocation10 + $0x90] sm:$0xf]
    %v2985 = vld [vmem:[#allocation10 + $0x94] sm:$0xf]
    %v2986 = vld [vmem:[#allocation10 + $0x98] sm:$0xf]
    %v2987 = vld [vmem:[#allocation10 + $0x9c] sm:$0xf]
    %v2988 = vld [vmem:[#allocation10 + $0xa0] sm:$0xf]
    %v2989 = vld [vmem:[#allocation10 + $0xa4] sm:$0xf]
    %v2990 = vld [vmem:[#allocation10 + $0xa8] sm:$0xf]
    %v2991 = vld [vmem:[#allocation10 + $0xac] sm:$0xf]
    %v2992 = vld [vmem:[#allocation10 + $0xb0] sm:$0xf]
    %v2993 = vld [vmem:[#allocation10 + $0xb4] sm:$0xf]
    %v2994 = vld [vmem:[#allocation10 + $0xb8] sm:$0xf]
    %v2995 = vld [vmem:[#allocation10 + $0xbc] sm:$0xf]
    %v2996 = vld [vmem:[#allocation10 + $0xc0] sm:$0xf]
    %v2997 = vld [vmem:[#allocation10 + $0xc4] sm:$0xf]
    %v2998 = vld [vmem:[#allocation10 + $0xc8] sm:$0xf]
    %v2999 = vld [vmem:[#allocation10 + $0xcc] sm:$0xf]
    %v3000 = vld [vmem:[#allocation10 + $0xd0] sm:$0xf]
    %v3001 = vld [vmem:[#allocation10 + $0xd4] sm:$0xf]
    %v3002 = vld [vmem:[#allocation10 + $0xd8] sm:$0xf]
    %v3003 = vld [vmem:[#allocation10 + $0xdc] sm:$0xf]
    %v3004 = vld [vmem:[#allocation10 + $0xe0] sm:$0xf]
    %v3005 = vld [vmem:[#allocation10 + $0xe4] sm:$0xf]
    %v3006 = vld [vmem:[#allocation10 + $0xe8] sm:$0xf]
    %v3007 = vld [vmem:[#allocation10 + $0xec] sm:$0xf]
    %v3008 = vld [vmem:[#allocation10 + $0xf0] sm:$0xf]
    %v3009 = vld [vmem:[#allocation10 + $0xf4] sm:$0xf]
    %v3010 = vld [vmem:[#allocation10 + $0xf8] sm:$0xf]
    %v3011 = vld [vmem:[#allocation10 + $0xfc] sm:$0xf]
    %v3076 = vunpack.c.l.b16 %v2948
    %v3077 = vunpack.c.l.b16 %v2949
    %v3078 = vunpack.c.l.b16 %v2950
    %v3079 = vunpack.c.l.b16 %v2951
    %v3080 = vunpack.c.l.b16 %v2952
    %v3081 = vunpack.c.l.b16 %v2953
    %v3082 = vunpack.c.l.b16 %v2954
    %v3083 = vunpack.c.l.b16 %v2955
    %v3084 = vunpack.c.l.b16 %v2956
    %v3085 = vunpack.c.l.b16 %v2957
    %v3086 = vunpack.c.l.b16 %v2958
    %v3087 = vunpack.c.l.b16 %v2959
    %v3088 = vunpack.c.l.b16 %v2960
    %v3089 = vunpack.c.l.b16 %v2961
    %v3090 = vunpack.c.l.b16 %v2962
    %v3091 = vunpack.c.l.b16 %v2963
    %v3092 = vunpack.c.l.b16 %v2964
    %v3093 = vunpack.c.l.b16 %v2965
    %v3094 = vunpack.c.l.b16 %v2966
    %v3095 = vunpack.c.l.b16 %v2967
    %v3096 = vunpack.c.l.b16 %v2968
    %v3097 = vunpack.c.l.b16 %v2969
    %v3098 = vunpack.c.l.b16 %v2970
    %v3099 = vunpack.c.l.b16 %v2971
    %v3100 = vunpack.c.l.b16 %v2972
    %v3101 = vunpack.c.l.b16 %v2973
    %v3102 = vunpack.c.l.b16 %v2974
    %v3103 = vunpack.c.l.b16 %v2975
    %v3104 = vunpack.c.l.b16 %v2976
    %v3105 = vunpack.c.l.b16 %v2977
    %v3106 = vunpack.c.l.b16 %v2978
    %v3107 = vunpack.c.l.b16 %v2979
    %v3108 = vunpack.c.l.b16 %v2980
    %v3109 = vunpack.c.l.b16 %v2981
    %v3110 = vunpack.c.l.b16 %v2982
    %v3111 = vunpack.c.l.b16 %v2983
    %v3112 = vunpack.c.l.b16 %v2984
    %v3113 = vunpack.c.l.b16 %v2985
    %v3114 = vunpack.c.l.b16 %v2986
    %v3115 = vunpack.c.l.b16 %v2987
    %v3116 = vunpack.c.l.b16 %v2988
    %v3117 = vunpack.c.l.b16 %v2989
    %v3118 = vunpack.c.l.b16 %v2990
    %v3119 = vunpack.c.l.b16 %v2991
    %v3120 = vunpack.c.l.b16 %v2992
    %v3121 = vunpack.c.l.b16 %v2993
    %v3122 = vunpack.c.l.b16 %v2994
    %v3123 = vunpack.c.l.b16 %v2995
    %v3124 = vunpack.c.l.b16 %v2996
    %v3125 = vunpack.c.l.b16 %v2997
    %v3126 = vunpack.c.l.b16 %v2998
    %v3127 = vunpack.c.l.b16 %v2999
    %v3128 = vunpack.c.l.b16 %v3000
    %v3129 = vunpack.c.l.b16 %v3001
    %v3130 = vunpack.c.l.b16 %v3002
    %v3131 = vunpack.c.l.b16 %v3003
    %v3132 = vunpack.c.l.b16 %v3004
    %v3133 = vunpack.c.l.b16 %v3005
    %v3134 = vunpack.c.l.b16 %v3006
    %v3135 = vunpack.c.l.b16 %v3007
    %v3136 = vunpack.c.l.b16 %v3008
    %v3137 = vunpack.c.l.b16 %v3009
    %v3138 = vunpack.c.l.b16 %v3010
    %v3139 = vunpack.c.l.b16 %v3011
    %v3140 = vpack.c.b16 %v3077, %v3076
    %v3141 = vpack.c.b16 %v3079, %v3078
    %v3142 = vpack.c.b16 %v3081, %v3080
    %v3143 = vpack.c.b16 %v3083, %v3082
    %v3144 = vpack.c.b16 %v3085, %v3084
    %v3145 = vpack.c.b16 %v3087, %v3086
    %v3146 = vpack.c.b16 %v3089, %v3088
    %v3147 = vpack.c.b16 %v3091, %v3090
    %v3148 = vpack.c.b16 %v3093, %v3092
    %v3149 = vpack.c.b16 %v3095, %v3094
    %v3150 = vpack.c.b16 %v3097, %v3096
    %v3151 = vpack.c.b16 %v3099, %v3098
    %v3152 = vpack.c.b16 %v3101, %v3100
    %v3153 = vpack.c.b16 %v3103, %v3102
    %v3154 = vpack.c.b16 %v3105, %v3104
    %v3155 = vpack.c.b16 %v3107, %v3106
    %v3156 = vpack.c.b16 %v3109, %v3108
    %v3157 = vpack.c.b16 %v3111, %v3110
    %v3158 = vpack.c.b16 %v3113, %v3112
    %v3159 = vpack.c.b16 %v3115, %v3114
    %v3160 = vpack.c.b16 %v3117, %v3116
    %v3161 = vpack.c.b16 %v3119, %v3118
    %v3162 = vpack.c.b16 %v3121, %v3120
    %v3163 = vpack.c.b16 %v3123, %v3122
    %v3164 = vpack.c.b16 %v3125, %v3124
    %v3165 = vpack.c.b16 %v3127, %v3126
    %v3166 = vpack.c.b16 %v3129, %v3128
    %v3167 = vpack.c.b16 %v3131, %v3130
    %v3168 = vpack.c.b16 %v3133, %v3132
    %v3169 = vpack.c.b16 %v3135, %v3134
    %v3170 = vpack.c.b16 %v3137, %v3136
    %v3171 = vpack.c.b16 %v3139, %v3138
    %3204 = vmatprep.subr.bf16.mxu0 0
    %3205 = vmatpush1.bf16.msra.mxu0 %v3147
    %3206 = vmatprep.subr.bf16.mxu0 0
    %3207 = vmatpush1.bf16.msra.mxu0 %v3146
    %3208 = vmatprep.subr.bf16.mxu0 0
    %3209 = vmatpush1.bf16.msra.mxu0 %v3145
    %3210 = vmatprep.subr.bf16.mxu0 0
    %3211 = vmatpush1.bf16.msra.mxu0 %v3144
    %3212 = vmatprep.subr.bf16.mxu0 0
    %3213 = vmatpush1.bf16.msra.mxu0 %v3143
    %3214 = vmatprep.subr.bf16.mxu0 0
    %3215 = vmatpush1.bf16.msra.mxu0 %v3142
    %3216 = vmatprep.subr.bf16.mxu0 0
    %3217 = vmatpush1.bf16.msra.mxu0 %v3141
    %3218 = vmatprep.subr.bf16.mxu0 0
    %3219 = vmatpush1.bf16.msra.mxu0 %v3140
    %3220 = vmatprep.subr.bf16.mxu0 0
    %3221 = vmatpush2.bf16.msra.mxu0 %v3155
    %3222 = vmatprep.subr.bf16.mxu0 0
    %3223 = vmatpush2.bf16.msra.mxu0 %v3154
    %3224 = vmatprep.subr.bf16.mxu0 0
    %3225 = vmatpush2.bf16.msra.mxu0 %v3153
    %3226 = vmatprep.subr.bf16.mxu0 0
    %3227 = vmatpush2.bf16.msra.mxu0 %v3152
    %3228 = vmatprep.subr.bf16.mxu0 0
    %3229 = vmatpush2.bf16.msra.mxu0 %v3151
    %3230 = vmatprep.subr.bf16.mxu0 0
    %3231 = vmatpush2.bf16.msra.mxu0 %v3150
    %3232 = vmatprep.subr.bf16.mxu0 0
    %3233 = vmatpush2.bf16.msra.mxu0 %v3149
    %3234 = vmatprep.subr.bf16.mxu0 0
    %3235 = vmatpush2.bf16.msra.mxu0 %v3148
    %3236 = vmatprep.mubr.bf16.mxu0 %v2941
    %3237 = vmatmul.mubr.bf16.gmra.mxu0 %v2940
    %v3238 = vpop.f32.mrf.mxu0
    %v3239 = vadd.f32 0.0, %v3238
    %v3240 = vpop.f32.mrf.mxu0
    %v3241 = vpop.f32.mrf.mxu0
    %v3242 = vadd.f32 0.0, %v3241
    %v3243 = vpop.f32.mrf.mxu0
    %3244 = vmatprep.mubr.bf16.mxu0 %v2945
    %3245 = vmatmul.mubr.bf16.gmra.mxu0 %v2944
    %v3246 = vpop.f32.mrf.mxu0
    %v3247 = vadd.f32 0.0, %v3246
    %v3248 = vpop.f32.mrf.mxu0
    %v3249 = vpop.f32.mrf.mxu0
    %v3250 = vadd.f32 0.0, %v3249
    %v3251 = vpop.f32.mrf.mxu0
    %3252 = vdwg.mxu0
    %3253 = vmatprep.subr.bf16.mxu0 0
    %3254 = vmatpush1.bf16.msra.mxu0 %v3163
    %3255 = vmatprep.subr.bf16.mxu0 0
    %3256 = vmatpush1.bf16.msra.mxu0 %v3162
    %3257 = vmatprep.subr.bf16.mxu0 0
    %3258 = vmatpush1.bf16.msra.mxu0 %v3161
    %3259 = vmatprep.subr.bf16.mxu0 0
    %3260 = vmatpush1.bf16.msra.mxu0 %v3160
    %3261 = vmatprep.subr.bf16.mxu0 0
    %3262 = vmatpush1.bf16.msra.mxu0 %v3159
    %3263 = vmatprep.subr.bf16.mxu0 0
    %3264 = vmatpush1.bf16.msra.mxu0 %v3158
    %3265 = vmatprep.subr.bf16.mxu0 0
    %3266 = vmatpush1.bf16.msra.mxu0 %v3157
    %3267 = vmatprep.subr.bf16.mxu0 0
    %3268 = vmatpush1.bf16.msra.mxu0 %v3156
    %3269 = vmatprep.subr.bf16.mxu0 0
    %3270 = vmatpush2.bf16.msra.mxu0 %v3171
    %3271 = vmatprep.subr.bf16.mxu0 0
    %3272 = vmatpush2.bf16.msra.mxu0 %v3170
    %3273 = vmatprep.subr.bf16.mxu0 0
    %3274 = vmatpush2.bf16.msra.mxu0 %v3169
    %3275 = vmatprep.subr.bf16.mxu0 0
    %3276 = vmatpush2.bf16.msra.mxu0 %v3168
    %3277 = vmatprep.subr.bf16.mxu0 0
    %3278 = vmatpush2.bf16.msra.mxu0 %v3167
    %3279 = vmatprep.subr.bf16.mxu0 0
    %3280 = vmatpush2.bf16.msra.mxu0 %v3166
    %3281 = vmatprep.subr.bf16.mxu0 0
    %3282 = vmatpush2.bf16.msra.mxu0 %v3165
    %3283 = vmatprep.subr.bf16.mxu0 0
    %3284 = vmatpush2.bf16.msra.mxu0 %v3164
    %3285 = vmatprep.mubr.bf16.mxu0 %v2943
    %3286 = vmatmul.mubr.bf16.gmra.mxu0 %v2942
    %v3287 = vpop.f32.mrf.mxu0
    %v3288 = vadd.f32 %v3239, %v3287
    %v3289 = vpop.f32.mrf.mxu0
    %v3290 = vpop.f32.mrf.mxu0
    %v3291 = vadd.f32 %v3242, %v3290
    %v3292 = vpop.f32.mrf.mxu0
    %3293 = vmatprep.mubr.bf16.mxu0 %v2947
    %3294 = vmatmul.mubr.bf16.gmra.mxu0 %v2946
    %v3295 = vpop.f32.mrf.mxu0
    %v3296 = vadd.f32 %v3247, %v3295
    %v3297 = vpop.f32.mrf.mxu0
    %v3298 = vpop.f32.mrf.mxu0
    %v3299 = vadd.f32 %v3250, %v3298
    %v3300 = vpop.f32.mrf.mxu0
    %3301 = vdwg.mxu0
    %v3302 = vlaneseq
    %v3303 = vshrl.u32 %v3302, 7
    %v3304 = vsub.s32 5, %v3303
    %v3305 = vrot.slane %v104, %v3304
    %v3306 = vlaneseq
    %v3307 = vshrl.u32 %v3306, 7
    %v3308 = vsub.s32 5, %v3307
    %v3309 = vrot.slane %v105, %v3308
    %v3310 = vlaneseq
    %v3311 = vshrl.u32 %v3310, 7
    %v3312 = vsub.s32 5, %v3311
    %v3313 = vrot.slane %v106, %v3312
    %v3314 = vlaneseq
    %v3315 = vshrl.u32 %v3314, 7
    %v3316 = vsub.s32 5, %v3315
    %v3317 = vrot.slane %v107, %v3316
    %v3318 = vmul.f32 %v3305, %v3288
    %v3319 = vmul.f32 %v3309, %v3291
    %v3320 = vmul.f32 %v3313, %v3296
    %v3321 = vmul.f32 %v3317, %v3299
    %v3322 = vadd.f32 %v2462, %v3318
    %v3323 = vadd.f32 %v2463, %v3319
    %v3324 = vadd.f32 %v2464, %v3320
    %v3325 = vadd.f32 %v2465, %v3321
    %3326 = vst [vmem:[#allocation11] sm:$0xff] %v3322
    %3327 = vst [vmem:[#allocation11 + $0x8] sm:$0xff] %v3323
    %3328 = vst [vmem:[#allocation11 + $0x10] sm:$0xff] %v3324
    %3329 = vst [vmem:[#allocation11 + $0x18] sm:$0xff] %v3325
    // Predicated region
    $region58: #{tpu_custom_call.1} parent=1 // pred_check
      _
    $region59: #{tpu_custom_call.1} parent=1 // pred_check_branch
      %3331 = sbr.rel (0) target = $region61
    $region60: #{tpu_custom_call.1} parent=1 // pred_region
      %s3333 = ssub.s32 512, 512
      %3334 = vsyncadd [#allocation4], %s3333
      %s3335 = sshll.u32 [#allocation11], 4
      %s3336 = int_to_ptr.vmem [resolvable:$true] %s3335
      %3341 = dma.vmem_to_hbm [thread:$0]  %s3336, 512, %s9, [#allocation4], 128, 128, 8
    $region61: #{tpu_custom_call.1} parent=1 // pred_fallthru
      _
    // Predicated region
    $region62: #{tpu_custom_call.1} parent=1 // pred_check
      _
    $region63: #{tpu_custom_call.1} parent=1 // pred_check_branch
      %3343 = sbr.rel (0) target = $region65
    $region64: #{tpu_custom_call.1} parent=1 // pred_region
      %3344 = dma.done [#allocation4], 512
    $region65: #{tpu_custom_call.1} parent=1 // pred_fallthru
      _
    %3345 = vsyncpa [#allocation3], 1
    %3346 = vsyncpa [#allocation6], 1
    %3347 = vsyncpa [#allocation9], 1
    %3348 = vsyncpa [#allocation4], 1

</llo_original>
